<compile_context>
chip_gen: v6e
topology: v6e:2x2x1
jax: 0.10.0
libtpu: 0.0.40
codegen_flags: <defaults>
</compile_context>

<pallas_src>
import jax
import jax.numpy as jnp
from jax.experimental import pallas as pl
from jax.experimental.pallas import tpu as pltpu


# ----------------------------------------------------------------------------
# Parameter packing: fold each 3x3 conv into 3 banded bf16 matrices (one per
# kernel row dy) acting on pixel-interleaved, zero-padded rows:
#     activation layout:  A[hp, wp*Cin + c] = x[hp-1, wp-1, c]   (zero halo)
#     conv as matmuls:    out = sum_dy  A[dy:dy+H, :] @ band[dy]  + bias
# ----------------------------------------------------------------------------
def _band_weights(w, out_w):
    """w: (Cout, Cin, 3, 3) PyTorch conv weight -> (3, (out_w+2)*Cin, out_w*Cout) bf16."""
    cout, cin, _, _ = w.shape
    eye = jnp.stack([jnp.eye(out_w + 2, out_w, k=-dx, dtype=jnp.float32)
                     for dx in range(3)])                        # (3, W+2, W)
    wt = jnp.transpose(w.astype(jnp.float32), (2, 3, 1, 0))      # (dy, dx, Cin, Cout)
    band = jnp.einsum("xpw,yxcn->ypcwn", eye, wt)                # (3, W+2, Cin, W, Cout)
    return band.reshape(3, (out_w + 2) * cin, out_w * cout).astype(jnp.bfloat16)


def _tile_bias(b, out_w):
    return jnp.tile(b.astype(jnp.float32), out_w)                # (out_w*Cout,)


# ----------------------------------------------------------------------------
# Fused EDSR kernel
# ----------------------------------------------------------------------------
def _make_edsr_kernel(H, W, F, n_resblocks, res_scale):
    H2, W2 = 2 * H, 2 * W
    WF = W * F
    W2F = W2 * F

    def kernel(x_ref, head_w, head_b, feat_w, feat_b, up_w, up_b, ilv,
               tail_w, tail_b, out_ref, actB, actT, actG):

        def conv3(get_x, get_w, bias):
            # 3x3 conv == 3 lane-dense MXU matmuls (bf16 operands, f32 accumulate).
            acc = None
            for dy in range(3):
                d = jnp.dot(get_x(dy).astype(jnp.bfloat16), get_w(dy),
                            preferred_element_type=jnp.float32)
                acc = d if acc is None else acc + d
            return acc + bias

        # Zero the activation scratch once per image: establishes the zero halo
        # every conv relies on (interiors are overwritten below).
        actB[...] = jnp.zeros_like(actB)
        actT[...] = jnp.zeros_like(actT)
        actG[...] = jnp.zeros_like(actG)

        # ---- head: conv 3 -> F ------------------------------------------------
        x_feat = conv3(lambda dy: x_ref[dy:dy + H, :],
                       lambda dy: head_w[dy], head_b[0])          # (H, W*F) f32
        actB[1:1 + H, F:F + WF] = x_feat                          # running "res"

        # ---- body: ResBlocks + trailing conv + long skip -----------------------
        k = 0
        for _ in range(n_resblocks):
            t = conv3(lambda dy: actB[dy:dy + H, :],
                      lambda dy, k=k: feat_w[k, dy], feat_b[k])
            actT[1:1 + H, F:F + WF] = jnp.maximum(t, 0.0)
            k += 1
            r = conv3(lambda dy: actT[dy:dy + H, :],
                      lambda dy, k=k: feat_w[k, dy], feat_b[k])
            actB[1:1 + H, F:F + WF] = res_scale * r + actB[1:1 + H, F:F + WF]
            k += 1
        r = conv3(lambda dy: actB[dy:dy + H, :],
                  lambda dy, k=k: feat_w[k, dy], feat_b[k])
        actB[1:1 + H, F:F + WF] = r + x_feat                      # res += x

        # ---- tail: up conv (F -> 4F) with PixelShuffle folded into the weights -
        u = conv3(lambda dy: actB[dy:dy + H, :],
                  lambda dy: up_w[dy], up_b[0])                   # (H, 2*W2F) f32
        even, odd = u[:, :W2F], u[:, W2F:]                        # rows 2h / 2h+1
        inter = (jnp.dot(ilv[0], even, preferred_element_type=jnp.float32) +
                 jnp.dot(ilv[1], odd, preferred_element_type=jnp.float32))
        actG[1:1 + H2, F:F + W2F] = inter                         # (2H, 2W*F)

        # ---- final conv F -> 3 on the upsampled image (add_mean in its bias) ---
        y = conv3(lambda dy: actG[dy:dy + H2, :],
                  lambda dy: tail_w[dy], tail_b[0])               # (2H, 2W*3)
        out_ref[...] = y.astype(out_ref.dtype)

    return kernel


# ----------------------------------------------------------------------------
# EDSR model
# ----------------------------------------------------------------------------
class EDSRPallas:
    """EDSR (x2) with the entire forward pass fused into one Pallas TPU kernel."""

    def __init__(self, *, n_resblocks=2, n_feats=8, n_colors=3, scale=2,
                 res_scale=1.0, rgb_range=255.0, seed=0):
        assert scale == 2, "this build instantiates the x2 upsampler"
        assert n_colors == 3
        self.n_resblocks = n_resblocks
        self.n_feats = n_feats
        self.n_colors = n_colors
        self.scale = scale
        self.res_scale = float(res_scale)
        self.rgb_range = float(rgb_range)
        # MeanShift defaults from common.MeanShift (std = (1,1,1))
        self.rgb_mean = jnp.array([0.4488, 0.4371, 0.4040], jnp.float32)

        key = jax.random.PRNGKey(seed)

        def conv_params(key, cin, cout):
            kw, kb = jax.random.split(key)
            w = jax.random.normal(kw, (cout, cin, 3, 3), jnp.float32) * 0.05
            b = jax.random.normal(kb, (cout,), jnp.float32) * 0.01
            return w, b

        keys = jax.random.split(key, 3 + 2 * n_resblocks + 3)
        ki = iter(keys)
        self.head = conv_params(next(ki), n_colors, n_feats)
        self.body = []
        for _ in range(n_resblocks):
            c1 = conv_params(next(ki), n_feats, n_feats)
            c2 = conv_params(next(ki), n_feats, n_feats)
            self.body.append((c1, c2))
        self.body_tail = conv_params(next(ki), n_feats, n_feats)
        self.up_conv = conv_params(next(ki), n_feats, 4 * n_feats)
        self.tail_conv = conv_params(next(ki), n_feats, n_colors)

        self._packed = {}   # (H, W) -> packed kernel parameters (built once)

    # ------------------------------------------------------------------ params
    def _pack(self, H, W):
        if (H, W) in self._packed:
            return self._packed[(H, W)]
        F = self.n_feats

        head_w = _band_weights(self.head[0], W)
        head_b = _tile_bias(self.head[1], W).reshape(1, -1)

        convs = [c for blk in self.body for c in blk] + [self.body_tail]
        feat_w = jnp.stack([_band_weights(w, W) for (w, _) in convs])
        feat_b = jnp.stack([_tile_bias(b, W) for (_, b) in convs])

        # Upsampler conv: split its 4F output channels into the two PixelShuffle
        # row banks (even rows i=0, odd rows i=1) so the shuffle's lane
        # permutation is absorbed into the weights at pack time.
        wu, bu = self.up_conv
        wu = wu.reshape(F, 2, 2, F, 3, 3)        # [c, i, j, cin, ky, kx]
        bu = bu.reshape(F, 2, 2)                 # [c, i, j]
        bank_w, bank_b = [], []
        for i in range(2):
            w_i = jnp.transpose(wu[:, i], (1, 0, 2, 3, 4)).reshape(2 * F, F, 3, 3)
            b_i = jnp.transpose(bu[:, i], (1, 0)).reshape(2 * F)
            bank_w.append(_band_weights(w_i, W))         # (3, (W+2)F, W*2F)
            bank_b.append(_tile_bias(b_i, W))            # (W*2F,)
        up_w = jnp.concatenate(bank_w, axis=-1)          # (3, (W+2)F, W*4F)
        up_b = jnp.concatenate(bank_b).reshape(1, -1)

        # 0/1 row-interleave matrices: out[2h+i, :] = bank_i[h, :].
        r = jnp.arange(H)
        ilv = jnp.zeros((2, 2 * H, H), jnp.float32)
        ilv = ilv.at[0, 2 * r, r].set(1.0).at[1, 2 * r + 1, r].set(1.0)

        # Final conv on the 2H x 2W image; fold add_mean into its bias.
        wt_, bt_ = self.tail_conv
        tail_w = _band_weights(wt_, 2 * W)
        tail_b = _tile_bias(bt_ + self.rgb_range * self.rgb_mean, 2 * W).reshape(1, -1)

        packed = dict(head_w=head_w, head_b=head_b, feat_w=feat_w, feat_b=feat_b,
                      up_w=up_w, up_b=up_b, ilv=ilv, tail_w=tail_w, tail_b=tail_b)
        self._packed[(H, W)] = packed
        return packed

    # ----------------------------------------------------------------- forward
    def __call__(self, x_nchw):
        B, C, H, W = x_nchw.shape
        F = self.n_feats
        H2, W2 = 2 * H, 2 * W
        p = self._pack(H, W)

        # NCHW -> NHWC, sub_mean, pixel-interleave rows, zero-pad 1-pixel halo.
        x = jnp.transpose(x_nchw.astype(jnp.float32), (0, 2, 3, 1))
        x = x - self.rgb_range * self.rgb_mean
        x = x.reshape(B, H, W * C)
        x = jnp.pad(x, ((0, 0), (1, 1), (C, C)))

        kernel = _make_edsr_kernel(H, W, F, self.n_resblocks, self.res_scale)
        full = lambda a: pl.BlockSpec(a.shape, lambda b, _n=a.ndim: (0,) * _n)

        out = pl.pallas_call(
            kernel,
            out_shape=jax.ShapeDtypeStruct((B, H2, W2 * C), jnp.float32),
            grid_spec=pltpu.PrefetchScalarGridSpec(
                num_scalar_prefetch=0,
                grid=(B,),
                in_specs=[
                    pl.BlockSpec((None, H + 2, (W + 2) * C), lambda b: (b, 0, 0)),
                    full(p["head_w"]), full(p["head_b"]),
                    full(p["feat_w"]), full(p["feat_b"]),
                    full(p["up_w"]), full(p["up_b"]),
                    full(p["ilv"]),
                    full(p["tail_w"]), full(p["tail_b"]),
                ],
                out_specs=pl.BlockSpec((None, H2, W2 * C), lambda b: (b, 0, 0)),
                scratch_shapes=[
                    pltpu.VMEM((H + 2, (W + 2) * F), jnp.float32),    # res
                    pltpu.VMEM((H + 2, (W + 2) * F), jnp.float32),    # resblock temp
                    pltpu.VMEM((H2 + 2, (W2 + 2) * F), jnp.float32),  # upsampled
                ]),
            compiler_params=pltpu.CompilerParams(
                dimension_semantics=("parallel",)),
        )(x, p["head_w"], p["head_b"], p["feat_w"], p["feat_b"],
          p["up_w"], p["up_b"], p["ilv"], p["tail_w"], p["tail_b"])

        out = out.reshape(B, H2, W2, C)
        return jnp.transpose(out, (0, 3, 1, 2))


# ----------------------------------------------------------------------------
# Plain-XLA f32 reference (for correctness checking only)
# ----------------------------------------------------------------------------
def _reference_forward(model, x_nchw):
    def conv(x, w, b):
        y = jax.lax.conv_general_dilated(
            x, w, window_strides=(1, 1), padding=((1, 1), (1, 1)),
            dimension_numbers=("NCHW", "OIHW", "NCHW"))
        return y + b.reshape(1, -1, 1, 1)

    m = (model.rgb_range * model.rgb_mean).reshape(1, 3, 1, 1)
    x = x_nchw.astype(jnp.float32) - m
    x = conv(x, *model.head)
    res = x
    for (c1, c2) in model.body:
        h = jax.nn.relu(conv(res, *c1))
        res = res + model.res_scale * conv(h, *c2)
    res = conv(res, *model.body_tail) + x
    t = conv(res, *model.up_conv)
    B, C4, H, W = t.shape
    C = C4 // 4
    t = t.reshape(B, C, 2, 2, H, W).transpose(0, 1, 4, 2, 5, 3).reshape(B, C, 2 * H, 2 * W)
    t = conv(t, *model.tail_conv)
    return t + m


# ----------------------------------------------------------------------------
if __name__ == "__main__":
    B, C, H, W = 2, 3, 16, 16
    key = jax.random.PRNGKey(0)
    x = jax.random.uniform(key, (B, C, H, W), jnp.float32) * 255.0

    model = EDSRPallas(n_resblocks=2, n_feats=8, n_colors=3, scale=2,
                       res_scale=1.0, rgb_range=255.0, seed=0)

    y = jax.jit(model.__call__)(x)
    y = jax.block_until_ready(y)

    assert y.shape == (B, C, 2 * H, 2 * W), y.shape
    assert bool(jnp.all(jnp.isfinite(y)))

    # Correctness vs. plain-XLA f32 reference (kernel matmuls run in bf16).
    y_ref = _reference_forward(model, x)
    err = float(jnp.max(jnp.abs(y - y_ref)))
    assert err < 2.0, f"max abs error vs reference too large: {err}"

    print("KERNEL_OK")
</pallas_src>

<mosaic_0001>
module attributes {stable_mosaic.version = 11 : i64} {
  func.func @kernel(%arg0: i32, %arg1: memref<1x18x54xf32, #tpu.memory_space<vmem>>, %arg2: memref<3x54x128xbf16, #tpu.memory_space<vmem>>, %arg3: memref<1x128xf32, #tpu.memory_space<vmem>>, %arg4: memref<5x3x144x128xbf16, #tpu.memory_space<vmem>>, %arg5: memref<5x128xf32, #tpu.memory_space<vmem>>, %arg6: memref<3x144x512xbf16, #tpu.memory_space<vmem>>, %arg7: memref<1x512xf32, #tpu.memory_space<vmem>>, %arg8: memref<2x32x16xf32, #tpu.memory_space<vmem>>, %arg9: memref<3x272x96xbf16, #tpu.memory_space<vmem>>, %arg10: memref<1x96xf32, #tpu.memory_space<vmem>>, %arg11: memref<1x32x96xf32, #tpu.memory_space<vmem>>, %arg12: memref<18x144xf32, #tpu.memory_space<vmem>>, %arg13: memref<18x144xf32, #tpu.memory_space<vmem>>, %arg14: memref<34x272xf32, #tpu.memory_space<vmem>>) attributes {dimension_semantics = [#tpu.dimension_semantics<parallel>], iteration_bounds = array<i64: 2>, scalar_prefetch = 0 : i64, scratch_operands = 3 : i64, tpu.core_type = #tpu.core_type<tc>, window_params = [{transform_indices = @transform_0, window_bounds = array<i64: 1, 18, 54>}, {pipeline_mode = #tpu.pipeline_mode<synchronous>, transform_indices = @transform_1, window_bounds = array<i64: 3, 54, 128>}, {pipeline_mode = #tpu.pipeline_mode<synchronous>, transform_indices = @transform_2, window_bounds = array<i64: 1, 128>}, {pipeline_mode = #tpu.pipeline_mode<synchronous>, transform_indices = @transform_3, window_bounds = array<i64: 5, 3, 144, 128>}, {pipeline_mode = #tpu.pipeline_mode<synchronous>, transform_indices = @transform_4, window_bounds = array<i64: 5, 128>}, {pipeline_mode = #tpu.pipeline_mode<synchronous>, transform_indices = @transform_5, window_bounds = array<i64: 3, 144, 512>}, {pipeline_mode = #tpu.pipeline_mode<synchronous>, transform_indices = @transform_6, window_bounds = array<i64: 1, 512>}, {pipeline_mode = #tpu.pipeline_mode<synchronous>, transform_indices = @transform_7, window_bounds = array<i64: 2, 32, 16>}, {pipeline_mode = #tpu.pipeline_mode<synchronous>, transform_indices = @transform_8, window_bounds = array<i64: 3, 272, 96>}, {pipeline_mode = #tpu.pipeline_mode<synchronous>, transform_indices = @transform_9, window_bounds = array<i64: 1, 96>}, {transform_indices = @transform_10, window_bounds = array<i64: 1, 32, 96>}]} {
    %cst = arith.constant 0.000000e+00 : f32
    %0 = vector.broadcast %cst : f32 to vector<18x144xf32>
    %c0 = arith.constant 0 : index
    %c0_0 = arith.constant 0 : index
    %1 = vector.load %arg12[%c0, %c0_0] : memref<18x144xf32, #tpu.memory_space<vmem>>, vector<18x144xf32>
    tpu.vector_store %arg12[%c0, %c0_0], %0 {strides = array<i32>} : memref<18x144xf32, #tpu.memory_space<vmem>>, vector<18x144xf32>,
    %cst_1 = arith.constant 0.000000e+00 : f32
    %2 = vector.broadcast %cst_1 : f32 to vector<18x144xf32>
    %c0_2 = arith.constant 0 : index
    %c0_3 = arith.constant 0 : index
    %3 = vector.load %arg13[%c0_2, %c0_3] : memref<18x144xf32, #tpu.memory_space<vmem>>, vector<18x144xf32>
    tpu.vector_store %arg13[%c0_2, %c0_3], %2 {strides = array<i32>} : memref<18x144xf32, #tpu.memory_space<vmem>>, vector<18x144xf32>,
    %cst_4 = arith.constant 0.000000e+00 : f32
    %4 = vector.broadcast %cst_4 : f32 to vector<34x272xf32>
    %c0_5 = arith.constant 0 : index
    %c0_6 = arith.constant 0 : index
    %5 = vector.load %arg14[%c0_5, %c0_6] : memref<34x272xf32, #tpu.memory_space<vmem>>, vector<34x272xf32>
    tpu.vector_store %arg14[%c0_5, %c0_6], %4 {strides = array<i32>} : memref<34x272xf32, #tpu.memory_space<vmem>>, vector<34x272xf32>,
    %c0_7 = arith.constant 0 : index
    %c0_8 = arith.constant 0 : index
    %6 = vector.load %arg3[%c0_7, %c0_8] : memref<1x128xf32, #tpu.memory_space<vmem>>, vector<1x128xf32>
    %7 = vector.shape_cast %6 : vector<1x128xf32> to vector<128xf32>
    %c0_9 = arith.constant 0 : index
    %c0_10 = arith.constant 0 : index
    %c0_11 = arith.constant 0 : index
    %8 = vector.load %arg1[%c0_9, %c0_10, %c0_11] : memref<1x18x54xf32, #tpu.memory_space<vmem>>, vector<1x16x54xf32>
    %9 = vector.shape_cast %8 : vector<1x16x54xf32> to vector<16x54xf32>
    %10 = arith.truncf %9 : vector<16x54xf32> to vector<16x54xbf16>
    %c0_12 = arith.constant 0 : index
    %c0_13 = arith.constant 0 : index
    %c0_14 = arith.constant 0 : index
    %11 = vector.load %arg2[%c0_12, %c0_13, %c0_14] : memref<3x54x128xbf16, #tpu.memory_space<vmem>>, vector<1x54x128xbf16>
    %12 = vector.shape_cast %11 : vector<1x54x128xbf16> to vector<54x128xbf16>
    %cst_15 = arith.constant dense<0.000000e+00> : vector<16x128xf32>
    %13 = tpu.matmul %10, %12, %cst_15 {dimension_numbers = #tpu.dot_dimension_numbers<[1], [0], [0], [1], [0, 0, 1, 1], [], []>} : vector<16x54xbf16>, vector<54x128xbf16>, vector<16x128xf32> -> vector<16x128xf32>
    %c0_16 = arith.constant 0 : index
    %c1 = arith.constant 1 : index
    %c0_17 = arith.constant 0 : index
    %14 = vector.load %arg1[%c0_16, %c1, %c0_17] : memref<1x18x54xf32, #tpu.memory_space<vmem>>, vector<1x16x54xf32>
    %15 = vector.shape_cast %14 : vector<1x16x54xf32> to vector<16x54xf32>
    %16 = arith.truncf %15 : vector<16x54xf32> to vector<16x54xbf16>
    %c1_18 = arith.constant 1 : index
    %c0_19 = arith.constant 0 : index
    %c0_20 = arith.constant 0 : index
    %17 = vector.load %arg2[%c1_18, %c0_19, %c0_20] : memref<3x54x128xbf16, #tpu.memory_space<vmem>>, vector<1x54x128xbf16>
    %18 = vector.shape_cast %17 : vector<1x54x128xbf16> to vector<54x128xbf16>
    %cst_21 = arith.constant dense<0.000000e+00> : vector<16x128xf32>
    %19 = tpu.matmul %16, %18, %cst_21 {dimension_numbers = #tpu.dot_dimension_numbers<[1], [0], [0], [1], [0, 0, 1, 1], [], []>} : vector<16x54xbf16>, vector<54x128xbf16>, vector<16x128xf32> -> vector<16x128xf32>
    %20 = arith.addf %13, %19 : vector<16x128xf32>
    %c0_22 = arith.constant 0 : index
    %c2 = arith.constant 2 : index
    %c0_23 = arith.constant 0 : index
    %21 = vector.load %arg1[%c0_22, %c2, %c0_23] : memref<1x18x54xf32, #tpu.memory_space<vmem>>, vector<1x16x54xf32>
    %22 = vector.shape_cast %21 : vector<1x16x54xf32> to vector<16x54xf32>
    %23 = arith.truncf %22 : vector<16x54xf32> to vector<16x54xbf16>
    %c2_24 = arith.constant 2 : index
    %c0_25 = arith.constant 0 : index
    %c0_26 = arith.constant 0 : index
    %24 = vector.load %arg2[%c2_24, %c0_25, %c0_26] : memref<3x54x128xbf16, #tpu.memory_space<vmem>>, vector<1x54x128xbf16>
    %25 = vector.shape_cast %24 : vector<1x54x128xbf16> to vector<54x128xbf16>
    %cst_27 = arith.constant dense<0.000000e+00> : vector<16x128xf32>
    %26 = tpu.matmul %23, %25, %cst_27 {dimension_numbers = #tpu.dot_dimension_numbers<[1], [0], [0], [1], [0, 0, 1, 1], [], []>} : vector<16x54xbf16>, vector<54x128xbf16>, vector<16x128xf32> -> vector<16x128xf32>
    %27 = arith.addf %20, %26 : vector<16x128xf32>
    %28 = vector.shape_cast %7 : vector<128xf32> to vector<1x128xf32>
    %29 = vector.broadcast %28 : vector<1x128xf32> to vector<16x128xf32>
    %30 = arith.addf %27, %29 : vector<16x128xf32>
    %c1_28 = arith.constant 1 : index
    %c8 = arith.constant 8 : index
    %31 = vector.load %arg12[%c1_28, %c8] : memref<18x144xf32, #tpu.memory_space<vmem>>, vector<16x128xf32>
    tpu.vector_store %arg12[%c1_28, %c8], %30 {strides = array<i32>} : memref<18x144xf32, #tpu.memory_space<vmem>>, vector<16x128xf32>,
    %c0_29 = arith.constant 0 : index
    %c0_30 = arith.constant 0 : index
    %32 = vector.load %arg5[%c0_29, %c0_30] : memref<5x128xf32, #tpu.memory_space<vmem>>, vector<1x128xf32>
    %33 = vector.shape_cast %32 : vector<1x128xf32> to vector<128xf32>
    %c0_31 = arith.constant 0 : index
    %c0_32 = arith.constant 0 : index
    %34 = vector.load %arg12[%c0_31, %c0_32] : memref<18x144xf32, #tpu.memory_space<vmem>>, vector<16x144xf32>
    %35 = arith.truncf %34 : vector<16x144xf32> to vector<16x144xbf16>
    %c0_33 = arith.constant 0 : index
    %c0_34 = arith.constant 0 : index
    %c0_35 = arith.constant 0 : index
    %c0_36 = arith.constant 0 : index
    %36 = vector.load %arg4[%c0_33, %c0_34, %c0_35, %c0_36] : memref<5x3x144x128xbf16, #tpu.memory_space<vmem>>, vector<1x1x144x128xbf16>
    %37 = vector.shape_cast %36 : vector<1x1x144x128xbf16> to vector<144x128xbf16>
    %cst_37 = arith.constant dense<0.000000e+00> : vector<16x128xf32>
    %38 = tpu.matmul %35, %37, %cst_37 {dimension_numbers = #tpu.dot_dimension_numbers<[1], [0], [0], [1], [0, 0, 1, 1], [], []>} : vector<16x144xbf16>, vector<144x128xbf16>, vector<16x128xf32> -> vector<16x128xf32>
    %c1_38 = arith.constant 1 : index
    %c0_39 = arith.constant 0 : index
    %39 = vector.load %arg12[%c1_38, %c0_39] : memref<18x144xf32, #tpu.memory_space<vmem>>, vector<16x144xf32>
    %40 = arith.truncf %39 : vector<16x144xf32> to vector<16x144xbf16>
    %c0_40 = arith.constant 0 : index
    %c1_41 = arith.constant 1 : index
    %c0_42 = arith.constant 0 : index
    %c0_43 = arith.constant 0 : index
    %41 = vector.load %arg4[%c0_40, %c1_41, %c0_42, %c0_43] : memref<5x3x144x128xbf16, #tpu.memory_space<vmem>>, vector<1x1x144x128xbf16>
    %42 = vector.shape_cast %41 : vector<1x1x144x128xbf16> to vector<144x128xbf16>
    %cst_44 = arith.constant dense<0.000000e+00> : vector<16x128xf32>
    %43 = tpu.matmul %40, %42, %cst_44 {dimension_numbers = #tpu.dot_dimension_numbers<[1], [0], [0], [1], [0, 0, 1, 1], [], []>} : vector<16x144xbf16>, vector<144x128xbf16>, vector<16x128xf32> -> vector<16x128xf32>
    %44 = arith.addf %38, %43 : vector<16x128xf32>
    %c2_45 = arith.constant 2 : index
    %c0_46 = arith.constant 0 : index
    %45 = vector.load %arg12[%c2_45, %c0_46] : memref<18x144xf32, #tpu.memory_space<vmem>>, vector<16x144xf32>
    %46 = arith.truncf %45 : vector<16x144xf32> to vector<16x144xbf16>
    %c0_47 = arith.constant 0 : index
    %c2_48 = arith.constant 2 : index
    %c0_49 = arith.constant 0 : index
    %c0_50 = arith.constant 0 : index
    %47 = vector.load %arg4[%c0_47, %c2_48, %c0_49, %c0_50] : memref<5x3x144x128xbf16, #tpu.memory_space<vmem>>, vector<1x1x144x128xbf16>
    %48 = vector.shape_cast %47 : vector<1x1x144x128xbf16> to vector<144x128xbf16>
    %cst_51 = arith.constant dense<0.000000e+00> : vector<16x128xf32>
    %49 = tpu.matmul %46, %48, %cst_51 {dimension_numbers = #tpu.dot_dimension_numbers<[1], [0], [0], [1], [0, 0, 1, 1], [], []>} : vector<16x144xbf16>, vector<144x128xbf16>, vector<16x128xf32> -> vector<16x128xf32>
    %50 = arith.addf %44, %49 : vector<16x128xf32>
    %51 = vector.shape_cast %33 : vector<128xf32> to vector<1x128xf32>
    %52 = vector.broadcast %51 : vector<1x128xf32> to vector<16x128xf32>
    %53 = arith.addf %50, %52 : vector<16x128xf32>
    %cst_52 = arith.constant 0.000000e+00 : f32
    %54 = vector.broadcast %cst_52 : f32 to vector<16x128xf32>
    %55 = arith.maximumf %53, %54 : vector<16x128xf32>
    %c1_53 = arith.constant 1 : index
    %c8_54 = arith.constant 8 : index
    %56 = vector.load %arg13[%c1_53, %c8_54] : memref<18x144xf32, #tpu.memory_space<vmem>>, vector<16x128xf32>
    tpu.vector_store %arg13[%c1_53, %c8_54], %55 {strides = array<i32>} : memref<18x144xf32, #tpu.memory_space<vmem>>, vector<16x128xf32>,
    %c1_55 = arith.constant 1 : index
    %c0_56 = arith.constant 0 : index
    %57 = vector.load %arg5[%c1_55, %c0_56] : memref<5x128xf32, #tpu.memory_space<vmem>>, vector<1x128xf32>
    %58 = vector.shape_cast %57 : vector<1x128xf32> to vector<128xf32>
    %c0_57 = arith.constant 0 : index
    %c0_58 = arith.constant 0 : index
    %59 = vector.load %arg13[%c0_57, %c0_58] : memref<18x144xf32, #tpu.memory_space<vmem>>, vector<16x144xf32>
    %60 = arith.truncf %59 : vector<16x144xf32> to vector<16x144xbf16>
    %c1_59 = arith.constant 1 : index
    %c0_60 = arith.constant 0 : index
    %c0_61 = arith.constant 0 : index
    %c0_62 = arith.constant 0 : index
    %61 = vector.load %arg4[%c1_59, %c0_60, %c0_61, %c0_62] : memref<5x3x144x128xbf16, #tpu.memory_space<vmem>>, vector<1x1x144x128xbf16>
    %62 = vector.shape_cast %61 : vector<1x1x144x128xbf16> to vector<144x128xbf16>
    %cst_63 = arith.constant dense<0.000000e+00> : vector<16x128xf32>
    %63 = tpu.matmul %60, %62, %cst_63 {dimension_numbers = #tpu.dot_dimension_numbers<[1], [0], [0], [1], [0, 0, 1, 1], [], []>} : vector<16x144xbf16>, vector<144x128xbf16>, vector<16x128xf32> -> vector<16x128xf32>
    %c1_64 = arith.constant 1 : index
    %c0_65 = arith.constant 0 : index
    %64 = vector.load %arg13[%c1_64, %c0_65] : memref<18x144xf32, #tpu.memory_space<vmem>>, vector<16x144xf32>
    %65 = arith.truncf %64 : vector<16x144xf32> to vector<16x144xbf16>
    %c1_66 = arith.constant 1 : index
    %c1_67 = arith.constant 1 : index
    %c0_68 = arith.constant 0 : index
    %c0_69 = arith.constant 0 : index
    %66 = vector.load %arg4[%c1_66, %c1_67, %c0_68, %c0_69] : memref<5x3x144x128xbf16, #tpu.memory_space<vmem>>, vector<1x1x144x128xbf16>
    %67 = vector.shape_cast %66 : vector<1x1x144x128xbf16> to vector<144x128xbf16>
    %cst_70 = arith.constant dense<0.000000e+00> : vector<16x128xf32>
    %68 = tpu.matmul %65, %67, %cst_70 {dimension_numbers = #tpu.dot_dimension_numbers<[1], [0], [0], [1], [0, 0, 1, 1], [], []>} : vector<16x144xbf16>, vector<144x128xbf16>, vector<16x128xf32> -> vector<16x128xf32>
    %69 = arith.addf %63, %68 : vector<16x128xf32>
    %c2_71 = arith.constant 2 : index
    %c0_72 = arith.constant 0 : index
    %70 = vector.load %arg13[%c2_71, %c0_72] : memref<18x144xf32, #tpu.memory_space<vmem>>, vector<16x144xf32>
    %71 = arith.truncf %70 : vector<16x144xf32> to vector<16x144xbf16>
    %c1_73 = arith.constant 1 : index
    %c2_74 = arith.constant 2 : index
    %c0_75 = arith.constant 0 : index
    %c0_76 = arith.constant 0 : index
    %72 = vector.load %arg4[%c1_73, %c2_74, %c0_75, %c0_76] : memref<5x3x144x128xbf16, #tpu.memory_space<vmem>>, vector<1x1x144x128xbf16>
    %73 = vector.shape_cast %72 : vector<1x1x144x128xbf16> to vector<144x128xbf16>
    %cst_77 = arith.constant dense<0.000000e+00> : vector<16x128xf32>
    %74 = tpu.matmul %71, %73, %cst_77 {dimension_numbers = #tpu.dot_dimension_numbers<[1], [0], [0], [1], [0, 0, 1, 1], [], []>} : vector<16x144xbf16>, vector<144x128xbf16>, vector<16x128xf32> -> vector<16x128xf32>
    %75 = arith.addf %69, %74 : vector<16x128xf32>
    %76 = vector.shape_cast %58 : vector<128xf32> to vector<1x128xf32>
    %77 = vector.broadcast %76 : vector<1x128xf32> to vector<16x128xf32>
    %78 = arith.addf %75, %77 : vector<16x128xf32>
    %cst_78 = arith.constant 1.000000e+00 : f32
    %79 = vector.broadcast %cst_78 : f32 to vector<16x128xf32>
    %80 = arith.mulf %79, %78 : vector<16x128xf32>
    %c1_79 = arith.constant 1 : index
    %c8_80 = arith.constant 8 : index
    %81 = vector.load %arg12[%c1_79, %c8_80] : memref<18x144xf32, #tpu.memory_space<vmem>>, vector<16x128xf32>
    %82 = arith.addf %80, %81 : vector<16x128xf32>
    %c1_81 = arith.constant 1 : index
    %c8_82 = arith.constant 8 : index
    %83 = vector.load %arg12[%c1_81, %c8_82] : memref<18x144xf32, #tpu.memory_space<vmem>>, vector<16x128xf32>
    tpu.vector_store %arg12[%c1_81, %c8_82], %82 {strides = array<i32>} : memref<18x144xf32, #tpu.memory_space<vmem>>, vector<16x128xf32>,
    %c2_83 = arith.constant 2 : index
    %c0_84 = arith.constant 0 : index
    %84 = vector.load %arg5[%c2_83, %c0_84] : memref<5x128xf32, #tpu.memory_space<vmem>>, vector<1x128xf32>
    %85 = vector.shape_cast %84 : vector<1x128xf32> to vector<128xf32>
    %c0_85 = arith.constant 0 : index
    %c0_86 = arith.constant 0 : index
    %86 = vector.load %arg12[%c0_85, %c0_86] : memref<18x144xf32, #tpu.memory_space<vmem>>, vector<16x144xf32>
    %87 = arith.truncf %86 : vector<16x144xf32> to vector<16x144xbf16>
    %c2_87 = arith.constant 2 : index
    %c0_88 = arith.constant 0 : index
    %c0_89 = arith.constant 0 : index
    %c0_90 = arith.constant 0 : index
    %88 = vector.load %arg4[%c2_87, %c0_88, %c0_89, %c0_90] : memref<5x3x144x128xbf16, #tpu.memory_space<vmem>>, vector<1x1x144x128xbf16>
    %89 = vector.shape_cast %88 : vector<1x1x144x128xbf16> to vector<144x128xbf16>
    %cst_91 = arith.constant dense<0.000000e+00> : vector<16x128xf32>
    %90 = tpu.matmul %87, %89, %cst_91 {dimension_numbers = #tpu.dot_dimension_numbers<[1], [0], [0], [1], [0, 0, 1, 1], [], []>} : vector<16x144xbf16>, vector<144x128xbf16>, vector<16x128xf32> -> vector<16x128xf32>
    %c1_92 = arith.constant 1 : index
    %c0_93 = arith.constant 0 : index
    %91 = vector.load %arg12[%c1_92, %c0_93] : memref<18x144xf32, #tpu.memory_space<vmem>>, vector<16x144xf32>
    %92 = arith.truncf %91 : vector<16x144xf32> to vector<16x144xbf16>
    %c2_94 = arith.constant 2 : index
    %c1_95 = arith.constant 1 : index
    %c0_96 = arith.constant 0 : index
    %c0_97 = arith.constant 0 : index
    %93 = vector.load %arg4[%c2_94, %c1_95, %c0_96, %c0_97] : memref<5x3x144x128xbf16, #tpu.memory_space<vmem>>, vector<1x1x144x128xbf16>
    %94 = vector.shape_cast %93 : vector<1x1x144x128xbf16> to vector<144x128xbf16>
    %cst_98 = arith.constant dense<0.000000e+00> : vector<16x128xf32>
    %95 = tpu.matmul %92, %94, %cst_98 {dimension_numbers = #tpu.dot_dimension_numbers<[1], [0], [0], [1], [0, 0, 1, 1], [], []>} : vector<16x144xbf16>, vector<144x128xbf16>, vector<16x128xf32> -> vector<16x128xf32>
    %96 = arith.addf %90, %95 : vector<16x128xf32>
    %c2_99 = arith.constant 2 : index
    %c0_100 = arith.constant 0 : index
    %97 = vector.load %arg12[%c2_99, %c0_100] : memref<18x144xf32, #tpu.memory_space<vmem>>, vector<16x144xf32>
    %98 = arith.truncf %97 : vector<16x144xf32> to vector<16x144xbf16>
    %c2_101 = arith.constant 2 : index
    %c2_102 = arith.constant 2 : index
    %c0_103 = arith.constant 0 : index
    %c0_104 = arith.constant 0 : index
    %99 = vector.load %arg4[%c2_101, %c2_102, %c0_103, %c0_104] : memref<5x3x144x128xbf16, #tpu.memory_space<vmem>>, vector<1x1x144x128xbf16>
    %100 = vector.shape_cast %99 : vector<1x1x144x128xbf16> to vector<144x128xbf16>
    %cst_105 = arith.constant dense<0.000000e+00> : vector<16x128xf32>
    %101 = tpu.matmul %98, %100, %cst_105 {dimension_numbers = #tpu.dot_dimension_numbers<[1], [0], [0], [1], [0, 0, 1, 1], [], []>} : vector<16x144xbf16>, vector<144x128xbf16>, vector<16x128xf32> -> vector<16x128xf32>
    %102 = arith.addf %96, %101 : vector<16x128xf32>
    %103 = vector.shape_cast %85 : vector<128xf32> to vector<1x128xf32>
    %104 = vector.broadcast %103 : vector<1x128xf32> to vector<16x128xf32>
    %105 = arith.addf %102, %104 : vector<16x128xf32>
    %cst_106 = arith.constant 0.000000e+00 : f32
    %106 = vector.broadcast %cst_106 : f32 to vector<16x128xf32>
    %107 = arith.maximumf %105, %106 : vector<16x128xf32>
    %c1_107 = arith.constant 1 : index
    %c8_108 = arith.constant 8 : index
    %108 = vector.load %arg13[%c1_107, %c8_108] : memref<18x144xf32, #tpu.memory_space<vmem>>, vector<16x128xf32>
    tpu.vector_store %arg13[%c1_107, %c8_108], %107 {strides = array<i32>} : memref<18x144xf32, #tpu.memory_space<vmem>>, vector<16x128xf32>,
    %c3 = arith.constant 3 : index
    %c0_109 = arith.constant 0 : index
    %109 = vector.load %arg5[%c3, %c0_109] : memref<5x128xf32, #tpu.memory_space<vmem>>, vector<1x128xf32>
    %110 = vector.shape_cast %109 : vector<1x128xf32> to vector<128xf32>
    %c0_110 = arith.constant 0 : index
    %c0_111 = arith.constant 0 : index
    %111 = vector.load %arg13[%c0_110, %c0_111] : memref<18x144xf32, #tpu.memory_space<vmem>>, vector<16x144xf32>
    %112 = arith.truncf %111 : vector<16x144xf32> to vector<16x144xbf16>
    %c3_112 = arith.constant 3 : index
    %c0_113 = arith.constant 0 : index
    %c0_114 = arith.constant 0 : index
    %c0_115 = arith.constant 0 : index
    %113 = vector.load %arg4[%c3_112, %c0_113, %c0_114, %c0_115] : memref<5x3x144x128xbf16, #tpu.memory_space<vmem>>, vector<1x1x144x128xbf16>
    %114 = vector.shape_cast %113 : vector<1x1x144x128xbf16> to vector<144x128xbf16>
    %cst_116 = arith.constant dense<0.000000e+00> : vector<16x128xf32>
    %115 = tpu.matmul %112, %114, %cst_116 {dimension_numbers = #tpu.dot_dimension_numbers<[1], [0], [0], [1], [0, 0, 1, 1], [], []>} : vector<16x144xbf16>, vector<144x128xbf16>, vector<16x128xf32> -> vector<16x128xf32>
    %c1_117 = arith.constant 1 : index
    %c0_118 = arith.constant 0 : index
    %116 = vector.load %arg13[%c1_117, %c0_118] : memref<18x144xf32, #tpu.memory_space<vmem>>, vector<16x144xf32>
    %117 = arith.truncf %116 : vector<16x144xf32> to vector<16x144xbf16>
    %c3_119 = arith.constant 3 : index
    %c1_120 = arith.constant 1 : index
    %c0_121 = arith.constant 0 : index
    %c0_122 = arith.constant 0 : index
    %118 = vector.load %arg4[%c3_119, %c1_120, %c0_121, %c0_122] : memref<5x3x144x128xbf16, #tpu.memory_space<vmem>>, vector<1x1x144x128xbf16>
    %119 = vector.shape_cast %118 : vector<1x1x144x128xbf16> to vector<144x128xbf16>
    %cst_123 = arith.constant dense<0.000000e+00> : vector<16x128xf32>
    %120 = tpu.matmul %117, %119, %cst_123 {dimension_numbers = #tpu.dot_dimension_numbers<[1], [0], [0], [1], [0, 0, 1, 1], [], []>} : vector<16x144xbf16>, vector<144x128xbf16>, vector<16x128xf32> -> vector<16x128xf32>
    %121 = arith.addf %115, %120 : vector<16x128xf32>
    %c2_124 = arith.constant 2 : index
    %c0_125 = arith.constant 0 : index
    %122 = vector.load %arg13[%c2_124, %c0_125] : memref<18x144xf32, #tpu.memory_space<vmem>>, vector<16x144xf32>
    %123 = arith.truncf %122 : vector<16x144xf32> to vector<16x144xbf16>
    %c3_126 = arith.constant 3 : index
    %c2_127 = arith.constant 2 : index
    %c0_128 = arith.constant 0 : index
    %c0_129 = arith.constant 0 : index
    %124 = vector.load %arg4[%c3_126, %c2_127, %c0_128, %c0_129] : memref<5x3x144x128xbf16, #tpu.memory_space<vmem>>, vector<1x1x144x128xbf16>
    %125 = vector.shape_cast %124 : vector<1x1x144x128xbf16> to vector<144x128xbf16>
    %cst_130 = arith.constant dense<0.000000e+00> : vector<16x128xf32>
    %126 = tpu.matmul %123, %125, %cst_130 {dimension_numbers = #tpu.dot_dimension_numbers<[1], [0], [0], [1], [0, 0, 1, 1], [], []>} : vector<16x144xbf16>, vector<144x128xbf16>, vector<16x128xf32> -> vector<16x128xf32>
    %127 = arith.addf %121, %126 : vector<16x128xf32>
    %128 = vector.shape_cast %110 : vector<128xf32> to vector<1x128xf32>
    %129 = vector.broadcast %128 : vector<1x128xf32> to vector<16x128xf32>
    %130 = arith.addf %127, %129 : vector<16x128xf32>
    %cst_131 = arith.constant 1.000000e+00 : f32
    %131 = vector.broadcast %cst_131 : f32 to vector<16x128xf32>
    %132 = arith.mulf %131, %130 : vector<16x128xf32>
    %c1_132 = arith.constant 1 : index
    %c8_133 = arith.constant 8 : index
    %133 = vector.load %arg12[%c1_132, %c8_133] : memref<18x144xf32, #tpu.memory_space<vmem>>, vector<16x128xf32>
    %134 = arith.addf %132, %133 : vector<16x128xf32>
    %c1_134 = arith.constant 1 : index
    %c8_135 = arith.constant 8 : index
    %135 = vector.load %arg12[%c1_134, %c8_135] : memref<18x144xf32, #tpu.memory_space<vmem>>, vector<16x128xf32>
    tpu.vector_store %arg12[%c1_134, %c8_135], %134 {strides = array<i32>} : memref<18x144xf32, #tpu.memory_space<vmem>>, vector<16x128xf32>,
    %c4 = arith.constant 4 : index
    %c0_136 = arith.constant 0 : index
    %136 = vector.load %arg5[%c4, %c0_136] : memref<5x128xf32, #tpu.memory_space<vmem>>, vector<1x128xf32>
    %137 = vector.shape_cast %136 : vector<1x128xf32> to vector<128xf32>
    %c0_137 = arith.constant 0 : index
    %c0_138 = arith.constant 0 : index
    %138 = vector.load %arg12[%c0_137, %c0_138] : memref<18x144xf32, #tpu.memory_space<vmem>>, vector<16x144xf32>
    %139 = arith.truncf %138 : vector<16x144xf32> to vector<16x144xbf16>
    %c4_139 = arith.constant 4 : index
    %c0_140 = arith.constant 0 : index
    %c0_141 = arith.constant 0 : index
    %c0_142 = arith.constant 0 : index
    %140 = vector.load %arg4[%c4_139, %c0_140, %c0_141, %c0_142] : memref<5x3x144x128xbf16, #tpu.memory_space<vmem>>, vector<1x1x144x128xbf16>
    %141 = vector.shape_cast %140 : vector<1x1x144x128xbf16> to vector<144x128xbf16>
    %cst_143 = arith.constant dense<0.000000e+00> : vector<16x128xf32>
    %142 = tpu.matmul %139, %141, %cst_143 {dimension_numbers = #tpu.dot_dimension_numbers<[1], [0], [0], [1], [0, 0, 1, 1], [], []>} : vector<16x144xbf16>, vector<144x128xbf16>, vector<16x128xf32> -> vector<16x128xf32>
    %c1_144 = arith.constant 1 : index
    %c0_145 = arith.constant 0 : index
    %143 = vector.load %arg12[%c1_144, %c0_145] : memref<18x144xf32, #tpu.memory_space<vmem>>, vector<16x144xf32>
    %144 = arith.truncf %143 : vector<16x144xf32> to vector<16x144xbf16>
    %c4_146 = arith.constant 4 : index
    %c1_147 = arith.constant 1 : index
    %c0_148 = arith.constant 0 : index
    %c0_149 = arith.constant 0 : index
    %145 = vector.load %arg4[%c4_146, %c1_147, %c0_148, %c0_149] : memref<5x3x144x128xbf16, #tpu.memory_space<vmem>>, vector<1x1x144x128xbf16>
    %146 = vector.shape_cast %145 : vector<1x1x144x128xbf16> to vector<144x128xbf16>
    %cst_150 = arith.constant dense<0.000000e+00> : vector<16x128xf32>
    %147 = tpu.matmul %144, %146, %cst_150 {dimension_numbers = #tpu.dot_dimension_numbers<[1], [0], [0], [1], [0, 0, 1, 1], [], []>} : vector<16x144xbf16>, vector<144x128xbf16>, vector<16x128xf32> -> vector<16x128xf32>
    %148 = arith.addf %142, %147 : vector<16x128xf32>
    %c2_151 = arith.constant 2 : index
    %c0_152 = arith.constant 0 : index
    %149 = vector.load %arg12[%c2_151, %c0_152] : memref<18x144xf32, #tpu.memory_space<vmem>>, vector<16x144xf32>
    %150 = arith.truncf %149 : vector<16x144xf32> to vector<16x144xbf16>
    %c4_153 = arith.constant 4 : index
    %c2_154 = arith.constant 2 : index
    %c0_155 = arith.constant 0 : index
    %c0_156 = arith.constant 0 : index
    %151 = vector.load %arg4[%c4_153, %c2_154, %c0_155, %c0_156] : memref<5x3x144x128xbf16, #tpu.memory_space<vmem>>, vector<1x1x144x128xbf16>
    %152 = vector.shape_cast %151 : vector<1x1x144x128xbf16> to vector<144x128xbf16>
    %cst_157 = arith.constant dense<0.000000e+00> : vector<16x128xf32>
    %153 = tpu.matmul %150, %152, %cst_157 {dimension_numbers = #tpu.dot_dimension_numbers<[1], [0], [0], [1], [0, 0, 1, 1], [], []>} : vector<16x144xbf16>, vector<144x128xbf16>, vector<16x128xf32> -> vector<16x128xf32>
    %154 = arith.addf %148, %153 : vector<16x128xf32>
    %155 = vector.shape_cast %137 : vector<128xf32> to vector<1x128xf32>
    %156 = vector.broadcast %155 : vector<1x128xf32> to vector<16x128xf32>
    %157 = arith.addf %154, %156 : vector<16x128xf32>
    %158 = arith.addf %157, %30 : vector<16x128xf32>
    %c1_158 = arith.constant 1 : index
    %c8_159 = arith.constant 8 : index
    %159 = vector.load %arg12[%c1_158, %c8_159] : memref<18x144xf32, #tpu.memory_space<vmem>>, vector<16x128xf32>
    tpu.vector_store %arg12[%c1_158, %c8_159], %158 {strides = array<i32>} : memref<18x144xf32, #tpu.memory_space<vmem>>, vector<16x128xf32>,
    %c0_160 = arith.constant 0 : index
    %c0_161 = arith.constant 0 : index
    %160 = vector.load %arg7[%c0_160, %c0_161] : memref<1x512xf32, #tpu.memory_space<vmem>>, vector<1x512xf32>
    %161 = vector.shape_cast %160 : vector<1x512xf32> to vector<512xf32>
    %c0_162 = arith.constant 0 : index
    %c0_163 = arith.constant 0 : index
    %162 = vector.load %arg12[%c0_162, %c0_163] : memref<18x144xf32, #tpu.memory_space<vmem>>, vector<16x144xf32>
    %163 = arith.truncf %162 : vector<16x144xf32> to vector<16x144xbf16>
    %c0_164 = arith.constant 0 : index
    %c0_165 = arith.constant 0 : index
    %c0_166 = arith.constant 0 : index
    %164 = vector.load %arg6[%c0_164, %c0_165, %c0_166] : memref<3x144x512xbf16, #tpu.memory_space<vmem>>, vector<1x144x512xbf16>
    %165 = vector.shape_cast %164 : vector<1x144x512xbf16> to vector<144x512xbf16>
    %cst_167 = arith.constant dense<0.000000e+00> : vector<16x512xf32>
    %166 = tpu.matmul %163, %165, %cst_167 {dimension_numbers = #tpu.dot_dimension_numbers<[1], [0], [0], [1], [0, 0, 1, 1], [], []>} : vector<16x144xbf16>, vector<144x512xbf16>, vector<16x512xf32> -> vector<16x512xf32>
    %c1_168 = arith.constant 1 : index
    %c0_169 = arith.constant 0 : index
    %167 = vector.load %arg12[%c1_168, %c0_169] : memref<18x144xf32, #tpu.memory_space<vmem>>, vector<16x144xf32>
    %168 = arith.truncf %167 : vector<16x144xf32> to vector<16x144xbf16>
    %c1_170 = arith.constant 1 : index
    %c0_171 = arith.constant 0 : index
    %c0_172 = arith.constant 0 : index
    %169 = vector.load %arg6[%c1_170, %c0_171, %c0_172] : memref<3x144x512xbf16, #tpu.memory_space<vmem>>, vector<1x144x512xbf16>
    %170 = vector.shape_cast %169 : vector<1x144x512xbf16> to vector<144x512xbf16>
    %cst_173 = arith.constant dense<0.000000e+00> : vector<16x512xf32>
    %171 = tpu.matmul %168, %170, %cst_173 {dimension_numbers = #tpu.dot_dimension_numbers<[1], [0], [0], [1], [0, 0, 1, 1], [], []>} : vector<16x144xbf16>, vector<144x512xbf16>, vector<16x512xf32> -> vector<16x512xf32>
    %172 = arith.addf %166, %171 : vector<16x512xf32>
    %c2_174 = arith.constant 2 : index
    %c0_175 = arith.constant 0 : index
    %173 = vector.load %arg12[%c2_174, %c0_175] : memref<18x144xf32, #tpu.memory_space<vmem>>, vector<16x144xf32>
    %174 = arith.truncf %173 : vector<16x144xf32> to vector<16x144xbf16>
    %c2_176 = arith.constant 2 : index
    %c0_177 = arith.constant 0 : index
    %c0_178 = arith.constant 0 : index
    %175 = vector.load %arg6[%c2_176, %c0_177, %c0_178] : memref<3x144x512xbf16, #tpu.memory_space<vmem>>, vector<1x144x512xbf16>
    %176 = vector.shape_cast %175 : vector<1x144x512xbf16> to vector<144x512xbf16>
    %cst_179 = arith.constant dense<0.000000e+00> : vector<16x512xf32>
    %177 = tpu.matmul %174, %176, %cst_179 {dimension_numbers = #tpu.dot_dimension_numbers<[1], [0], [0], [1], [0, 0, 1, 1], [], []>} : vector<16x144xbf16>, vector<144x512xbf16>, vector<16x512xf32> -> vector<16x512xf32>
    %178 = arith.addf %172, %177 : vector<16x512xf32>
    %179 = vector.shape_cast %161 : vector<512xf32> to vector<1x512xf32>
    %180 = vector.broadcast %179 : vector<1x512xf32> to vector<16x512xf32>
    %181 = arith.addf %178, %180 : vector<16x512xf32>
    %182 = vector.extract_strided_slice %181 {offsets = [0, 0], sizes = [16, 256], strides = [1, 1]} : vector<16x512xf32> to vector<16x256xf32>
    %183 = vector.extract_strided_slice %181 {offsets = [0, 256], sizes = [16, 256], strides = [1, 1]} : vector<16x512xf32> to vector<16x256xf32>
    %c0_180 = arith.constant 0 : index
    %c0_181 = arith.constant 0 : index
    %c0_182 = arith.constant 0 : index
    %184 = vector.load %arg8[%c0_180, %c0_181, %c0_182] : memref<2x32x16xf32, #tpu.memory_space<vmem>>, vector<1x32x16xf32>
    %185 = vector.shape_cast %184 : vector<1x32x16xf32> to vector<32x16xf32>
    %cst_183 = arith.constant dense<0.000000e+00> : vector<32x256xf32>
    %186 = tpu.matmul %185, %182, %cst_183 {dimension_numbers = #tpu.dot_dimension_numbers<[1], [0], [0], [1], [0, 0, 1, 1], [], []>} : vector<32x16xf32>, vector<16x256xf32>, vector<32x256xf32> -> vector<32x256xf32>
    %c1_184 = arith.constant 1 : index
    %c0_185 = arith.constant 0 : index
    %c0_186 = arith.constant 0 : index
    %187 = vector.load %arg8[%c1_184, %c0_185, %c0_186] : memref<2x32x16xf32, #tpu.memory_space<vmem>>, vector<1x32x16xf32>
    %188 = vector.shape_cast %187 : vector<1x32x16xf32> to vector<32x16xf32>
    %cst_187 = arith.constant dense<0.000000e+00> : vector<32x256xf32>
    %189 = tpu.matmul %188, %183, %cst_187 {dimension_numbers = #tpu.dot_dimension_numbers<[1], [0], [0], [1], [0, 0, 1, 1], [], []>} : vector<32x16xf32>, vector<16x256xf32>, vector<32x256xf32> -> vector<32x256xf32>
    %190 = arith.addf %186, %189 : vector<32x256xf32>
    %c1_188 = arith.constant 1 : index
    %c8_189 = arith.constant 8 : index
    %191 = vector.load %arg14[%c1_188, %c8_189] : memref<34x272xf32, #tpu.memory_space<vmem>>, vector<32x256xf32>
    tpu.vector_store %arg14[%c1_188, %c8_189], %190 {strides = array<i32>} : memref<34x272xf32, #tpu.memory_space<vmem>>, vector<32x256xf32>,
    %c0_190 = arith.constant 0 : index
    %c0_191 = arith.constant 0 : index
    %192 = vector.load %arg10[%c0_190, %c0_191] : memref<1x96xf32, #tpu.memory_space<vmem>>, vector<1x96xf32>
    %193 = vector.shape_cast %192 : vector<1x96xf32> to vector<96xf32>
    %c0_192 = arith.constant 0 : index
    %c0_193 = arith.constant 0 : index
    %194 = vector.load %arg14[%c0_192, %c0_193] : memref<34x272xf32, #tpu.memory_space<vmem>>, vector<32x272xf32>
    %195 = arith.truncf %194 : vector<32x272xf32> to vector<32x272xbf16>
    %c0_194 = arith.constant 0 : index
    %c0_195 = arith.constant 0 : index
    %c0_196 = arith.constant 0 : index
    %196 = vector.load %arg9[%c0_194, %c0_195, %c0_196] : memref<3x272x96xbf16, #tpu.memory_space<vmem>>, vector<1x272x96xbf16>
    %197 = vector.shape_cast %196 : vector<1x272x96xbf16> to vector<272x96xbf16>
    %cst_197 = arith.constant dense<0.000000e+00> : vector<32x96xf32>
    %198 = tpu.matmul %195, %197, %cst_197 {dimension_numbers = #tpu.dot_dimension_numbers<[1], [0], [0], [1], [0, 0, 1, 1], [], []>} : vector<32x272xbf16>, vector<272x96xbf16>, vector<32x96xf32> -> vector<32x96xf32>
    %c1_198 = arith.constant 1 : index
    %c0_199 = arith.constant 0 : index
    %199 = vector.load %arg14[%c1_198, %c0_199] : memref<34x272xf32, #tpu.memory_space<vmem>>, vector<32x272xf32>
    %200 = arith.truncf %199 : vector<32x272xf32> to vector<32x272xbf16>
    %c1_200 = arith.constant 1 : index
    %c0_201 = arith.constant 0 : index
    %c0_202 = arith.constant 0 : index
    %201 = vector.load %arg9[%c1_200, %c0_201, %c0_202] : memref<3x272x96xbf16, #tpu.memory_space<vmem>>, vector<1x272x96xbf16>
    %202 = vector.shape_cast %201 : vector<1x272x96xbf16> to vector<272x96xbf16>
    %cst_203 = arith.constant dense<0.000000e+00> : vector<32x96xf32>
    %203 = tpu.matmul %200, %202, %cst_203 {dimension_numbers = #tpu.dot_dimension_numbers<[1], [0], [0], [1], [0, 0, 1, 1], [], []>} : vector<32x272xbf16>, vector<272x96xbf16>, vector<32x96xf32> -> vector<32x96xf32>
    %204 = arith.addf %198, %203 : vector<32x96xf32>
    %c2_204 = arith.constant 2 : index
    %c0_205 = arith.constant 0 : index
    %205 = vector.load %arg14[%c2_204, %c0_205] : memref<34x272xf32, #tpu.memory_space<vmem>>, vector<32x272xf32>
    %206 = arith.truncf %205 : vector<32x272xf32> to vector<32x272xbf16>
    %c2_206 = arith.constant 2 : index
    %c0_207 = arith.constant 0 : index
    %c0_208 = arith.constant 0 : index
    %207 = vector.load %arg9[%c2_206, %c0_207, %c0_208] : memref<3x272x96xbf16, #tpu.memory_space<vmem>>, vector<1x272x96xbf16>
    %208 = vector.shape_cast %207 : vector<1x272x96xbf16> to vector<272x96xbf16>
    %cst_209 = arith.constant dense<0.000000e+00> : vector<32x96xf32>
    %209 = tpu.matmul %206, %208, %cst_209 {dimension_numbers = #tpu.dot_dimension_numbers<[1], [0], [0], [1], [0, 0, 1, 1], [], []>} : vector<32x272xbf16>, vector<272x96xbf16>, vector<32x96xf32> -> vector<32x96xf32>
    %210 = arith.addf %204, %209 : vector<32x96xf32>
    %211 = vector.shape_cast %193 : vector<96xf32> to vector<1x96xf32>
    %212 = vector.broadcast %211 : vector<1x96xf32> to vector<32x96xf32>
    %213 = arith.addf %210, %212 : vector<32x96xf32>
    %c0_210 = arith.constant 0 : index
    %c0_211 = arith.constant 0 : index
    %c0_212 = arith.constant 0 : index
    %214 = vector.load %arg11[%c0_210, %c0_211, %c0_212] : memref<1x32x96xf32, #tpu.memory_space<vmem>>, vector<1x32x96xf32>
    %215 = vector.shape_cast %214 : vector<1x32x96xf32> to vector<32x96xf32>
    %216 = vector.shape_cast %213 : vector<32x96xf32> to vector<1x32x96xf32>
    tpu.vector_store %arg11[%c0_210, %c0_211, %c0_212], %216 {strides = array<i32>} : memref<1x32x96xf32, #tpu.memory_space<vmem>>, vector<1x32x96xf32>,
    return
  }
  func.func @transform_0(%arg0: i32) -> (i32, i32, i32) {
    %c0_i32 = arith.constant 0 : i32
    %c0_i32_0 = arith.constant 0 : i32
    %c0_i32_1 = arith.constant 0 : i32
    return %arg0, %c0_i32, %c0_i32_0 : i32, i32, i32
  }
  func.func @transform_1(%arg0: i32) -> (i32, i32, i32) {
    %c0_i32 = arith.constant 0 : i32
    %c0_i32_0 = arith.constant 0 : i32
    %c0_i32_1 = arith.constant 0 : i32
    %c0_i32_2 = arith.constant 0 : i32
    return %c0_i32, %c0_i32_0, %c0_i32_1 : i32, i32, i32
  }
  func.func @transform_2(%arg0: i32) -> (i32, i32) {
    %c0_i32 = arith.constant 0 : i32
    %c0_i32_0 = arith.constant 0 : i32
    %c0_i32_1 = arith.constant 0 : i32
    return %c0_i32, %c0_i32_0 : i32, i32
  }
  func.func @transform_3(%arg0: i32) -> (i32, i32, i32, i32) {
    %c0_i32 = arith.constant 0 : i32
    %c0_i32_0 = arith.constant 0 : i32
    %c0_i32_1 = arith.constant 0 : i32
    %c0_i32_2 = arith.constant 0 : i32
    %c0_i32_3 = arith.constant 0 : i32
    return %c0_i32, %c0_i32_0, %c0_i32_1, %c0_i32_2 : i32, i32, i32, i32
  }
  func.func @transform_4(%arg0: i32) -> (i32, i32) {
    %c0_i32 = arith.constant 0 : i32
    %c0_i32_0 = arith.constant 0 : i32
    %c0_i32_1 = arith.constant 0 : i32
    return %c0_i32, %c0_i32_0 : i32, i32
  }
  func.func @transform_5(%arg0: i32) -> (i32, i32, i32) {
    %c0_i32 = arith.constant 0 : i32
    %c0_i32_0 = arith.constant 0 : i32
    %c0_i32_1 = arith.constant 0 : i32
    %c0_i32_2 = arith.constant 0 : i32
    return %c0_i32, %c0_i32_0, %c0_i32_1 : i32, i32, i32
  }
  func.func @transform_6(%arg0: i32) -> (i32, i32) {
    %c0_i32 = arith.constant 0 : i32
    %c0_i32_0 = arith.constant 0 : i32
    %c0_i32_1 = arith.constant 0 : i32
    return %c0_i32, %c0_i32_0 : i32, i32
  }
  func.func @transform_7(%arg0: i32) -> (i32, i32, i32) {
    %c0_i32 = arith.constant 0 : i32
    %c0_i32_0 = arith.constant 0 : i32
    %c0_i32_1 = arith.constant 0 : i32
    %c0_i32_2 = arith.constant 0 : i32
    return %c0_i32, %c0_i32_0, %c0_i32_1 : i32, i32, i32
  }
  func.func @transform_8(%arg0: i32) -> (i32, i32, i32) {
    %c0_i32 = arith.constant 0 : i32
    %c0_i32_0 = arith.constant 0 : i32
    %c0_i32_1 = arith.constant 0 : i32
    %c0_i32_2 = arith.constant 0 : i32
    return %c0_i32, %c0_i32_0, %c0_i32_1 : i32, i32, i32
  }
  func.func @transform_9(%arg0: i32) -> (i32, i32) {
    %c0_i32 = arith.constant 0 : i32
    %c0_i32_0 = arith.constant 0 : i32
    %c0_i32_1 = arith.constant 0 : i32
    return %c0_i32, %c0_i32_0 : i32, i32
  }
  func.func @transform_10(%arg0: i32) -> (i32, i32, i32) {
    %c0_i32 = arith.constant 0 : i32
    %c0_i32_0 = arith.constant 0 : i32
    %c0_i32_1 = arith.constant 0 : i32
    return %arg0, %c0_i32, %c0_i32_0 : i32, i32, i32
  }
}

</mosaic_0001>

<llo_original>
// kernel: tile.42
$region0: #{tile.42}
  #allocation0 [shape = 's32[1]{0}', space=sflag, size = 0x4, scoped, tag = 'scoped memory for tile.42']
  %s0 = inlined_call_operand.vmem [shape: f32[8], index: 0, kind: input, shape index: {}]
  %s1 = inlined_call_operand.vmem [shape: f32[16,8], index: 1, kind: output, shape index: {}]
  // Predicated region
  $region2: #{tile.42} parent=0 // pred_check
    _
  $region3: #{tile.42} parent=0 // pred_check_branch
    %3 = sbr.rel (0) target = $region5
  $region4: #{tile.42} parent=0 // pred_region
    _
  $region5: #{tile.42} parent=0 // pred_fallthru
    _
  %v4 = vld [vmem:[%s0] ss:$0 sm:$0xff]
  %5 = vst [vmem:[%s1] sm:$0xff] %v4
  %s6 = scalar_lea.vmem %s1, 8
  %7 = vst [vmem:[%s6] sm:$0xff] %v4

// kernel: tile.55
$region0: #{tile.55}
  %s0 = inlined_call_operand.vmem [shape: f32[16,8], index: 0, kind: input, shape index: {}]
  %s1 = inlined_call_operand.vmem [shape: f32[1,128], index: 1, kind: output, shape index: {}]
  $region1: #{tile.55} parent=0
    #allocation0 [shape = 'u8[4096]{0}', space=vmem, size = 0x1000, scoped, tag = 'scoped mem for output reshape']
    %v2 = vld [vmem:[%s0] sm:$0x1]
    %vm3 = vcmask 64512
    %4 = vst.msk [vmem:[#allocation0] sm:$0x1] %vm3, %v2
    %s5 = scalar_lea.vmem %s0, 15
    %v6 = vld [vmem:[%s5] sm:$0x1]
    %7 = vrot.lane.b32.xlu0 %v6, 120
    %v8 = vpop.permute.xlu0 %7
    %vm9 = vcmask 1048512
    %10 = vst.msk [vmem:[#allocation0] sm:$0x1] %vm9, %v8
    %s11 = scalar_lea.vmem %s0, 14
    %v12 = vld [vmem:[%s11] sm:$0x1]
    %13 = vrot.lane.b32.xlu0 %v12, 112
    %v14 = vpop.permute.xlu0 %13
    %vm15 = vcmask 982912
    %16 = vst.msk [vmem:[#allocation0] sm:$0x1] %vm15, %v14
    %s17 = scalar_lea.vmem %s0, 13
    %v18 = vld [vmem:[%s17] sm:$0x1]
    %19 = vrot.lane.b32.xlu0 %v18, 104
    %v20 = vpop.permute.xlu0 %19
    %vm21 = vcmask 917312
    %22 = vst.msk [vmem:[#allocation0] sm:$0x1] %vm21, %v20
    %s23 = scalar_lea.vmem %s0, 12
    %v24 = vld [vmem:[%s23] sm:$0x1]
    %25 = vrot.lane.b32.xlu0 %v24, 96
    %v26 = vpop.permute.xlu0 %25
    %vm27 = vcmask 851712
    %28 = vst.msk [vmem:[#allocation0] sm:$0x1] %vm27, %v26
    %s29 = scalar_lea.vmem %s0, 11
    %v30 = vld [vmem:[%s29] sm:$0x1]
    %31 = vrot.lane.b32.xlu0 %v30, 88
    %v32 = vpop.permute.xlu0 %31
    %vm33 = vcmask 786112
    %34 = vst.msk [vmem:[#allocation0] sm:$0x1] %vm33, %v32
    %s35 = scalar_lea.vmem %s0, 10
    %v36 = vld [vmem:[%s35] sm:$0x1]
    %37 = vrot.lane.b32.xlu0 %v36, 80
    %v38 = vpop.permute.xlu0 %37
    %vm39 = vcmask 720512
    %40 = vst.msk [vmem:[#allocation0] sm:$0x1] %vm39, %v38
    %s41 = scalar_lea.vmem %s0, 9
    %v42 = vld [vmem:[%s41] sm:$0x1]
    %43 = vrot.lane.b32.xlu0 %v42, 72
    %v44 = vpop.permute.xlu0 %43
    %vm45 = vcmask 654912
    %46 = vst.msk [vmem:[#allocation0] sm:$0x1] %vm45, %v44
    %s47 = scalar_lea.vmem %s0, 8
    %v48 = vld [vmem:[%s47] sm:$0x1]
    %49 = vrot.lane.b32.xlu0 %v48, 64
    %v50 = vpop.permute.xlu0 %49
    %vm51 = vcmask 589312
    %52 = vst.msk [vmem:[#allocation0] sm:$0x1] %vm51, %v50
    %s53 = scalar_lea.vmem %s0, 7
    %v54 = vld [vmem:[%s53] sm:$0x1]
    %55 = vrot.lane.b32.xlu0 %v54, 56
    %v56 = vpop.permute.xlu0 %55
    %vm57 = vcmask 523712
    %58 = vst.msk [vmem:[#allocation0] sm:$0x1] %vm57, %v56
    %s59 = scalar_lea.vmem %s0, 6
    %v60 = vld [vmem:[%s59] sm:$0x1]
    %61 = vrot.lane.b32.xlu0 %v60, 48
    %v62 = vpop.permute.xlu0 %61
    %vm63 = vcmask 458112
    %64 = vst.msk [vmem:[#allocation0] sm:$0x1] %vm63, %v62
    %s65 = scalar_lea.vmem %s0, 5
    %v66 = vld [vmem:[%s65] sm:$0x1]
    %67 = vrot.lane.b32.xlu0 %v66, 40
    %v68 = vpop.permute.xlu0 %67
    %vm69 = vcmask 392512
    %70 = vst.msk [vmem:[#allocation0] sm:$0x1] %vm69, %v68
    %s71 = scalar_lea.vmem %s0, 4
    %v72 = vld [vmem:[%s71] sm:$0x1]
    %73 = vrot.lane.b32.xlu0 %v72, 32
    %v74 = vpop.permute.xlu0 %73
    %vm75 = vcmask 326912
    %76 = vst.msk [vmem:[#allocation0] sm:$0x1] %vm75, %v74
    %s77 = scalar_lea.vmem %s0, 3
    %v78 = vld [vmem:[%s77] sm:$0x1]
    %79 = vrot.lane.b32.xlu0 %v78, 24
    %v80 = vpop.permute.xlu0 %79
    %vm81 = vcmask 261312
    %82 = vst.msk [vmem:[#allocation0] sm:$0x1] %vm81, %v80
    %s83 = scalar_lea.vmem %s0, 2
    %v84 = vld [vmem:[%s83] sm:$0x1]
    %85 = vrot.lane.b32.xlu0 %v84, 16
    %v86 = vpop.permute.xlu0 %85
    %vm87 = vcmask 195712
    %88 = vst.msk [vmem:[#allocation0] sm:$0x1] %vm87, %v86
    %s89 = scalar_lea.vmem %s0, 1
    %v90 = vld [vmem:[%s89] sm:$0x1]
    %91 = vrot.lane.b32.xlu0 %v90, 8
    %v92 = vpop.permute.xlu0 %91
    %vm93 = vcmask 130112
    %94 = vst.msk [vmem:[#allocation0] sm:$0x1] %vm93, %v92
    %s96 = sshll.u32 1, 1
    %s97 = ssub.s32 %s96, 1
    %v99 = vld [vmem:[#allocation0] sm:%s97]
    %s100 = sshll.u32 1, 1
    %s101 = ssub.s32 %s100, 1
    %102 = vst [vmem:[%s1] sm:%s101] %v99

// kernel: tile.62
$region0: #{tile.62}
  #allocation0 [shape = 's32[1]{0}', space=sflag, size = 0x4, scoped, tag = 'scoped memory for tile.62']
  %s0 = inlined_call_operand.vmem [shape: f32[16], index: 0, kind: input, shape index: {}]
  %s1 = inlined_call_operand.vmem [shape: f32[16,16], index: 1, kind: output, shape index: {}]
  // Predicated region
  $region2: #{tile.62} parent=0 // pred_check
    _
  $region3: #{tile.62} parent=0 // pred_check_branch
    %3 = sbr.rel (0) target = $region5
  $region4: #{tile.62} parent=0 // pred_region
    _
  $region5: #{tile.62} parent=0 // pred_fallthru
    _
  %v4 = vld [vmem:[%s0] ss:$0 sm:$0xff]
  %5 = vst [vmem:[%s1] sm:$0xff] %v4
  %s6 = scalar_lea.vmem %s1, 8
  %7 = vst [vmem:[%s6] sm:$0xff] %v4

// kernel: tile.63
$region0: #{tile.63}
  %s0 = inlined_call_operand.vmem [shape: f32[16,16], index: 0, kind: input, shape index: {}]
  %s1 = inlined_call_operand.vmem [shape: f32[256], index: 1, kind: output, shape index: {}]
  $region1: #{tile.63} parent=0
    #allocation0 [shape = 'u8[4096]{0}', space=vmem, size = 0x1000, scoped, tag = 'scoped mem for output reshape']
    %s2 = smov 3
    %v3 = vld [vmem:[%s0] ss:$8 sm:%s2]
    %vm4 = vcmask 130048
    %5 = vst.msk [vmem:[#allocation0] sm:$0x3] %vm4, %v3
    %s6 = scalar_lea.vmem %s0, 7
    %s7 = smov 3
    %v8 = vld [vmem:[%s6] ss:$8 sm:%s7]
    %9 = vrot.lane.b32.xlu0 %v8, 112
    %v10 = vpop.permute.xlu0 %9
    %vm11 = vcmask 1048448
    %12 = vst.msk [vmem:[#allocation0] sm:$0x3] %vm11, %v10
    %s13 = scalar_lea.vmem %s0, 6
    %s14 = smov 3
    %v15 = vld [vmem:[%s13] ss:$8 sm:%s14]
    %16 = vrot.lane.b32.xlu0 %v15, 96
    %v17 = vpop.permute.xlu0 %16
    %vm18 = vcmask 917248
    %19 = vst.msk [vmem:[#allocation0] sm:$0x3] %vm18, %v17
    %s20 = scalar_lea.vmem %s0, 5
    %s21 = smov 3
    %v22 = vld [vmem:[%s20] ss:$8 sm:%s21]
    %23 = vrot.lane.b32.xlu0 %v22, 80
    %v24 = vpop.permute.xlu0 %23
    %vm25 = vcmask 786048
    %26 = vst.msk [vmem:[#allocation0] sm:$0x3] %vm25, %v24
    %s27 = scalar_lea.vmem %s0, 4
    %s28 = smov 3
    %v29 = vld [vmem:[%s27] ss:$8 sm:%s28]
    %30 = vrot.lane.b32.xlu0 %v29, 64
    %v31 = vpop.permute.xlu0 %30
    %vm32 = vcmask 654848
    %33 = vst.msk [vmem:[#allocation0] sm:$0x3] %vm32, %v31
    %s34 = scalar_lea.vmem %s0, 3
    %s35 = smov 3
    %v36 = vld [vmem:[%s34] ss:$8 sm:%s35]
    %37 = vrot.lane.b32.xlu0 %v36, 48
    %v38 = vpop.permute.xlu0 %37
    %vm39 = vcmask 523648
    %40 = vst.msk [vmem:[#allocation0] sm:$0x3] %vm39, %v38
    %s41 = scalar_lea.vmem %s0, 2
    %s42 = smov 3
    %v43 = vld [vmem:[%s41] ss:$8 sm:%s42]
    %44 = vrot.lane.b32.xlu0 %v43, 32
    %v45 = vpop.permute.xlu0 %44
    %vm46 = vcmask 392448
    %47 = vst.msk [vmem:[#allocation0] sm:$0x3] %vm46, %v45
    %s48 = scalar_lea.vmem %s0, 1
    %s49 = smov 3
    %v50 = vld [vmem:[%s48] ss:$8 sm:%s49]
    %51 = vrot.lane.b32.xlu0 %v50, 16
    %v52 = vpop.permute.xlu0 %51
    %vm53 = vcmask 261248
    %54 = vst.msk [vmem:[#allocation0] sm:$0x3] %vm53, %v52
    %s56 = sshll.u32 1, 2
    %s57 = ssub.s32 %s56, 1
    %v59 = vld [vmem:[#allocation0] sm:%s57]
    %s60 = sshll.u32 1, 2
    %s61 = ssub.s32 %s60, 1
    %62 = vst [vmem:[%s1] sm:%s61] %v59

// kernel: tile.70
$region0: #{tile.70}
  #allocation0 [shape = 's32[1]{0}', space=sflag, size = 0x4, scoped, tag = 'scoped memory for tile.70']
  %s0 = inlined_call_operand.vmem [shape: f32[3], index: 0, kind: input, shape index: {}]
  %s1 = inlined_call_operand.vmem [shape: f32[32,3], index: 1, kind: output, shape index: {}]
  // Predicated region
  $region2: #{tile.70} parent=0 // pred_check
    _
  $region3: #{tile.70} parent=0 // pred_check_branch
    %3 = sbr.rel (0) target = $region5
  $region4: #{tile.70} parent=0 // pred_region
    _
  $region5: #{tile.70} parent=0 // pred_fallthru
    _
  %v4 = vld [vmem:[%s0] ss:$0 sm:$0xff]
  %5 = vst [vmem:[%s1] sm:$0xff] %v4
  %s6 = scalar_lea.vmem %s1, 8
  %7 = vst [vmem:[%s6] sm:$0xff] %v4
  %s8 = scalar_lea.vmem %s1, 16
  %9 = vst [vmem:[%s8] sm:$0xff] %v4
  %s10 = scalar_lea.vmem %s1, 24
  %11 = vst [vmem:[%s10] sm:$0xff] %v4

// kernel: tile.71
$region0: #{tile.71}
  %s0 = inlined_call_operand.vmem [shape: f32[32,3], index: 0, kind: input, shape index: {}]
  %s1 = inlined_call_operand.vmem [shape: f32[1,96], index: 1, kind: output, shape index: {}]
  $region1: #{tile.71} parent=0
    #allocation0 [shape = 'u8[4096]{0}', space=vmem, size = 0x1000, scoped, tag = 'scoped mem for output reshape']
    %v2 = vld [vmem:[%s0] sm:$0x1]
    %vm3 = vcmask 23552
    %4 = vst.msk [vmem:[#allocation0] sm:$0x1] %vm3, %v2
    %s5 = scalar_lea.vmem %s0, 31
    %v6 = vld [vmem:[%s5] sm:$0x1]
    %7 = vrot.lane.b32.xlu0 %v6, 93
    %v8 = vpop.permute.xlu0 %7
    %vm9 = vcmask 786152
    %10 = vst.msk [vmem:[#allocation0] sm:$0x1] %vm9, %v8
    %s11 = scalar_lea.vmem %s0, 30
    %v12 = vld [vmem:[%s11] sm:$0x1]
    %13 = vrot.lane.b32.xlu0 %v12, 90
    %v14 = vpop.permute.xlu0 %13
    %vm15 = vcmask 761552
    %16 = vst.msk [vmem:[#allocation0] sm:$0x1] %vm15, %v14
    %s17 = scalar_lea.vmem %s0, 29
    %v18 = vld [vmem:[%s17] sm:$0x1]
    %19 = vrot.lane.b32.xlu0 %v18, 87
    %v20 = vpop.permute.xlu0 %19
    %vm21 = vcmask 736952
    %22 = vst.msk [vmem:[#allocation0] sm:$0x1] %vm21, %v20
    %s23 = scalar_lea.vmem %s0, 28
    %v24 = vld [vmem:[%s23] sm:$0x1]
    %25 = vrot.lane.b32.xlu0 %v24, 84
    %v26 = vpop.permute.xlu0 %25
    %vm27 = vcmask 712352
    %28 = vst.msk [vmem:[#allocation0] sm:$0x1] %vm27, %v26
    %s29 = scalar_lea.vmem %s0, 27
    %v30 = vld [vmem:[%s29] sm:$0x1]
    %31 = vrot.lane.b32.xlu0 %v30, 81
    %v32 = vpop.permute.xlu0 %31
    %vm33 = vcmask 687752
    %34 = vst.msk [vmem:[#allocation0] sm:$0x1] %vm33, %v32
    %s35 = scalar_lea.vmem %s0, 26
    %v36 = vld [vmem:[%s35] sm:$0x1]
    %37 = vrot.lane.b32.xlu0 %v36, 78
    %v38 = vpop.permute.xlu0 %37
    %vm39 = vcmask 663152
    %40 = vst.msk [vmem:[#allocation0] sm:$0x1] %vm39, %v38
    %s41 = scalar_lea.vmem %s0, 25
    %v42 = vld [vmem:[%s41] sm:$0x1]
    %43 = vrot.lane.b32.xlu0 %v42, 75
    %v44 = vpop.permute.xlu0 %43
    %vm45 = vcmask 638552
    %46 = vst.msk [vmem:[#allocation0] sm:$0x1] %vm45, %v44
    %s47 = scalar_lea.vmem %s0, 24
    %v48 = vld [vmem:[%s47] sm:$0x1]
    %49 = vrot.lane.b32.xlu0 %v48, 72
    %v50 = vpop.permute.xlu0 %49
    %vm51 = vcmask 613952
    %52 = vst.msk [vmem:[#allocation0] sm:$0x1] %vm51, %v50
    %s53 = scalar_lea.vmem %s0, 23
    %v54 = vld [vmem:[%s53] sm:$0x1]
    %55 = vrot.lane.b32.xlu0 %v54, 69
    %v56 = vpop.permute.xlu0 %55
    %vm57 = vcmask 589352
    %58 = vst.msk [vmem:[#allocation0] sm:$0x1] %vm57, %v56
    %s59 = scalar_lea.vmem %s0, 22
    %v60 = vld [vmem:[%s59] sm:$0x1]
    %61 = vrot.lane.b32.xlu0 %v60, 66
    %v62 = vpop.permute.xlu0 %61
    %vm63 = vcmask 564752
    %64 = vst.msk [vmem:[#allocation0] sm:$0x1] %vm63, %v62
    %s65 = scalar_lea.vmem %s0, 21
    %v66 = vld [vmem:[%s65] sm:$0x1]
    %67 = vrot.lane.b32.xlu0 %v66, 63
    %v68 = vpop.permute.xlu0 %67
    %vm69 = vcmask 540152
    %70 = vst.msk [vmem:[#allocation0] sm:$0x1] %vm69, %v68
    %s71 = scalar_lea.vmem %s0, 20
    %v72 = vld [vmem:[%s71] sm:$0x1]
    %73 = vrot.lane.b32.xlu0 %v72, 60
    %v74 = vpop.permute.xlu0 %73
    %vm75 = vcmask 515552
    %76 = vst.msk [vmem:[#allocation0] sm:$0x1] %vm75, %v74
    %s77 = scalar_lea.vmem %s0, 19
    %v78 = vld [vmem:[%s77] sm:$0x1]
    %79 = vrot.lane.b32.xlu0 %v78, 57
    %v80 = vpop.permute.xlu0 %79
    %vm81 = vcmask 490952
    %82 = vst.msk [vmem:[#allocation0] sm:$0x1] %vm81, %v80
    %s83 = scalar_lea.vmem %s0, 18
    %v84 = vld [vmem:[%s83] sm:$0x1]
    %85 = vrot.lane.b32.xlu0 %v84, 54
    %v86 = vpop.permute.xlu0 %85
    %vm87 = vcmask 466352
    %88 = vst.msk [vmem:[#allocation0] sm:$0x1] %vm87, %v86
    %s89 = scalar_lea.vmem %s0, 17
    %v90 = vld [vmem:[%s89] sm:$0x1]
    %91 = vrot.lane.b32.xlu0 %v90, 51
    %v92 = vpop.permute.xlu0 %91
    %vm93 = vcmask 441752
    %94 = vst.msk [vmem:[#allocation0] sm:$0x1] %vm93, %v92
    %s95 = scalar_lea.vmem %s0, 16
    %v96 = vld [vmem:[%s95] sm:$0x1]
    %97 = vrot.lane.b32.xlu0 %v96, 48
    %v98 = vpop.permute.xlu0 %97
    %vm99 = vcmask 417152
    %100 = vst.msk [vmem:[#allocation0] sm:$0x1] %vm99, %v98
    %s101 = scalar_lea.vmem %s0, 15
    %v102 = vld [vmem:[%s101] sm:$0x1]
    %103 = vrot.lane.b32.xlu0 %v102, 45
    %v104 = vpop.permute.xlu0 %103
    %vm105 = vcmask 392552
    %106 = vst.msk [vmem:[#allocation0] sm:$0x1] %vm105, %v104
    %s107 = scalar_lea.vmem %s0, 14
    %v108 = vld [vmem:[%s107] sm:$0x1]
    %109 = vrot.lane.b32.xlu0 %v108, 42
    %v110 = vpop.permute.xlu0 %109
    %vm111 = vcmask 367952
    %112 = vst.msk [vmem:[#allocation0] sm:$0x1] %vm111, %v110
    %s113 = scalar_lea.vmem %s0, 13
    %v114 = vld [vmem:[%s113] sm:$0x1]
    %115 = vrot.lane.b32.xlu0 %v114, 39
    %v116 = vpop.permute.xlu0 %115
    %vm117 = vcmask 343352
    %118 = vst.msk [vmem:[#allocation0] sm:$0x1] %vm117, %v116
    %s119 = scalar_lea.vmem %s0, 12
    %v120 = vld [vmem:[%s119] sm:$0x1]
    %121 = vrot.lane.b32.xlu0 %v120, 36
    %v122 = vpop.permute.xlu0 %121
    %vm123 = vcmask 318752
    %124 = vst.msk [vmem:[#allocation0] sm:$0x1] %vm123, %v122
    %s125 = scalar_lea.vmem %s0, 11
    %v126 = vld [vmem:[%s125] sm:$0x1]
    %127 = vrot.lane.b32.xlu0 %v126, 33
    %v128 = vpop.permute.xlu0 %127
    %vm129 = vcmask 294152
    %130 = vst.msk [vmem:[#allocation0] sm:$0x1] %vm129, %v128
    %s131 = scalar_lea.vmem %s0, 10
    %v132 = vld [vmem:[%s131] sm:$0x1]
    %133 = vrot.lane.b32.xlu0 %v132, 30
    %v134 = vpop.permute.xlu0 %133
    %vm135 = vcmask 269552
    %136 = vst.msk [vmem:[#allocation0] sm:$0x1] %vm135, %v134
    %s137 = scalar_lea.vmem %s0, 9
    %v138 = vld [vmem:[%s137] sm:$0x1]
    %139 = vrot.lane.b32.xlu0 %v138, 27
    %v140 = vpop.permute.xlu0 %139
    %vm141 = vcmask 244952
    %142 = vst.msk [vmem:[#allocation0] sm:$0x1] %vm141, %v140
    %s143 = scalar_lea.vmem %s0, 8
    %v144 = vld [vmem:[%s143] sm:$0x1]
    %145 = vrot.lane.b32.xlu0 %v144, 24
    %v146 = vpop.permute.xlu0 %145
    %vm147 = vcmask 220352
    %148 = vst.msk [vmem:[#allocation0] sm:$0x1] %vm147, %v146
    %s149 = scalar_lea.vmem %s0, 7
    %v150 = vld [vmem:[%s149] sm:$0x1]
    %151 = vrot.lane.b32.xlu0 %v150, 21
    %v152 = vpop.permute.xlu0 %151
    %vm153 = vcmask 195752
    %154 = vst.msk [vmem:[#allocation0] sm:$0x1] %vm153, %v152
    %s155 = scalar_lea.vmem %s0, 6
    %v156 = vld [vmem:[%s155] sm:$0x1]
    %157 = vrot.lane.b32.xlu0 %v156, 18
    %v158 = vpop.permute.xlu0 %157
    %vm159 = vcmask 171152
    %160 = vst.msk [vmem:[#allocation0] sm:$0x1] %vm159, %v158
    %s161 = scalar_lea.vmem %s0, 5
    %v162 = vld [vmem:[%s161] sm:$0x1]
    %163 = vrot.lane.b32.xlu0 %v162, 15
    %v164 = vpop.permute.xlu0 %163
    %vm165 = vcmask 146552
    %166 = vst.msk [vmem:[#allocation0] sm:$0x1] %vm165, %v164
    %s167 = scalar_lea.vmem %s0, 4
    %v168 = vld [vmem:[%s167] sm:$0x1]
    %169 = vrot.lane.b32.xlu0 %v168, 12
    %v170 = vpop.permute.xlu0 %169
    %vm171 = vcmask 121952
    %172 = vst.msk [vmem:[#allocation0] sm:$0x1] %vm171, %v170
    %s173 = scalar_lea.vmem %s0, 3
    %v174 = vld [vmem:[%s173] sm:$0x1]
    %175 = vrot.lane.b32.xlu0 %v174, 9
    %v176 = vpop.permute.xlu0 %175
    %vm177 = vcmask 97352
    %178 = vst.msk [vmem:[#allocation0] sm:$0x1] %vm177, %v176
    %s179 = scalar_lea.vmem %s0, 2
    %v180 = vld [vmem:[%s179] sm:$0x1]
    %181 = vrot.lane.b32.xlu0 %v180, 6
    %v182 = vpop.permute.xlu0 %181
    %vm183 = vcmask 72752
    %184 = vst.msk [vmem:[#allocation0] sm:$0x1] %vm183, %v182
    %s185 = scalar_lea.vmem %s0, 1
    %v186 = vld [vmem:[%s185] sm:$0x1]
    %187 = vrot.lane.b32.xlu0 %v186, 3
    %v188 = vpop.permute.xlu0 %187
    %vm189 = vcmask 48152
    %190 = vst.msk [vmem:[#allocation0] sm:$0x1] %vm189, %v188
    %s192 = sshll.u32 1, 1
    %s193 = ssub.s32 %s192, 1
    %v195 = vld [vmem:[#allocation0] sm:%s193]
    %s196 = sshll.u32 1, 1
    %s197 = ssub.s32 %s196, 1
    %198 = vst [vmem:[%s1] sm:%s197] %v195

// kernel: a_call__.1
$region0: #{a_call__.1}
  #allocation0 [shape = 'u32[]', space=smem, size = 0x4, offset = 0x4, fixed_abs, tag = 'smem constant byte address 0x4 - core index']
  #allocation1 [shape = 'u32[144,128]{1,0:T(1,128)}', space=vmem, size = 0x12000, scoped, tag = 'internal scratch']
  #allocation2 [shape = 'f32[18,144]{1,0:T(8,128)}', space=vmem, size = 0x6000, scoped, tag = 'scratch operand']
  #allocation3 [shape = 'f32[18,144]{1,0:T(8,128)}', space=vmem, size = 0x6000, scoped, tag = 'scratch operand']
  #allocation4 [shape = 'f32[34,272]{1,0:T(8,128)}', space=vmem, size = 0xf000, scoped, tag = 'scratch operand']
  %s0 = inlined_call_operand.vmem [shape: f32[2,18,54], index: 0, kind: input, shape index: {}]
  %s1 = inlined_call_operand.vmem [shape: bf16[3,54,128], index: 1, kind: input, shape index: {}]
  %s2 = inlined_call_operand.vmem [shape: f32[1,128], index: 2, kind: input, shape index: {}]
  %s3 = inlined_call_operand.vmem [shape: bf16[5,3,144,128], index: 3, kind: input, shape index: {}]
  %s4 = inlined_call_operand.vmem [shape: f32[5,128], index: 4, kind: input, shape index: {}]
  %s5 = inlined_call_operand.vmem [shape: bf16[3,144,512], index: 5, kind: input, shape index: {}]
  %s6 = inlined_call_operand.vmem [shape: f32[1,512], index: 6, kind: input, shape index: {}]
  %s7 = inlined_call_operand.vmem [shape: f32[2,32,16], index: 7, kind: input, shape index: {}]
  %s8 = inlined_call_operand.vmem [shape: bf16[3,272,96], index: 8, kind: input, shape index: {}]
  %s9 = inlined_call_operand.vmem [shape: f32[1,96], index: 9, kind: input, shape index: {}]
  %s10 = inlined_call_operand.vmem [shape: f32[2,32,96], index: 10, kind: output, shape index: {}]
  %s11 = sld [smem:[#allocation0]]
  $region73: #{a_call__.1} parent=0
    _
  %s13 = ssub.s32 1, %s11
  %s14 = scalar_select 0, %s13, %s11
  loop: start=0, step=1, limit=4
  $region2: #{a_call__.1} parent=0 // loop_pre_header
    _
  $region3: #{a_call__.1} parent=0 // loop_header
    %s16 = sphi 0, %s20
    %p17 = scmp.ge.s32.totalorder %s16, 4
    %s26 = sphi 0, %s28
    %s29 = sphi 0, %s26
    %s30 = sphi 0, %s29
    %s46 = sphi 0, %s30
    %s50 = sphi 0, %s50
    %s52 = sphi 0, %s50
    %s53 = sphi 0, %s52
    %s67 = sphi 0, %s53
    %s71 = sphi 0, %s71
    %s73 = sphi 0, %s71
    %s74 = sphi 0, %s73
    %s88 = sphi 0, %s74
    %s92 = sphi 0, %s92
    %s94 = sphi 0, %s92
    %s95 = sphi 0, %s94
    %s109 = sphi 0, %s95
    %s113 = sphi 0, %s113
    %s115 = sphi 0, %s113
    %s116 = sphi 0, %s115
    %s130 = sphi 0, %s116
    %s134 = sphi 0, %s134
    %s136 = sphi 0, %s134
    %s137 = sphi 0, %s136
    %s151 = sphi 0, %s137
    %s155 = sphi 0, %s155
    %s157 = sphi 0, %s155
    %s158 = sphi 0, %s157
    %s172 = sphi 0, %s158
    %s176 = sphi 0, %s176
    %s178 = sphi 0, %s176
    %s179 = sphi 0, %s178
    %s193 = sphi 0, %s179
    %s197 = sphi 0, %s197
    %s199 = sphi 0, %s197
    %s200 = sphi 0, %s199
    %s214 = sphi 0, %s200
    %s218 = sphi 0, %s218
    %s220 = sphi 0, %s218
    %s221 = sphi 0, %s220
    %s235 = sphi 0, %s221
    %s241 = sphi 0, %s243
    %s244 = sphi 0, %s241
    %s245 = sphi 0, %s244
    %s261 = sphi 0, %s245
  $region4: #{a_call__.1} parent=0 // loop_header_branch
    %19 = sbr.rel (%p17) target = $region8
  $region5: #{a_call__.1} parent=0 // loop_body
    %s21 = ssub.s32 %s16, 1
    %s22 = ssub.s32 %s16, 2
    %s23 = sadd.s32 %s16, 1
    %s24 = ssub.s32 %s16, %s23
    %p25 = scmp.eq.s32.totalorder %s24, 0
    %s27 = sadd.s32 %s26, 1
    %s28 = scalar_select %p25, %s26, %s27
    %p31 = pneg %p25
    %p32 = scmp.eq.s32.totalorder %s16, 1
    %p33 = por %p31, %p32
    %p34 = scmp.ne.s32.totalorder %s26, %s29
    %p35 = scmp.eq.s32.totalorder %s16, 0
    %p36 = por %p34, %p35
    %p37 = scmp.ne.s32.totalorder %s26, %s29
    %p38 = scmp.eq.s32.totalorder %s21, 1
    %p39 = por %p37, %p38
    %p40 = scmp.ne.s32.totalorder %s29, %s30
    %p41 = scmp.eq.s32.totalorder %s21, 0
    %p42 = por %p40, %p41
    %p43 = scmp.ne.s32.totalorder %s29, %s30
    %p44 = scmp.eq.s32.totalorder %s22, 1
    %p45 = por %p43, %p44
    %p47 = scmp.ne.s32.totalorder %s30, %s46
    %p48 = scmp.eq.s32.totalorder %s22, 0
    %p49 = por %p47, %p48
    %s51 = sadd.s32 %s50, 1
    %p54 = scmp.eq.s32.totalorder %s16, 1
    %p55 = scmp.ne.s32.totalorder %s50, %s52
    %p56 = scmp.eq.s32.totalorder %s16, 0
    %p57 = por %p55, %p56
    %p58 = scmp.ne.s32.totalorder %s50, %s52
    %p59 = scmp.eq.s32.totalorder %s21, 1
    %p60 = por %p58, %p59
    %p61 = scmp.ne.s32.totalorder %s52, %s53
    %p62 = scmp.eq.s32.totalorder %s21, 0
    %p63 = por %p61, %p62
    %p64 = scmp.ne.s32.totalorder %s52, %s53
    %p65 = scmp.eq.s32.totalorder %s22, 1
    %p66 = por %p64, %p65
    %p68 = scmp.ne.s32.totalorder %s53, %s67
    %p69 = scmp.eq.s32.totalorder %s22, 0
    %p70 = por %p68, %p69
    %s72 = sadd.s32 %s71, 1
    %p75 = scmp.eq.s32.totalorder %s16, 1
    %p76 = scmp.ne.s32.totalorder %s71, %s73
    %p77 = scmp.eq.s32.totalorder %s16, 0
    %p78 = por %p76, %p77
    %p79 = scmp.ne.s32.totalorder %s71, %s73
    %p80 = scmp.eq.s32.totalorder %s21, 1
    %p81 = por %p79, %p80
    %p82 = scmp.ne.s32.totalorder %s73, %s74
    %p83 = scmp.eq.s32.totalorder %s21, 0
    %p84 = por %p82, %p83
    %p85 = scmp.ne.s32.totalorder %s73, %s74
    %p86 = scmp.eq.s32.totalorder %s22, 1
    %p87 = por %p85, %p86
    %p89 = scmp.ne.s32.totalorder %s74, %s88
    %p90 = scmp.eq.s32.totalorder %s22, 0
    %p91 = por %p89, %p90
    %s93 = sadd.s32 %s92, 1
    %p96 = scmp.eq.s32.totalorder %s16, 1
    %p97 = scmp.ne.s32.totalorder %s92, %s94
    %p98 = scmp.eq.s32.totalorder %s16, 0
    %p99 = por %p97, %p98
    %p100 = scmp.ne.s32.totalorder %s92, %s94
    %p101 = scmp.eq.s32.totalorder %s21, 1
    %p102 = por %p100, %p101
    %p103 = scmp.ne.s32.totalorder %s94, %s95
    %p104 = scmp.eq.s32.totalorder %s21, 0
    %p105 = por %p103, %p104
    %p106 = scmp.ne.s32.totalorder %s94, %s95
    %p107 = scmp.eq.s32.totalorder %s22, 1
    %p108 = por %p106, %p107
    %p110 = scmp.ne.s32.totalorder %s95, %s109
    %p111 = scmp.eq.s32.totalorder %s22, 0
    %p112 = por %p110, %p111
    %s114 = sadd.s32 %s113, 1
    %p117 = scmp.eq.s32.totalorder %s16, 1
    %p118 = scmp.ne.s32.totalorder %s113, %s115
    %p119 = scmp.eq.s32.totalorder %s16, 0
    %p120 = por %p118, %p119
    %p121 = scmp.ne.s32.totalorder %s113, %s115
    %p122 = scmp.eq.s32.totalorder %s21, 1
    %p123 = por %p121, %p122
    %p124 = scmp.ne.s32.totalorder %s115, %s116
    %p125 = scmp.eq.s32.totalorder %s21, 0
    %p126 = por %p124, %p125
    %p127 = scmp.ne.s32.totalorder %s115, %s116
    %p128 = scmp.eq.s32.totalorder %s22, 1
    %p129 = por %p127, %p128
    %p131 = scmp.ne.s32.totalorder %s116, %s130
    %p132 = scmp.eq.s32.totalorder %s22, 0
    %p133 = por %p131, %p132
    %s135 = sadd.s32 %s134, 1
    %p138 = scmp.eq.s32.totalorder %s16, 1
    %p139 = scmp.ne.s32.totalorder %s134, %s136
    %p140 = scmp.eq.s32.totalorder %s16, 0
    %p141 = por %p139, %p140
    %p142 = scmp.ne.s32.totalorder %s134, %s136
    %p143 = scmp.eq.s32.totalorder %s21, 1
    %p144 = por %p142, %p143
    %p145 = scmp.ne.s32.totalorder %s136, %s137
    %p146 = scmp.eq.s32.totalorder %s21, 0
    %p147 = por %p145, %p146
    %p148 = scmp.ne.s32.totalorder %s136, %s137
    %p149 = scmp.eq.s32.totalorder %s22, 1
    %p150 = por %p148, %p149
    %p152 = scmp.ne.s32.totalorder %s137, %s151
    %p153 = scmp.eq.s32.totalorder %s22, 0
    %p154 = por %p152, %p153
    %s156 = sadd.s32 %s155, 1
    %p159 = scmp.eq.s32.totalorder %s16, 1
    %p160 = scmp.ne.s32.totalorder %s155, %s157
    %p161 = scmp.eq.s32.totalorder %s16, 0
    %p162 = por %p160, %p161
    %p163 = scmp.ne.s32.totalorder %s155, %s157
    %p164 = scmp.eq.s32.totalorder %s21, 1
    %p165 = por %p163, %p164
    %p166 = scmp.ne.s32.totalorder %s157, %s158
    %p167 = scmp.eq.s32.totalorder %s21, 0
    %p168 = por %p166, %p167
    %p169 = scmp.ne.s32.totalorder %s157, %s158
    %p170 = scmp.eq.s32.totalorder %s22, 1
    %p171 = por %p169, %p170
    %p173 = scmp.ne.s32.totalorder %s158, %s172
    %p174 = scmp.eq.s32.totalorder %s22, 0
    %p175 = por %p173, %p174
    %s177 = sadd.s32 %s176, 1
    %p180 = scmp.eq.s32.totalorder %s16, 1
    %p181 = scmp.ne.s32.totalorder %s176, %s178
    %p182 = scmp.eq.s32.totalorder %s16, 0
    %p183 = por %p181, %p182
    %p184 = scmp.ne.s32.totalorder %s176, %s178
    %p185 = scmp.eq.s32.totalorder %s21, 1
    %p186 = por %p184, %p185
    %p187 = scmp.ne.s32.totalorder %s178, %s179
    %p188 = scmp.eq.s32.totalorder %s21, 0
    %p189 = por %p187, %p188
    %p190 = scmp.ne.s32.totalorder %s178, %s179
    %p191 = scmp.eq.s32.totalorder %s22, 1
    %p192 = por %p190, %p191
    %p194 = scmp.ne.s32.totalorder %s179, %s193
    %p195 = scmp.eq.s32.totalorder %s22, 0
    %p196 = por %p194, %p195
    %s198 = sadd.s32 %s197, 1
    %p201 = scmp.eq.s32.totalorder %s16, 1
    %p202 = scmp.ne.s32.totalorder %s197, %s199
    %p203 = scmp.eq.s32.totalorder %s16, 0
    %p204 = por %p202, %p203
    %p205 = scmp.ne.s32.totalorder %s197, %s199
    %p206 = scmp.eq.s32.totalorder %s21, 1
    %p207 = por %p205, %p206
    %p208 = scmp.ne.s32.totalorder %s199, %s200
    %p209 = scmp.eq.s32.totalorder %s21, 0
    %p210 = por %p208, %p209
    %p211 = scmp.ne.s32.totalorder %s199, %s200
    %p212 = scmp.eq.s32.totalorder %s22, 1
    %p213 = por %p211, %p212
    %p215 = scmp.ne.s32.totalorder %s200, %s214
    %p216 = scmp.eq.s32.totalorder %s22, 0
    %p217 = por %p215, %p216
    %s219 = sadd.s32 %s218, 1
    %p222 = scmp.eq.s32.totalorder %s16, 1
    %p223 = scmp.ne.s32.totalorder %s218, %s220
    %p224 = scmp.eq.s32.totalorder %s16, 0
    %p225 = por %p223, %p224
    %p226 = scmp.ne.s32.totalorder %s218, %s220
    %p227 = scmp.eq.s32.totalorder %s21, 1
    %p228 = por %p226, %p227
    %p229 = scmp.ne.s32.totalorder %s220, %s221
    %p230 = scmp.eq.s32.totalorder %s21, 0
    %p231 = por %p229, %p230
    %p232 = scmp.ne.s32.totalorder %s220, %s221
    %p233 = scmp.eq.s32.totalorder %s22, 1
    %p234 = por %p232, %p233
    %p236 = scmp.ne.s32.totalorder %s221, %s235
    %p237 = scmp.eq.s32.totalorder %s22, 0
    %p238 = por %p236, %p237
    %s239 = ssub.s32 %s16, %s23
    %p240 = scmp.eq.s32.totalorder %s239, 0
    %s242 = sadd.s32 %s241, 1
    %s243 = scalar_select %p240, %s241, %s242
    %p246 = pneg %p240
    %p247 = scmp.eq.s32.totalorder %s16, 1
    %p248 = por %p246, %p247
    %p249 = scmp.ne.s32.totalorder %s241, %s244
    %p250 = scmp.eq.s32.totalorder %s16, 0
    %p251 = por %p249, %p250
    %p252 = scmp.ne.s32.totalorder %s241, %s244
    %p253 = scmp.eq.s32.totalorder %s21, 1
    %p254 = por %p252, %p253
    %p255 = scmp.ne.s32.totalorder %s244, %s245
    %p256 = scmp.eq.s32.totalorder %s21, 0
    %p257 = por %p255, %p256
    %p258 = scmp.ne.s32.totalorder %s244, %s245
    %p259 = scmp.eq.s32.totalorder %s22, 1
    %p260 = por %p258, %p259
    %p262 = scmp.ne.s32.totalorder %s245, %s261
    %p263 = scmp.eq.s32.totalorder %s22, 0
    %p264 = por %p262, %p263
    %p265 = scmp.le.s32.totalorder 1, %s16
    %p266 = scmp.lt.s32.totalorder %s16, 3
    %p267 = pnand %p265, %p266
    %p268 = pneg %p267
    // Predicated region
    $region9: #{a_call__.1} parent=5 // pred_check
      _
    $region10: #{a_call__.1} parent=5 // pred_check_branch
      %270 = sbr.rel (%p267) target = $region12
    $region11: #{a_call__.1} parent=5 // pred_region
      %s271 = ssub.s32 %s16, 1
      // Predicated region
      $region13: #{a_call__.1} parent=11 // pred_check
        %p272 = pneg %p63
      $region14: #{a_call__.1} parent=11 // pred_check_branch
        %274 = sbr.rel (%p272) target = $region16
      $region15: #{a_call__.1} parent=11 // pred_region
        _
      $region16: #{a_call__.1} parent=11 // pred_fallthru
        _
      // Predicated region
      $region17: #{a_call__.1} parent=11 // pred_check
        %p275 = pneg %p84
      $region18: #{a_call__.1} parent=11 // pred_check_branch
        %277 = sbr.rel (%p275) target = $region20
      $region19: #{a_call__.1} parent=11 // pred_region
        _
      $region20: #{a_call__.1} parent=11 // pred_fallthru
        _
      // Predicated region
      $region21: #{a_call__.1} parent=11 // pred_check
        %p278 = pneg %p105
      $region22: #{a_call__.1} parent=11 // pred_check_branch
        %280 = sbr.rel (%p278) target = $region24
      $region23: #{a_call__.1} parent=11 // pred_region
        _
      $region24: #{a_call__.1} parent=11 // pred_fallthru
        _
      // Predicated region
      $region25: #{a_call__.1} parent=11 // pred_check
        %p281 = pneg %p126
      $region26: #{a_call__.1} parent=11 // pred_check_branch
        %283 = sbr.rel (%p281) target = $region28
      $region27: #{a_call__.1} parent=11 // pred_region
        _
      $region28: #{a_call__.1} parent=11 // pred_fallthru
        _
      // Predicated region
      $region29: #{a_call__.1} parent=11 // pred_check
        %p284 = pneg %p147
      $region30: #{a_call__.1} parent=11 // pred_check_branch
        %286 = sbr.rel (%p284) target = $region32
      $region31: #{a_call__.1} parent=11 // pred_region
        _
      $region32: #{a_call__.1} parent=11 // pred_fallthru
        _
      // Predicated region
      $region33: #{a_call__.1} parent=11 // pred_check
        %p287 = pneg %p168
      $region34: #{a_call__.1} parent=11 // pred_check_branch
        %289 = sbr.rel (%p287) target = $region36
      $region35: #{a_call__.1} parent=11 // pred_region
        _
      $region36: #{a_call__.1} parent=11 // pred_fallthru
        _
      // Predicated region
      $region37: #{a_call__.1} parent=11 // pred_check
        %p290 = pneg %p189
      $region38: #{a_call__.1} parent=11 // pred_check_branch
        %292 = sbr.rel (%p290) target = $region40
      $region39: #{a_call__.1} parent=11 // pred_region
        _
      $region40: #{a_call__.1} parent=11 // pred_fallthru
        _
      // Predicated region
      $region41: #{a_call__.1} parent=11 // pred_check
        %p293 = pneg %p210
      $region42: #{a_call__.1} parent=11 // pred_check_branch
        %295 = sbr.rel (%p293) target = $region44
      $region43: #{a_call__.1} parent=11 // pred_region
        _
      $region44: #{a_call__.1} parent=11 // pred_fallthru
        _
      // Predicated region
      $region45: #{a_call__.1} parent=11 // pred_check
        %p296 = pneg %p231
      $region46: #{a_call__.1} parent=11 // pred_check_branch
        %298 = sbr.rel (%p296) target = $region48
      $region47: #{a_call__.1} parent=11 // pred_region
        _
      $region48: #{a_call__.1} parent=11 // pred_fallthru
        _
    $region12: #{a_call__.1} parent=5 // pred_fallthru
      _
    %p299 = scmp.lt.s32.totalorder %s16, 2
    // Predicated region
    $region49: #{a_call__.1} parent=5 // pred_check
      %p300 = pneg %p299
    $region50: #{a_call__.1} parent=5 // pred_check_branch
      %302 = sbr.rel (%p300) target = $region52
    $region51: #{a_call__.1} parent=5 // pred_region
      // Predicated region
      $region53: #{a_call__.1} parent=51 // pred_check
        %p303 = pneg %p36
      $region54: #{a_call__.1} parent=51 // pred_check_branch
        %305 = sbr.rel (%p303) target = $region56
      $region55: #{a_call__.1} parent=51 // pred_region
        %p306 = scmp.lt.s32.totalorder %s16, 1
        %s307 = scalar_select %p306, %s16, 1
        %s308 = smul.addr %s307, 3
        %s309 = smul.addr %s308, 8
        %s310 = scalar_lea.vmem %s0, %s309
      $region56: #{a_call__.1} parent=51 // pred_fallthru
        _
    $region52: #{a_call__.1} parent=5 // pred_fallthru
      _
    %p311 = scmp.le.s32.totalorder 1, %s16
    %p312 = scmp.lt.s32.totalorder %s16, 3
    %p313 = pnand %p311, %p312
    %p314 = pneg %p313
    // Predicated region
    $region57: #{a_call__.1} parent=5 // pred_check
      _
    $region58: #{a_call__.1} parent=5 // pred_check_branch
      %316 = sbr.rel (%p313) target = $region60
    $region59: #{a_call__.1} parent=5 // pred_region
      %s317 = ssub.s32 %s16, 1
      %p318 = scmp.lt.s32.totalorder %s21, 1
      %s319 = scalar_select %p318, %s21, 1
      %s320 = smul.addr %s319, 3
      %s321 = smul.addr %s320, 8
      %s322 = scalar_lea.vmem %s0, %s321
      %p323 = pneg %p42
      %p324 = pneg %p39
      %p325 = pneg %p63
      %p326 = pneg %p60
      %p327 = pneg %p84
      %p328 = pneg %p81
      %p329 = pneg %p105
      %p330 = pneg %p102
      %p331 = pneg %p126
      %p332 = pneg %p123
      %p333 = pneg %p147
      %p334 = pneg %p144
      %p335 = pneg %p168
      %p336 = pneg %p165
      %p337 = pneg %p189
      %p338 = pneg %p186
      %p339 = pneg %p210
      %p340 = pneg %p207
      %p341 = pneg %p231
      %p342 = pneg %p228
      %p343 = pneg %p257
      %p344 = pneg %p254
      %p345 = scmp.lt.s32.totalorder %s21, 1
      %s346 = scalar_select %p345, %s21, 1
      %s347 = smul.addr %s346, 4
      %s348 = smul.addr %s347, 8
      %s349 = scalar_lea.vmem %s10, %s348
      %p350 = scmp.lt.s32.totalorder %s21, 1
      %s351 = scalar_select %p350, %s21, 1
      %s352 = smul.addr %s351, 3
      %s353 = smul.addr %s352, 8
      %s354 = scalar_lea.vmem %s0, %s353
      %p355 = scmp.lt.s32.totalorder %s21, 1
      %s356 = scalar_select %p355, %s21, 1
      %s357 = smul.addr %s356, 4
      %s358 = smul.addr %s357, 8
      %s359 = scalar_lea.vmem %s10, %s358
      %361 = vst [vmem:[#allocation2] sm:$0xff] 0.0
      %vm362 = vcmask 130048
      %363 = vst.msk [vmem:[#allocation2 + $0x8] sm:$0xff] %vm362, 0.0
      %364 = vst [vmem:[#allocation2 + $0x10] sm:$0xff] 0.0
      %365 = vst.msk [vmem:[#allocation2 + $0x18] sm:$0xff] %vm362, 0.0
      %366 = vst [vmem:[#allocation2 + $0x20] sm:$0x3] 0.0
      %vm367 = vcmask 123904
      %368 = vst.msk [vmem:[#allocation2 + $0x28] sm:$0x3] %vm367, 0.0
      %369 = vst [vmem:[#allocation3] sm:$0xff] 0.0
      %370 = vst.msk [vmem:[#allocation3 + $0x8] sm:$0xff] %vm362, 0.0
      %371 = vst [vmem:[#allocation3 + $0x10] sm:$0xff] 0.0
      %372 = vst.msk [vmem:[#allocation3 + $0x18] sm:$0xff] %vm362, 0.0
      %373 = vst [vmem:[#allocation3 + $0x20] sm:$0x3] 0.0
      %374 = vst.msk [vmem:[#allocation3 + $0x28] sm:$0x3] %vm367, 0.0
      %375 = vst [vmem:[#allocation4] sm:$0xff] 0.0
      %376 = vst [vmem:[#allocation4 + $0x8] sm:$0xff] 0.0
      %377 = vst.msk [vmem:[#allocation4 + $0x10] sm:$0xff] %vm362, 0.0
      %378 = vst [vmem:[#allocation4 + $0x18] sm:$0xff] 0.0
      %379 = vst [vmem:[#allocation4 + $0x20] sm:$0xff] 0.0
      %380 = vst.msk [vmem:[#allocation4 + $0x28] sm:$0xff] %vm362, 0.0
      %381 = vst [vmem:[#allocation4 + $0x30] sm:$0xff] 0.0
      %382 = vst [vmem:[#allocation4 + $0x38] sm:$0xff] 0.0
      %383 = vst.msk [vmem:[#allocation4 + $0x40] sm:$0xff] %vm362, 0.0
      %384 = vst [vmem:[#allocation4 + $0x48] sm:$0xff] 0.0
      %385 = vst [vmem:[#allocation4 + $0x50] sm:$0xff] 0.0
      %386 = vst.msk [vmem:[#allocation4 + $0x58] sm:$0xff] %vm362, 0.0
      %387 = vst [vmem:[#allocation4 + $0x60] sm:$0x3] 0.0
      %388 = vst [vmem:[#allocation4 + $0x68] sm:$0x3] 0.0
      %389 = vst.msk [vmem:[#allocation4 + $0x70] sm:$0x3] %vm367, 0.0
      %v390 = vld [vmem:[%s2] sm:$0x1]
      %v391 = vld [vmem:[%s354] sm:$0xff]
      %v392 = vld [vmem:[%s354 + $0x8] sm:$0xff]
      %v393 = vpack.c.bf16 %v392, %v391
      %v394 = vld [vmem:[%s1] sm:$0xf]
      %v395 = vld [vmem:[%s1 + $0x4] sm:$0xf]
      %v396 = vld [vmem:[%s1 + $0x8] sm:$0xf]
      %v397 = vld [vmem:[%s1 + $0xc] sm:$0xf]
      %v398 = vld [vmem:[%s1 + $0x10] sm:$0xf]
      %v399 = vld [vmem:[%s1 + $0x14] sm:$0xf]
      %v400 = vld [vmem:[%s1 + $0x18] sm:$0x7]
      %v401 = vld [vmem:[%s354 + $0x1] sm:$0xff]
      %v402 = vld [vmem:[%s354 + $0x9] sm:$0xff]
      %v403 = vpack.c.bf16 %v402, %v401
      %s404 = scalar_lea.vmem %s1, 28
      %v405 = vld [vmem:[%s404] sm:$0xf]
      %v406 = vld [vmem:[%s404 + $0x4] sm:$0xf]
      %v407 = vld [vmem:[%s404 + $0x8] sm:$0xf]
      %v408 = vld [vmem:[%s404 + $0xc] sm:$0xf]
      %v409 = vld [vmem:[%s404 + $0x10] sm:$0xf]
      %v410 = vld [vmem:[%s404 + $0x14] sm:$0xf]
      %v411 = vld [vmem:[%s404 + $0x18] sm:$0x7]
      %v419 = vunpack.c.l.b16 %v405
      %v420 = vunpack.c.l.b16 %v406
      %v421 = vunpack.c.l.b16 %v407
      %v422 = vunpack.c.l.b16 %v408
      %v423 = vunpack.c.l.b16 %v409
      %v424 = vunpack.c.l.b16 %v410
      %v425 = vunpack.c.l.b16 %v411
      %v426 = vpack.c.b16 %v420, %v419
      %v427 = vpack.c.b16 %v422, %v421
      %v428 = vpack.c.b16 %v424, %v423
      %v429 = vpack.c.b16 %v425, %v425
      %vm433 = vcmask 441344
      %v435 = vsel %vm433, %v403, 0
      %vm437 = vcmask 1042432
      %v439 = vsel %vm437, %v429, 0
      %441 = vmatprep.subr.bf16.mxu0 0
      %442 = vmatpush1.bf16.msra.mxu0 0
      %443 = vmatprep.subr.bf16.mxu0 0
      %444 = vmatpush1.bf16.msra.mxu0 0
      %445 = vmatprep.subr.bf16.mxu0 0
      %446 = vmatpush1.bf16.msra.mxu0 0
      %447 = vmatprep.subr.bf16.mxu0 0
      %448 = vmatpush1.bf16.msra.mxu0 0
      %449 = vmatprep.subr.bf16.mxu0 0
      %450 = vmatpush1.bf16.msra.mxu0 %v439
      %451 = vmatprep.subr.bf16.mxu0 0
      %452 = vmatpush1.bf16.msra.mxu0 %v428
      %453 = vmatprep.subr.bf16.mxu0 0
      %454 = vmatpush1.bf16.msra.mxu0 %v427
      %455 = vmatprep.subr.bf16.mxu0 0
      %456 = vmatpush1.bf16.msra.mxu0 %v426
      %457 = vmatprep.subr.bf16.mxu0 0
      %458 = vmatpush2.bf16.msra.mxu0 0
      %459 = vmatprep.subr.bf16.mxu0 0
      %460 = vmatpush2.bf16.msra.mxu0 0
      %461 = vmatprep.subr.bf16.mxu0 0
      %462 = vmatpush2.bf16.msra.mxu0 0
      %463 = vmatprep.subr.bf16.mxu0 0
      %464 = vmatpush2.bf16.msra.mxu0 0
      %465 = vmatprep.subr.bf16.mxu0 0
      %466 = vmatpush2.bf16.msra.mxu0 0
      %467 = vmatprep.subr.bf16.mxu0 0
      %468 = vmatpush2.bf16.msra.mxu0 0
      %469 = vmatprep.subr.bf16.mxu0 0
      %470 = vmatpush2.bf16.msra.mxu0 0
      %471 = vmatprep.subr.bf16.mxu0 0
      %472 = vmatpush2.bf16.msra.mxu0 0
      %473 = vmatprep.mubr.bf16.mxu0 0
      %474 = vmatmul.mubr.bf16.gmra.mxu0 %v435
      %v475 = vpop.f32.mrf.mxu0
      %v476 = vadd.f32 0.0, %v475
      %v477 = vpop.f32.mrf.mxu0
      %v478 = vpop.f32.mrf.mxu0
      %v479 = vadd.f32 0.0, %v478
      %v480 = vpop.f32.mrf.mxu0
      %481 = vdwg.mxu0
      %v489 = vunpack.c.l.b16 %v394
      %v490 = vunpack.c.l.b16 %v395
      %v491 = vunpack.c.l.b16 %v396
      %v492 = vunpack.c.l.b16 %v397
      %v493 = vunpack.c.l.b16 %v398
      %v494 = vunpack.c.l.b16 %v399
      %v495 = vunpack.c.l.b16 %v400
      %v496 = vpack.c.b16 %v490, %v489
      %v497 = vpack.c.b16 %v492, %v491
      %v498 = vpack.c.b16 %v494, %v493
      %v499 = vpack.c.b16 %v495, %v495
      %v504 = vsel %vm433, %v393, 0
      %v507 = vsel %vm437, %v499, 0
      %509 = vmatprep.subr.bf16.mxu0 0
      %510 = vmatpush1.bf16.msra.mxu0 0
      %511 = vmatprep.subr.bf16.mxu0 0
      %512 = vmatpush1.bf16.msra.mxu0 0
      %513 = vmatprep.subr.bf16.mxu0 0
      %514 = vmatpush1.bf16.msra.mxu0 0
      %515 = vmatprep.subr.bf16.mxu0 0
      %516 = vmatpush1.bf16.msra.mxu0 0
      %517 = vmatprep.subr.bf16.mxu0 0
      %518 = vmatpush1.bf16.msra.mxu0 %v507
      %519 = vmatprep.subr.bf16.mxu0 0
      %520 = vmatpush1.bf16.msra.mxu0 %v498
      %521 = vmatprep.subr.bf16.mxu0 0
      %522 = vmatpush1.bf16.msra.mxu0 %v497
      %523 = vmatprep.subr.bf16.mxu0 0
      %524 = vmatpush1.bf16.msra.mxu0 %v496
      %525 = vmatprep.subr.bf16.mxu0 0
      %526 = vmatpush2.bf16.msra.mxu0 0
      %527 = vmatprep.subr.bf16.mxu0 0
      %528 = vmatpush2.bf16.msra.mxu0 0
      %529 = vmatprep.subr.bf16.mxu0 0
      %530 = vmatpush2.bf16.msra.mxu0 0
      %531 = vmatprep.subr.bf16.mxu0 0
      %532 = vmatpush2.bf16.msra.mxu0 0
      %533 = vmatprep.subr.bf16.mxu0 0
      %534 = vmatpush2.bf16.msra.mxu0 0
      %535 = vmatprep.subr.bf16.mxu0 0
      %536 = vmatpush2.bf16.msra.mxu0 0
      %537 = vmatprep.subr.bf16.mxu0 0
      %538 = vmatpush2.bf16.msra.mxu0 0
      %539 = vmatprep.subr.bf16.mxu0 0
      %540 = vmatpush2.bf16.msra.mxu0 0
      %541 = vmatprep.mubr.bf16.mxu0 0
      %542 = vmatmul.mubr.bf16.gmra.mxu0 %v504
      %v543 = vpop.f32.mrf.mxu0
      %v544 = vadd.f32 %v476, %v543
      %v545 = vpop.f32.mrf.mxu0
      %v546 = vpop.f32.mrf.mxu0
      %v547 = vadd.f32 %v479, %v546
      %v548 = vpop.f32.mrf.mxu0
      %549 = vdwg.mxu0
      %v550 = vld [vmem:[%s354 + $0x2] sm:$0xff]
      %v551 = vld [vmem:[%s354 + $0xa] sm:$0xff]
      %v552 = vpack.c.bf16 %v551, %v550
      %s553 = scalar_lea.vmem %s1, 56
      %v554 = vld [vmem:[%s553] sm:$0xf]
      %v555 = vld [vmem:[%s553 + $0x4] sm:$0xf]
      %v556 = vld [vmem:[%s553 + $0x8] sm:$0xf]
      %v557 = vld [vmem:[%s553 + $0xc] sm:$0xf]
      %v558 = vld [vmem:[%s553 + $0x10] sm:$0xf]
      %v559 = vld [vmem:[%s553 + $0x14] sm:$0xf]
      %v560 = vld [vmem:[%s553 + $0x18] sm:$0x7]
      %v568 = vunpack.c.l.b16 %v554
      %v569 = vunpack.c.l.b16 %v555
      %v570 = vunpack.c.l.b16 %v556
      %v571 = vunpack.c.l.b16 %v557
      %v572 = vunpack.c.l.b16 %v558
      %v573 = vunpack.c.l.b16 %v559
      %v574 = vunpack.c.l.b16 %v560
      %v575 = vpack.c.b16 %v569, %v568
      %v576 = vpack.c.b16 %v571, %v570
      %v577 = vpack.c.b16 %v573, %v572
      %v578 = vpack.c.b16 %v574, %v574
      %v583 = vsel %vm433, %v552, 0
      %v586 = vsel %vm437, %v578, 0
      %588 = vmatprep.subr.bf16.mxu0 0
      %589 = vmatpush1.bf16.msra.mxu0 0
      %590 = vmatprep.subr.bf16.mxu0 0
      %591 = vmatpush1.bf16.msra.mxu0 0
      %592 = vmatprep.subr.bf16.mxu0 0
      %593 = vmatpush1.bf16.msra.mxu0 0
      %594 = vmatprep.subr.bf16.mxu0 0
      %595 = vmatpush1.bf16.msra.mxu0 0
      %596 = vmatprep.subr.bf16.mxu0 0
      %597 = vmatpush1.bf16.msra.mxu0 %v586
      %598 = vmatprep.subr.bf16.mxu0 0
      %599 = vmatpush1.bf16.msra.mxu0 %v577
      %600 = vmatprep.subr.bf16.mxu0 0
      %601 = vmatpush1.bf16.msra.mxu0 %v576
      %602 = vmatprep.subr.bf16.mxu0 0
      %603 = vmatpush1.bf16.msra.mxu0 %v575
      %604 = vmatprep.subr.bf16.mxu0 0
      %605 = vmatpush2.bf16.msra.mxu0 0
      %606 = vmatprep.subr.bf16.mxu0 0
      %607 = vmatpush2.bf16.msra.mxu0 0
      %608 = vmatprep.subr.bf16.mxu0 0
      %609 = vmatpush2.bf16.msra.mxu0 0
      %610 = vmatprep.subr.bf16.mxu0 0
      %611 = vmatpush2.bf16.msra.mxu0 0
      %612 = vmatprep.subr.bf16.mxu0 0
      %613 = vmatpush2.bf16.msra.mxu0 0
      %614 = vmatprep.subr.bf16.mxu0 0
      %615 = vmatpush2.bf16.msra.mxu0 0
      %616 = vmatprep.subr.bf16.mxu0 0
      %617 = vmatpush2.bf16.msra.mxu0 0
      %618 = vmatprep.subr.bf16.mxu0 0
      %619 = vmatpush2.bf16.msra.mxu0 0
      %620 = vmatprep.mubr.bf16.mxu0 0
      %621 = vmatmul.mubr.bf16.gmra.mxu0 %v583
      %v622 = vpop.f32.mrf.mxu0
      %v623 = vadd.f32 0.0, %v622
      %v624 = vpop.f32.mrf.mxu0
      %v625 = vpop.f32.mrf.mxu0
      %v626 = vadd.f32 0.0, %v625
      %v627 = vpop.f32.mrf.mxu0
      %628 = vdwg.mxu0
      %v629 = vadd.f32 %v544, %v623
      %v630 = vadd.f32 %v547, %v626
      %v632 = vlaneseq
      %v633 = vshrl.u32 %v632, 7
      %v634 = vsub.s32 0, %v633
      %v635 = vrot.slane %v390, %v634
      %v637 = vadd.f32 %v629, %v635
      %v638 = vadd.f32 %v630, %v635
      %vm641 = vcmask 1040384
      %v642 = vrot.slane %v637, 7
      %v643 = vrot.slane %v638, 7
      %v644 = vsel %vm641, %v642, %v643
      %645 = vrot.lane.b32.xlu0 %v642, 8
      %v646 = vpop.permute.xlu0 %645
      %647 = vrot.lane.b32.xlu0 %v644, 8
      %v648 = vpop.permute.xlu0 %647
      %649 = vrot.lane.b32.xlu0 %v643, 8
      %v650 = vpop.permute.xlu0 %649
      %vm654 = vcmask 1047617
      %655 = vst.msk [vmem:[#allocation2] sm:$0xfe] %vm654, %v646
      %vm656 = vcmask 64513
      %657 = vst.msk [vmem:[#allocation2 + $0x8] sm:$0xfe] %vm656, %v646
      %vm658 = vcmask 1047616
      %659 = vst.msk [vmem:[#allocation2 + $0x10] sm:$0xff] %vm658, %v648
      %vm660 = vcmask 64512
      %661 = vst.msk [vmem:[#allocation2 + $0x18] sm:$0xff] %vm660, %v648
      %vm662 = vcmask 1040448
      %663 = vst.msk [vmem:[#allocation2 + $0x20] sm:$0x1] %vm662, %v650
      %vm664 = vcmask 57344
      %665 = vst.msk [vmem:[#allocation2 + $0x28] sm:$0x1] %vm664, %v650
      %v666 = vld [vmem:[%s4] sm:$0x1]
      %v667 = vld [vmem:[#allocation2] sm:$0xff]
      %v668 = vld [vmem:[#allocation2 + $0x8] sm:$0xff]
      %v669 = vld [vmem:[#allocation2 + $0x10] sm:$0xff]
      %v670 = vld [vmem:[#allocation2 + $0x18] sm:$0xff]
      %v671 = vpack.c.bf16 %v669, %v667
      %v672 = vpack.c.bf16 %v670, %v668
      %v673 = vld [vmem:[%s3] sm:$0xf]
      %v674 = vld [vmem:[%s3 + $0x4] sm:$0xf]
      %v675 = vld [vmem:[%s3 + $0x8] sm:$0xf]
      %v676 = vld [vmem:[%s3 + $0xc] sm:$0xf]
      %v677 = vld [vmem:[%s3 + $0x10] sm:$0xf]
      %v678 = vld [vmem:[%s3 + $0x14] sm:$0xf]
      %v679 = vld [vmem:[%s3 + $0x18] sm:$0xf]
      %v680 = vld [vmem:[%s3 + $0x1c] sm:$0xf]
      %v681 = vld [vmem:[%s3 + $0x20] sm:$0xf]
      %v682 = vld [vmem:[%s3 + $0x24] sm:$0xf]
      %v683 = vld [vmem:[%s3 + $0x28] sm:$0xf]
      %v684 = vld [vmem:[%s3 + $0x2c] sm:$0xf]
      %v685 = vld [vmem:[%s3 + $0x30] sm:$0xf]
      %v686 = vld [vmem:[%s3 + $0x34] sm:$0xf]
      %v687 = vld [vmem:[%s3 + $0x38] sm:$0xf]
      %v688 = vld [vmem:[%s3 + $0x3c] sm:$0xf]
      %v689 = vld [vmem:[%s3 + $0x40] sm:$0xf]
      %v690 = vld [vmem:[%s3 + $0x44] sm:$0xf]
      %v691 = vld [vmem:[#allocation2] sm:$0xfe]
      %v692 = vld [vmem:[#allocation2 + $0x8] sm:$0xfe]
      %v693 = vld [vmem:[#allocation2 + $0x20] sm:$0x1]
      %v694 = vld [vmem:[#allocation2 + $0x28] sm:$0x1]
      %v695 = vpack.c.bf16 %v669, %v691
      %v696 = vpack.c.bf16 %v670, %v692
      %v697 = vpack.c.bf16 %v693, %v693
      %v698 = vpack.c.bf16 %v694, %v694
      %s699 = scalar_lea.vmem %s3, 72
      %v700 = vld [vmem:[%s699] sm:$0xf]
      %v701 = vld [vmem:[%s699 + $0x4] sm:$0xf]
      %v702 = vld [vmem:[%s699 + $0x8] sm:$0xf]
      %v703 = vld [vmem:[%s699 + $0xc] sm:$0xf]
      %v704 = vld [vmem:[%s699 + $0x10] sm:$0xf]
      %v705 = vld [vmem:[%s699 + $0x14] sm:$0xf]
      %v706 = vld [vmem:[%s699 + $0x18] sm:$0xf]
      %v707 = vld [vmem:[%s699 + $0x1c] sm:$0xf]
      %v708 = vld [vmem:[%s699 + $0x20] sm:$0xf]
      %v709 = vld [vmem:[%s699 + $0x24] sm:$0xf]
      %v710 = vld [vmem:[%s699 + $0x28] sm:$0xf]
      %v711 = vld [vmem:[%s699 + $0x2c] sm:$0xf]
      %v712 = vld [vmem:[%s699 + $0x30] sm:$0xf]
      %v713 = vld [vmem:[%s699 + $0x34] sm:$0xf]
      %v714 = vld [vmem:[%s699 + $0x38] sm:$0xf]
      %v715 = vld [vmem:[%s699 + $0x3c] sm:$0xf]
      %v716 = vld [vmem:[%s699 + $0x40] sm:$0xf]
      %v717 = vld [vmem:[%s699 + $0x44] sm:$0xf]
      %vm718 = vsmask.f32 7424
      %v720 = vshrl.u32 %v695, 16
      %v722 = vshll.u32 %v695, 16
      %v724 = vrot.slane %v722, 1
      %v725 = vor.u32 %v720, %v724
      %v727 = vshll.u32 %v697, 16
      %v729 = vrot.slane %v727, 1
      %v730 = vsel %vm718, %v725, %v729
      %v732 = vshrl.u32 %v696, 16
      %v734 = vshll.u32 %v696, 16
      %v736 = vrot.slane %v734, 1
      %v737 = vor.u32 %v732, %v736
      %v739 = vshll.u32 %v698, 16
      %v741 = vrot.slane %v739, 1
      %v742 = vsel %vm718, %v737, %v741
      %v762 = vunpack.c.l.b16 %v700
      %v763 = vunpack.c.l.b16 %v701
      %v764 = vunpack.c.l.b16 %v702
      %v765 = vunpack.c.l.b16 %v703
      %v766 = vunpack.c.l.b16 %v704
      %v767 = vunpack.c.l.b16 %v705
      %v768 = vunpack.c.l.b16 %v706
      %v769 = vunpack.c.l.b16 %v707
      %v770 = vunpack.c.l.b16 %v708
      %v771 = vunpack.c.l.b16 %v709
      %v772 = vunpack.c.l.b16 %v710
      %v773 = vunpack.c.l.b16 %v711
      %v774 = vunpack.c.l.b16 %v712
      %v775 = vunpack.c.l.b16 %v713
      %v776 = vunpack.c.l.b16 %v714
      %v777 = vunpack.c.l.b16 %v715
      %v778 = vunpack.c.l.b16 %v716
      %v779 = vunpack.c.l.b16 %v717
      %v780 = vpack.c.b16 %v763, %v762
      %v781 = vpack.c.b16 %v765, %v764
      %v782 = vpack.c.b16 %v767, %v766
      %v783 = vpack.c.b16 %v769, %v768
      %v784 = vpack.c.b16 %v771, %v770
      %v785 = vpack.c.b16 %v773, %v772
      %v786 = vpack.c.b16 %v775, %v774
      %v787 = vpack.c.b16 %v777, %v776
      %v788 = vpack.c.b16 %v779, %v778
      %v799 = vsel %vm362, %v742, 0
      %801 = vmatprep.subr.bf16.mxu0 0
      %802 = vmatpush1.bf16.msra.mxu0 %v787
      %803 = vmatprep.subr.bf16.mxu0 0
      %804 = vmatpush1.bf16.msra.mxu0 %v786
      %805 = vmatprep.subr.bf16.mxu0 0
      %806 = vmatpush1.bf16.msra.mxu0 %v785
      %807 = vmatprep.subr.bf16.mxu0 0
      %808 = vmatpush1.bf16.msra.mxu0 %v784
      %809 = vmatprep.subr.bf16.mxu0 0
      %810 = vmatpush1.bf16.msra.mxu0 %v783
      %811 = vmatprep.subr.bf16.mxu0 0
      %812 = vmatpush1.bf16.msra.mxu0 %v782
      %813 = vmatprep.subr.bf16.mxu0 0
      %814 = vmatpush1.bf16.msra.mxu0 %v781
      %815 = vmatprep.subr.bf16.mxu0 0
      %816 = vmatpush1.bf16.msra.mxu0 %v780
      %817 = vmatprep.subr.bf16.mxu0 0
      %818 = vmatpush2.bf16.msra.mxu0 0
      %819 = vmatprep.subr.bf16.mxu0 0
      %820 = vmatpush2.bf16.msra.mxu0 0
      %821 = vmatprep.subr.bf16.mxu0 0
      %822 = vmatpush2.bf16.msra.mxu0 0
      %823 = vmatprep.subr.bf16.mxu0 0
      %824 = vmatpush2.bf16.msra.mxu0 0
      %825 = vmatprep.subr.bf16.mxu0 0
      %826 = vmatpush2.bf16.msra.mxu0 0
      %827 = vmatprep.subr.bf16.mxu0 0
      %828 = vmatpush2.bf16.msra.mxu0 0
      %829 = vmatprep.subr.bf16.mxu0 0
      %830 = vmatpush2.bf16.msra.mxu0 0
      %831 = vmatprep.subr.bf16.mxu0 0
      %832 = vmatpush2.bf16.msra.mxu0 %v788
      %833 = vmatprep.mubr.bf16.mxu0 %v799
      %834 = vmatmul.mubr.bf16.gmra.mxu0 %v730
      %v835 = vpop.f32.mrf.mxu0
      %v836 = vadd.f32 0.0, %v835
      %v837 = vpop.f32.mrf.mxu0
      %v838 = vpop.f32.mrf.mxu0
      %v839 = vadd.f32 0.0, %v838
      %v840 = vpop.f32.mrf.mxu0
      %841 = vdwg.mxu0
      %v860 = vunpack.c.l.b16 %v673
      %v861 = vunpack.c.l.b16 %v674
      %v862 = vunpack.c.l.b16 %v675
      %v863 = vunpack.c.l.b16 %v676
      %v864 = vunpack.c.l.b16 %v677
      %v865 = vunpack.c.l.b16 %v678
      %v866 = vunpack.c.l.b16 %v679
      %v867 = vunpack.c.l.b16 %v680
      %v868 = vunpack.c.l.b16 %v681
      %v869 = vunpack.c.l.b16 %v682
      %v870 = vunpack.c.l.b16 %v683
      %v871 = vunpack.c.l.b16 %v684
      %v872 = vunpack.c.l.b16 %v685
      %v873 = vunpack.c.l.b16 %v686
      %v874 = vunpack.c.l.b16 %v687
      %v875 = vunpack.c.l.b16 %v688
      %v876 = vunpack.c.l.b16 %v689
      %v877 = vunpack.c.l.b16 %v690
      %v878 = vpack.c.b16 %v861, %v860
      %v879 = vpack.c.b16 %v863, %v862
      %v880 = vpack.c.b16 %v865, %v864
      %v881 = vpack.c.b16 %v867, %v866
      %v882 = vpack.c.b16 %v869, %v868
      %v883 = vpack.c.b16 %v871, %v870
      %v884 = vpack.c.b16 %v873, %v872
      %v885 = vpack.c.b16 %v875, %v874
      %v886 = vpack.c.b16 %v877, %v876
      %v897 = vsel %vm362, %v672, 0
      %899 = vmatprep.subr.bf16.mxu0 0
      %900 = vmatpush1.bf16.msra.mxu0 %v885
      %901 = vmatprep.subr.bf16.mxu0 0
      %902 = vmatpush1.bf16.msra.mxu0 %v884
      %903 = vmatprep.subr.bf16.mxu0 0
      %904 = vmatpush1.bf16.msra.mxu0 %v883
      %905 = vmatprep.subr.bf16.mxu0 0
      %906 = vmatpush1.bf16.msra.mxu0 %v882
      %907 = vmatprep.subr.bf16.mxu0 0
      %908 = vmatpush1.bf16.msra.mxu0 %v881
      %909 = vmatprep.subr.bf16.mxu0 0
      %910 = vmatpush1.bf16.msra.mxu0 %v880
      %911 = vmatprep.subr.bf16.mxu0 0
      %912 = vmatpush1.bf16.msra.mxu0 %v879
      %913 = vmatprep.subr.bf16.mxu0 0
      %914 = vmatpush1.bf16.msra.mxu0 %v878
      %915 = vmatprep.subr.bf16.mxu0 0
      %916 = vmatpush2.bf16.msra.mxu0 0
      %917 = vmatprep.subr.bf16.mxu0 0
      %918 = vmatpush2.bf16.msra.mxu0 0
      %919 = vmatprep.subr.bf16.mxu0 0
      %920 = vmatpush2.bf16.msra.mxu0 0
      %921 = vmatprep.subr.bf16.mxu0 0
      %922 = vmatpush2.bf16.msra.mxu0 0
      %923 = vmatprep.subr.bf16.mxu0 0
      %924 = vmatpush2.bf16.msra.mxu0 0
      %925 = vmatprep.subr.bf16.mxu0 0
      %926 = vmatpush2.bf16.msra.mxu0 0
      %927 = vmatprep.subr.bf16.mxu0 0
      %928 = vmatpush2.bf16.msra.mxu0 0
      %929 = vmatprep.subr.bf16.mxu0 0
      %930 = vmatpush2.bf16.msra.mxu0 %v886
      %931 = vmatprep.mubr.bf16.mxu0 %v897
      %932 = vmatmul.mubr.bf16.gmra.mxu0 %v671
      %v933 = vpop.f32.mrf.mxu0
      %v934 = vadd.f32 %v836, %v933
      %v935 = vpop.f32.mrf.mxu0
      %v936 = vpop.f32.mrf.mxu0
      %v937 = vadd.f32 %v839, %v936
      %v938 = vpop.f32.mrf.mxu0
      %939 = vdwg.mxu0
      %v940 = vld [vmem:[#allocation2] sm:$0xfc]
      %v941 = vld [vmem:[#allocation2 + $0x8] sm:$0xfc]
      %v942 = vld [vmem:[#allocation2 + $0x20] sm:$0x3]
      %v943 = vld [vmem:[#allocation2 + $0x28] sm:$0x3]
      %v944 = vpack.c.bf16 %v669, %v940
      %v945 = vpack.c.bf16 %v670, %v941
      %v946 = vpack.c.bf16 %v942, %v942
      %v947 = vpack.c.bf16 %v943, %v943
      %s948 = scalar_lea.vmem %s3, 144
      %v949 = vld [vmem:[%s948] sm:$0xf]
      %v950 = vld [vmem:[%s948 + $0x4] sm:$0xf]
      %v951 = vld [vmem:[%s948 + $0x8] sm:$0xf]
      %v952 = vld [vmem:[%s948 + $0xc] sm:$0xf]
      %v953 = vld [vmem:[%s948 + $0x10] sm:$0xf]
      %v954 = vld [vmem:[%s948 + $0x14] sm:$0xf]
      %v955 = vld [vmem:[%s948 + $0x18] sm:$0xf]
      %v956 = vld [vmem:[%s948 + $0x1c] sm:$0xf]
      %v957 = vld [vmem:[%s948 + $0x20] sm:$0xf]
      %v958 = vld [vmem:[%s948 + $0x24] sm:$0xf]
      %v959 = vld [vmem:[%s948 + $0x28] sm:$0xf]
      %v960 = vld [vmem:[%s948 + $0x2c] sm:$0xf]
      %v961 = vld [vmem:[%s948 + $0x30] sm:$0xf]
      %v962 = vld [vmem:[%s948 + $0x34] sm:$0xf]
      %v963 = vld [vmem:[%s948 + $0x38] sm:$0xf]
      %v964 = vld [vmem:[%s948 + $0x3c] sm:$0xf]
      %v965 = vld [vmem:[%s948 + $0x40] sm:$0xf]
      %v966 = vld [vmem:[%s948 + $0x44] sm:$0xf]
      %vm971 = vcmask 1046528
      %v972 = vrot.slane %v944, 1
      %v973 = vrot.slane %v946, 1
      %v974 = vsel %vm971, %v972, %v973
      %v975 = vrot.slane %v945, 1
      %v976 = vrot.slane %v947, 1
      %v977 = vsel %vm971, %v975, %v976
      %v997 = vunpack.c.l.b16 %v949
      %v998 = vunpack.c.l.b16 %v950
      %v999 = vunpack.c.l.b16 %v951
      %v1000 = vunpack.c.l.b16 %v952
      %v1001 = vunpack.c.l.b16 %v953
      %v1002 = vunpack.c.l.b16 %v954
      %v1003 = vunpack.c.l.b16 %v955
      %v1004 = vunpack.c.l.b16 %v956
      %v1005 = vunpack.c.l.b16 %v957
      %v1006 = vunpack.c.l.b16 %v958
      %v1007 = vunpack.c.l.b16 %v959
      %v1008 = vunpack.c.l.b16 %v960
      %v1009 = vunpack.c.l.b16 %v961
      %v1010 = vunpack.c.l.b16 %v962
      %v1011 = vunpack.c.l.b16 %v963
      %v1012 = vunpack.c.l.b16 %v964
      %v1013 = vunpack.c.l.b16 %v965
      %v1014 = vunpack.c.l.b16 %v966
      %v1015 = vpack.c.b16 %v998, %v997
      %v1016 = vpack.c.b16 %v1000, %v999
      %v1017 = vpack.c.b16 %v1002, %v1001
      %v1018 = vpack.c.b16 %v1004, %v1003
      %v1019 = vpack.c.b16 %v1006, %v1005
      %v1020 = vpack.c.b16 %v1008, %v1007
      %v1021 = vpack.c.b16 %v1010, %v1009
      %v1022 = vpack.c.b16 %v1012, %v1011
      %v1023 = vpack.c.b16 %v1014, %v1013
      %v1034 = vsel %vm362, %v977, 0
      %1036 = vmatprep.subr.bf16.mxu0 0
      %1037 = vmatpush1.bf16.msra.mxu0 %v1022
      %1038 = vmatprep.subr.bf16.mxu0 0
      %1039 = vmatpush1.bf16.msra.mxu0 %v1021
      %1040 = vmatprep.subr.bf16.mxu0 0
      %1041 = vmatpush1.bf16.msra.mxu0 %v1020
      %1042 = vmatprep.subr.bf16.mxu0 0
      %1043 = vmatpush1.bf16.msra.mxu0 %v1019
      %1044 = vmatprep.subr.bf16.mxu0 0
      %1045 = vmatpush1.bf16.msra.mxu0 %v1018
      %1046 = vmatprep.subr.bf16.mxu0 0
      %1047 = vmatpush1.bf16.msra.mxu0 %v1017
      %1048 = vmatprep.subr.bf16.mxu0 0
      %1049 = vmatpush1.bf16.msra.mxu0 %v1016
      %1050 = vmatprep.subr.bf16.mxu0 0
      %1051 = vmatpush1.bf16.msra.mxu0 %v1015
      %1052 = vmatprep.subr.bf16.mxu0 0
      %1053 = vmatpush2.bf16.msra.mxu0 0
      %1054 = vmatprep.subr.bf16.mxu0 0
      %1055 = vmatpush2.bf16.msra.mxu0 0
      %1056 = vmatprep.subr.bf16.mxu0 0
      %1057 = vmatpush2.bf16.msra.mxu0 0
      %1058 = vmatprep.subr.bf16.mxu0 0
      %1059 = vmatpush2.bf16.msra.mxu0 0
      %1060 = vmatprep.subr.bf16.mxu0 0
      %1061 = vmatpush2.bf16.msra.mxu0 0
      %1062 = vmatprep.subr.bf16.mxu0 0
      %1063 = vmatpush2.bf16.msra.mxu0 0
      %1064 = vmatprep.subr.bf16.mxu0 0
      %1065 = vmatpush2.bf16.msra.mxu0 0
      %1066 = vmatprep.subr.bf16.mxu0 0
      %1067 = vmatpush2.bf16.msra.mxu0 %v1023
      %1068 = vmatprep.mubr.bf16.mxu0 %v1034
      %1069 = vmatmul.mubr.bf16.gmra.mxu0 %v974
      %v1070 = vpop.f32.mrf.mxu0
      %v1071 = vadd.f32 0.0, %v1070
      %v1072 = vpop.f32.mrf.mxu0
      %v1073 = vpop.f32.mrf.mxu0
      %v1074 = vadd.f32 0.0, %v1073
      %v1075 = vpop.f32.mrf.mxu0
      %1076 = vdwg.mxu0
      %v1077 = vadd.f32 %v934, %v1071
      %v1078 = vadd.f32 %v937, %v1074
      %v1079 = vlaneseq
      %v1080 = vshrl.u32 %v1079, 7
      %v1081 = vsub.s32 0, %v1080
      %v1082 = vrot.slane %v666, %v1081
      %v1083 = vadd.f32 %v1077, %v1082
      %v1084 = vadd.f32 %v1078, %v1082
      %v1085 = vmax.f32 %v1083, 0.0
      %v1086 = vmax.f32 %v1084, 0.0
      %v1089 = vrot.slane %v1085, 7
      %v1090 = vrot.slane %v1086, 7
      %v1091 = vsel %vm641, %v1089, %v1090
      %1092 = vrot.lane.b32.xlu0 %v1089, 8
      %v1093 = vpop.permute.xlu0 %1092
      %1094 = vrot.lane.b32.xlu0 %v1091, 8
      %v1095 = vpop.permute.xlu0 %1094
      %1096 = vrot.lane.b32.xlu0 %v1090, 8
      %v1097 = vpop.permute.xlu0 %1096
      %1101 = vst.msk [vmem:[#allocation3] sm:$0xfe] %vm654, %v1093
      %1102 = vst.msk [vmem:[#allocation3 + $0x8] sm:$0xfe] %vm656, %v1093
      %1103 = vst.msk [vmem:[#allocation3 + $0x10] sm:$0xff] %vm658, %v1095
      %1104 = vst.msk [vmem:[#allocation3 + $0x18] sm:$0xff] %vm660, %v1095
      %1105 = vst.msk [vmem:[#allocation3 + $0x20] sm:$0x1] %vm662, %v1097
      %1106 = vst.msk [vmem:[#allocation3 + $0x28] sm:$0x1] %vm664, %v1097
      %v1107 = vld [vmem:[%s4 + $0x1] sm:$0x1]
      %v1108 = vld [vmem:[#allocation3] sm:$0xff]
      %v1109 = vld [vmem:[#allocation3 + $0x8] sm:$0xff]
      %v1110 = vld [vmem:[#allocation3 + $0x10] sm:$0xff]
      %v1111 = vld [vmem:[#allocation3 + $0x18] sm:$0xff]
      %v1112 = vpack.c.bf16 %v1110, %v1108
      %v1113 = vpack.c.bf16 %v1111, %v1109
      %s1114 = scalar_lea.vmem %s3, 216
      %v1115 = vld [vmem:[%s1114] sm:$0xf]
      %v1116 = vld [vmem:[%s1114 + $0x4] sm:$0xf]
      %v1117 = vld [vmem:[%s1114 + $0x8] sm:$0xf]
      %v1118 = vld [vmem:[%s1114 + $0xc] sm:$0xf]
      %v1119 = vld [vmem:[%s1114 + $0x10] sm:$0xf]
      %v1120 = vld [vmem:[%s1114 + $0x14] sm:$0xf]
      %v1121 = vld [vmem:[%s1114 + $0x18] sm:$0xf]
      %v1122 = vld [vmem:[%s1114 + $0x1c] sm:$0xf]
      %v1123 = vld [vmem:[%s1114 + $0x20] sm:$0xf]
      %v1124 = vld [vmem:[%s1114 + $0x24] sm:$0xf]
      %v1125 = vld [vmem:[%s1114 + $0x28] sm:$0xf]
      %v1126 = vld [vmem:[%s1114 + $0x2c] sm:$0xf]
      %v1127 = vld [vmem:[%s1114 + $0x30] sm:$0xf]
      %v1128 = vld [vmem:[%s1114 + $0x34] sm:$0xf]
      %v1129 = vld [vmem:[%s1114 + $0x38] sm:$0xf]
      %v1130 = vld [vmem:[%s1114 + $0x3c] sm:$0xf]
      %v1131 = vld [vmem:[%s1114 + $0x40] sm:$0xf]
      %v1132 = vld [vmem:[%s1114 + $0x44] sm:$0xf]
      %v1133 = vld [vmem:[#allocation3] sm:$0xfe]
      %v1134 = vld [vmem:[#allocation3 + $0x8] sm:$0xfe]
      %v1135 = vld [vmem:[#allocation3 + $0x20] sm:$0x1]
      %v1136 = vld [vmem:[#allocation3 + $0x28] sm:$0x1]
      %v1137 = vpack.c.bf16 %v1110, %v1133
      %v1138 = vpack.c.bf16 %v1111, %v1134
      %v1139 = vpack.c.bf16 %v1135, %v1135
      %v1140 = vpack.c.bf16 %v1136, %v1136
      %s1141 = scalar_lea.vmem %s3, 288
      %v1142 = vld [vmem:[%s1141] sm:$0xf]
      %v1143 = vld [vmem:[%s1141 + $0x4] sm:$0xf]
      %v1144 = vld [vmem:[%s1141 + $0x8] sm:$0xf]
      %v1145 = vld [vmem:[%s1141 + $0xc] sm:$0xf]
      %v1146 = vld [vmem:[%s1141 + $0x10] sm:$0xf]
      %v1147 = vld [vmem:[%s1141 + $0x14] sm:$0xf]
      %v1148 = vld [vmem:[%s1141 + $0x18] sm:$0xf]
      %v1149 = vld [vmem:[%s1141 + $0x1c] sm:$0xf]
      %v1150 = vld [vmem:[%s1141 + $0x20] sm:$0xf]
      %v1151 = vld [vmem:[%s1141 + $0x24] sm:$0xf]
      %v1152 = vld [vmem:[%s1141 + $0x28] sm:$0xf]
      %v1153 = vld [vmem:[%s1141 + $0x2c] sm:$0xf]
      %v1154 = vld [vmem:[%s1141 + $0x30] sm:$0xf]
      %v1155 = vld [vmem:[%s1141 + $0x34] sm:$0xf]
      %v1156 = vld [vmem:[%s1141 + $0x38] sm:$0xf]
      %v1157 = vld [vmem:[%s1141 + $0x3c] sm:$0xf]
      %v1158 = vld [vmem:[%s1141 + $0x40] sm:$0xf]
      %v1159 = vld [vmem:[%s1141 + $0x44] sm:$0xf]
      %v1161 = vshrl.u32 %v1137, 16
      %v1163 = vshll.u32 %v1137, 16
      %v1165 = vrot.slane %v1163, 1
      %v1166 = vor.u32 %v1161, %v1165
      %v1168 = vshll.u32 %v1139, 16
      %v1170 = vrot.slane %v1168, 1
      %v1171 = vsel %vm718, %v1166, %v1170
      %v1173 = vshrl.u32 %v1138, 16
      %v1175 = vshll.u32 %v1138, 16
      %v1177 = vrot.slane %v1175, 1
      %v1178 = vor.u32 %v1173, %v1177
      %v1180 = vshll.u32 %v1140, 16
      %v1182 = vrot.slane %v1180, 1
      %v1183 = vsel %vm718, %v1178, %v1182
      %v1203 = vunpack.c.l.b16 %v1142
      %v1204 = vunpack.c.l.b16 %v1143
      %v1205 = vunpack.c.l.b16 %v1144
      %v1206 = vunpack.c.l.b16 %v1145
      %v1207 = vunpack.c.l.b16 %v1146
      %v1208 = vunpack.c.l.b16 %v1147
      %v1209 = vunpack.c.l.b16 %v1148
      %v1210 = vunpack.c.l.b16 %v1149
      %v1211 = vunpack.c.l.b16 %v1150
      %v1212 = vunpack.c.l.b16 %v1151
      %v1213 = vunpack.c.l.b16 %v1152
      %v1214 = vunpack.c.l.b16 %v1153
      %v1215 = vunpack.c.l.b16 %v1154
      %v1216 = vunpack.c.l.b16 %v1155
      %v1217 = vunpack.c.l.b16 %v1156
      %v1218 = vunpack.c.l.b16 %v1157
      %v1219 = vunpack.c.l.b16 %v1158
      %v1220 = vunpack.c.l.b16 %v1159
      %v1221 = vpack.c.b16 %v1204, %v1203
      %v1222 = vpack.c.b16 %v1206, %v1205
      %v1223 = vpack.c.b16 %v1208, %v1207
      %v1224 = vpack.c.b16 %v1210, %v1209
      %v1225 = vpack.c.b16 %v1212, %v1211
      %v1226 = vpack.c.b16 %v1214, %v1213
      %v1227 = vpack.c.b16 %v1216, %v1215
      %v1228 = vpack.c.b16 %v1218, %v1217
      %v1229 = vpack.c.b16 %v1220, %v1219
      %v1240 = vsel %vm362, %v1183, 0
      %1242 = vmatprep.subr.bf16.mxu0 0
      %1243 = vmatpush1.bf16.msra.mxu0 %v1228
      %1244 = vmatprep.subr.bf16.mxu0 0
      %1245 = vmatpush1.bf16.msra.mxu0 %v1227
      %1246 = vmatprep.subr.bf16.mxu0 0
      %1247 = vmatpush1.bf16.msra.mxu0 %v1226
      %1248 = vmatprep.subr.bf16.mxu0 0
      %1249 = vmatpush1.bf16.msra.mxu0 %v1225
      %1250 = vmatprep.subr.bf16.mxu0 0
      %1251 = vmatpush1.bf16.msra.mxu0 %v1224
      %1252 = vmatprep.subr.bf16.mxu0 0
      %1253 = vmatpush1.bf16.msra.mxu0 %v1223
      %1254 = vmatprep.subr.bf16.mxu0 0
      %1255 = vmatpush1.bf16.msra.mxu0 %v1222
      %1256 = vmatprep.subr.bf16.mxu0 0
      %1257 = vmatpush1.bf16.msra.mxu0 %v1221
      %1258 = vmatprep.subr.bf16.mxu0 0
      %1259 = vmatpush2.bf16.msra.mxu0 0
      %1260 = vmatprep.subr.bf16.mxu0 0
      %1261 = vmatpush2.bf16.msra.mxu0 0
      %1262 = vmatprep.subr.bf16.mxu0 0
      %1263 = vmatpush2.bf16.msra.mxu0 0
      %1264 = vmatprep.subr.bf16.mxu0 0
      %1265 = vmatpush2.bf16.msra.mxu0 0
      %1266 = vmatprep.subr.bf16.mxu0 0
      %1267 = vmatpush2.bf16.msra.mxu0 0
      %1268 = vmatprep.subr.bf16.mxu0 0
      %1269 = vmatpush2.bf16.msra.mxu0 0
      %1270 = vmatprep.subr.bf16.mxu0 0
      %1271 = vmatpush2.bf16.msra.mxu0 0
      %1272 = vmatprep.subr.bf16.mxu0 0
      %1273 = vmatpush2.bf16.msra.mxu0 %v1229
      %1274 = vmatprep.mubr.bf16.mxu0 %v1240
      %1275 = vmatmul.mubr.bf16.gmra.mxu0 %v1171
      %v1276 = vpop.f32.mrf.mxu0
      %v1277 = vadd.f32 0.0, %v1276
      %v1278 = vpop.f32.mrf.mxu0
      %v1279 = vpop.f32.mrf.mxu0
      %v1280 = vadd.f32 0.0, %v1279
      %v1281 = vpop.f32.mrf.mxu0
      %1282 = vdwg.mxu0
      %v1301 = vunpack.c.l.b16 %v1115
      %v1302 = vunpack.c.l.b16 %v1116
      %v1303 = vunpack.c.l.b16 %v1117
      %v1304 = vunpack.c.l.b16 %v1118
      %v1305 = vunpack.c.l.b16 %v1119
      %v1306 = vunpack.c.l.b16 %v1120
      %v1307 = vunpack.c.l.b16 %v1121
      %v1308 = vunpack.c.l.b16 %v1122
      %v1309 = vunpack.c.l.b16 %v1123
      %v1310 = vunpack.c.l.b16 %v1124
      %v1311 = vunpack.c.l.b16 %v1125
      %v1312 = vunpack.c.l.b16 %v1126
      %v1313 = vunpack.c.l.b16 %v1127
      %v1314 = vunpack.c.l.b16 %v1128
      %v1315 = vunpack.c.l.b16 %v1129
      %v1316 = vunpack.c.l.b16 %v1130
      %v1317 = vunpack.c.l.b16 %v1131
      %v1318 = vunpack.c.l.b16 %v1132
      %v1319 = vpack.c.b16 %v1302, %v1301
      %v1320 = vpack.c.b16 %v1304, %v1303
      %v1321 = vpack.c.b16 %v1306, %v1305
      %v1322 = vpack.c.b16 %v1308, %v1307
      %v1323 = vpack.c.b16 %v1310, %v1309
      %v1324 = vpack.c.b16 %v1312, %v1311
      %v1325 = vpack.c.b16 %v1314, %v1313
      %v1326 = vpack.c.b16 %v1316, %v1315
      %v1327 = vpack.c.b16 %v1318, %v1317
      %v1338 = vsel %vm362, %v1113, 0
      %1340 = vmatprep.subr.bf16.mxu0 0
      %1341 = vmatpush1.bf16.msra.mxu0 %v1326
      %1342 = vmatprep.subr.bf16.mxu0 0
      %1343 = vmatpush1.bf16.msra.mxu0 %v1325
      %1344 = vmatprep.subr.bf16.mxu0 0
      %1345 = vmatpush1.bf16.msra.mxu0 %v1324
      %1346 = vmatprep.subr.bf16.mxu0 0
      %1347 = vmatpush1.bf16.msra.mxu0 %v1323
      %1348 = vmatprep.subr.bf16.mxu0 0
      %1349 = vmatpush1.bf16.msra.mxu0 %v1322
      %1350 = vmatprep.subr.bf16.mxu0 0
      %1351 = vmatpush1.bf16.msra.mxu0 %v1321
      %1352 = vmatprep.subr.bf16.mxu0 0
      %1353 = vmatpush1.bf16.msra.mxu0 %v1320
      %1354 = vmatprep.subr.bf16.mxu0 0
      %1355 = vmatpush1.bf16.msra.mxu0 %v1319
      %1356 = vmatprep.subr.bf16.mxu0 0
      %1357 = vmatpush2.bf16.msra.mxu0 0
      %1358 = vmatprep.subr.bf16.mxu0 0
      %1359 = vmatpush2.bf16.msra.mxu0 0
      %1360 = vmatprep.subr.bf16.mxu0 0
      %1361 = vmatpush2.bf16.msra.mxu0 0
      %1362 = vmatprep.subr.bf16.mxu0 0
      %1363 = vmatpush2.bf16.msra.mxu0 0
      %1364 = vmatprep.subr.bf16.mxu0 0
      %1365 = vmatpush2.bf16.msra.mxu0 0
      %1366 = vmatprep.subr.bf16.mxu0 0
      %1367 = vmatpush2.bf16.msra.mxu0 0
      %1368 = vmatprep.subr.bf16.mxu0 0
      %1369 = vmatpush2.bf16.msra.mxu0 0
      %1370 = vmatprep.subr.bf16.mxu0 0
      %1371 = vmatpush2.bf16.msra.mxu0 %v1327
      %1372 = vmatprep.mubr.bf16.mxu0 %v1338
      %1373 = vmatmul.mubr.bf16.gmra.mxu0 %v1112
      %v1374 = vpop.f32.mrf.mxu0
      %v1375 = vadd.f32 %v1277, %v1374
      %v1376 = vpop.f32.mrf.mxu0
      %v1377 = vpop.f32.mrf.mxu0
      %v1378 = vadd.f32 %v1280, %v1377
      %v1379 = vpop.f32.mrf.mxu0
      %1380 = vdwg.mxu0
      %v1381 = vld [vmem:[#allocation3] sm:$0xfc]
      %v1382 = vld [vmem:[#allocation3 + $0x8] sm:$0xfc]
      %v1383 = vld [vmem:[#allocation3 + $0x20] sm:$0x3]
      %v1384 = vld [vmem:[#allocation3 + $0x28] sm:$0x3]
      %v1385 = vpack.c.bf16 %v1110, %v1381
      %v1386 = vpack.c.bf16 %v1111, %v1382
      %v1387 = vpack.c.bf16 %v1383, %v1383
      %v1388 = vpack.c.bf16 %v1384, %v1384
      %s1389 = scalar_lea.vmem %s3, 360
      %v1390 = vld [vmem:[%s1389] sm:$0xf]
      %v1391 = vld [vmem:[%s1389 + $0x4] sm:$0xf]
      %v1392 = vld [vmem:[%s1389 + $0x8] sm:$0xf]
      %v1393 = vld [vmem:[%s1389 + $0xc] sm:$0xf]
      %v1394 = vld [vmem:[%s1389 + $0x10] sm:$0xf]
      %v1395 = vld [vmem:[%s1389 + $0x14] sm:$0xf]
      %v1396 = vld [vmem:[%s1389 + $0x18] sm:$0xf]
      %v1397 = vld [vmem:[%s1389 + $0x1c] sm:$0xf]
      %v1398 = vld [vmem:[%s1389 + $0x20] sm:$0xf]
      %v1399 = vld [vmem:[%s1389 + $0x24] sm:$0xf]
      %v1400 = vld [vmem:[%s1389 + $0x28] sm:$0xf]
      %v1401 = vld [vmem:[%s1389 + $0x2c] sm:$0xf]
      %v1402 = vld [vmem:[%s1389 + $0x30] sm:$0xf]
      %v1403 = vld [vmem:[%s1389 + $0x34] sm:$0xf]
      %v1404 = vld [vmem:[%s1389 + $0x38] sm:$0xf]
      %v1405 = vld [vmem:[%s1389 + $0x3c] sm:$0xf]
      %v1406 = vld [vmem:[%s1389 + $0x40] sm:$0xf]
      %v1407 = vld [vmem:[%s1389 + $0x44] sm:$0xf]
      %v1412 = vrot.slane %v1385, 1
      %v1413 = vrot.slane %v1387, 1
      %v1414 = vsel %vm971, %v1412, %v1413
      %v1415 = vrot.slane %v1386, 1
      %v1416 = vrot.slane %v1388, 1
      %v1417 = vsel %vm971, %v1415, %v1416
      %v1437 = vunpack.c.l.b16 %v1390
      %v1438 = vunpack.c.l.b16 %v1391
      %v1439 = vunpack.c.l.b16 %v1392
      %v1440 = vunpack.c.l.b16 %v1393
      %v1441 = vunpack.c.l.b16 %v1394
      %v1442 = vunpack.c.l.b16 %v1395
      %v1443 = vunpack.c.l.b16 %v1396
      %v1444 = vunpack.c.l.b16 %v1397
      %v1445 = vunpack.c.l.b16 %v1398
      %v1446 = vunpack.c.l.b16 %v1399
      %v1447 = vunpack.c.l.b16 %v1400
      %v1448 = vunpack.c.l.b16 %v1401
      %v1449 = vunpack.c.l.b16 %v1402
      %v1450 = vunpack.c.l.b16 %v1403
      %v1451 = vunpack.c.l.b16 %v1404
      %v1452 = vunpack.c.l.b16 %v1405
      %v1453 = vunpack.c.l.b16 %v1406
      %v1454 = vunpack.c.l.b16 %v1407
      %v1455 = vpack.c.b16 %v1438, %v1437
      %v1456 = vpack.c.b16 %v1440, %v1439
      %v1457 = vpack.c.b16 %v1442, %v1441
      %v1458 = vpack.c.b16 %v1444, %v1443
      %v1459 = vpack.c.b16 %v1446, %v1445
      %v1460 = vpack.c.b16 %v1448, %v1447
      %v1461 = vpack.c.b16 %v1450, %v1449
      %v1462 = vpack.c.b16 %v1452, %v1451
      %v1463 = vpack.c.b16 %v1454, %v1453
      %v1474 = vsel %vm362, %v1417, 0
      %1476 = vmatprep.subr.bf16.mxu0 0
      %1477 = vmatpush1.bf16.msra.mxu0 %v1462
      %1478 = vmatprep.subr.bf16.mxu0 0
      %1479 = vmatpush1.bf16.msra.mxu0 %v1461
      %1480 = vmatprep.subr.bf16.mxu0 0
      %1481 = vmatpush1.bf16.msra.mxu0 %v1460
      %1482 = vmatprep.subr.bf16.mxu0 0
      %1483 = vmatpush1.bf16.msra.mxu0 %v1459
      %1484 = vmatprep.subr.bf16.mxu0 0
      %1485 = vmatpush1.bf16.msra.mxu0 %v1458
      %1486 = vmatprep.subr.bf16.mxu0 0
      %1487 = vmatpush1.bf16.msra.mxu0 %v1457
      %1488 = vmatprep.subr.bf16.mxu0 0
      %1489 = vmatpush1.bf16.msra.mxu0 %v1456
      %1490 = vmatprep.subr.bf16.mxu0 0
      %1491 = vmatpush1.bf16.msra.mxu0 %v1455
      %1492 = vmatprep.subr.bf16.mxu0 0
      %1493 = vmatpush2.bf16.msra.mxu0 0
      %1494 = vmatprep.subr.bf16.mxu0 0
      %1495 = vmatpush2.bf16.msra.mxu0 0
      %1496 = vmatprep.subr.bf16.mxu0 0
      %1497 = vmatpush2.bf16.msra.mxu0 0
      %1498 = vmatprep.subr.bf16.mxu0 0
      %1499 = vmatpush2.bf16.msra.mxu0 0
      %1500 = vmatprep.subr.bf16.mxu0 0
      %1501 = vmatpush2.bf16.msra.mxu0 0
      %1502 = vmatprep.subr.bf16.mxu0 0
      %1503 = vmatpush2.bf16.msra.mxu0 0
      %1504 = vmatprep.subr.bf16.mxu0 0
      %1505 = vmatpush2.bf16.msra.mxu0 0
      %1506 = vmatprep.subr.bf16.mxu0 0
      %1507 = vmatpush2.bf16.msra.mxu0 %v1463
      %1508 = vmatprep.mubr.bf16.mxu0 %v1474
      %1509 = vmatmul.mubr.bf16.gmra.mxu0 %v1414
      %v1510 = vpop.f32.mrf.mxu0
      %v1511 = vadd.f32 0.0, %v1510
      %v1512 = vpop.f32.mrf.mxu0
      %v1513 = vpop.f32.mrf.mxu0
      %v1514 = vadd.f32 0.0, %v1513
      %v1515 = vpop.f32.mrf.mxu0
      %1516 = vdwg.mxu0
      %v1517 = vadd.f32 %v1375, %v1511
      %v1518 = vadd.f32 %v1378, %v1514
      %v1519 = vlaneseq
      %v1520 = vshrl.u32 %v1519, 7
      %v1521 = vsub.s32 0, %v1520
      %v1522 = vrot.slane %v1107, %v1521
      %v1523 = vadd.f32 %v1517, %v1522
      %v1524 = vadd.f32 %v1518, %v1522
      %v1525 = vld [vmem:[#allocation2] sm:$0xfe]
      %v1526 = vld [vmem:[#allocation2 + $0x8] sm:$0xfe]
      %v1527 = vld [vmem:[#allocation2 + $0x10] sm:$0xff]
      %v1528 = vld [vmem:[#allocation2 + $0x18] sm:$0xff]
      %v1529 = vld [vmem:[#allocation2 + $0x20] sm:$0x1]
      %v1530 = vld [vmem:[#allocation2 + $0x28] sm:$0x1]
      %vm1537 = vcmask 1046528
      %v1538 = vrot.slane %v1525, 1
      %v1539 = vrot.slane %v1527, 1
      %v1540 = vsel %vm1537, %v1538, %v1539
      %v1541 = vrot.slane %v1526, 1
      %v1542 = vrot.slane %v1528, 1
      %v1543 = vsel %vm1537, %v1541, %v1542
      %v1544 = vrot.slane %v1529, 1
      %v1545 = vsel %vm1537, %v1539, %v1544
      %v1546 = vrot.slane %v1530, 1
      %v1547 = vsel %vm1537, %v1542, %v1546
      %1548 = vrot.lane.b32.xlu0 %v1540, 120
      %v1549 = vpop.permute.xlu0 %1548
      %1550 = vrot.lane.b32.xlu0 %v1543, 120
      %v1551 = vpop.permute.xlu0 %1550
      %1552 = vrot.lane.b32.xlu0 %v1545, 120
      %v1553 = vpop.permute.xlu0 %1552
      %1554 = vrot.lane.b32.xlu0 %v1547, 120
      %v1555 = vpop.permute.xlu0 %1554
      %vm1556 = vcmask 982016
      %v1557 = vsel %vm1556, %v1549, %v1551
      %v1558 = vsel %vm1556, %v1553, %v1555
      %v1561 = vadd.f32 %v1523, %v1557
      %v1562 = vadd.f32 %v1524, %v1558
      %v1565 = vrot.slane %v1561, 7
      %v1566 = vrot.slane %v1562, 7
      %v1567 = vsel %vm641, %v1565, %v1566
      %1568 = vrot.lane.b32.xlu0 %v1565, 8
      %v1569 = vpop.permute.xlu0 %1568
      %1570 = vrot.lane.b32.xlu0 %v1567, 8
      %v1571 = vpop.permute.xlu0 %1570
      %1572 = vrot.lane.b32.xlu0 %v1566, 8
      %v1573 = vpop.permute.xlu0 %1572
      %1577 = vst.msk [vmem:[#allocation2] sm:$0xfe] %vm654, %v1569
      %1578 = vst.msk [vmem:[#allocation2 + $0x8] sm:$0xfe] %vm656, %v1569
      %1579 = vst.msk [vmem:[#allocation2 + $0x10] sm:$0xff] %vm658, %v1571
      %1580 = vst.msk [vmem:[#allocation2 + $0x18] sm:$0xff] %vm660, %v1571
      %1581 = vst.msk [vmem:[#allocation2 + $0x20] sm:$0x1] %vm662, %v1573
      %1582 = vst.msk [vmem:[#allocation2 + $0x28] sm:$0x1] %vm664, %v1573
      %v1583 = vld [vmem:[%s4 + $0x2] sm:$0x1]
      %v1584 = vld [vmem:[#allocation2] sm:$0xff]
      %v1585 = vld [vmem:[#allocation2 + $0x8] sm:$0xff]
      %v1586 = vld [vmem:[#allocation2 + $0x10] sm:$0xff]
      %v1587 = vld [vmem:[#allocation2 + $0x18] sm:$0xff]
      %v1588 = vpack.c.bf16 %v1586, %v1584
      %v1589 = vpack.c.bf16 %v1587, %v1585
      %s1590 = scalar_lea.vmem %s3, 432
      %v1591 = vld [vmem:[%s1590] sm:$0xf]
      %v1592 = vld [vmem:[%s1590 + $0x4] sm:$0xf]
      %v1593 = vld [vmem:[%s1590 + $0x8] sm:$0xf]
      %v1594 = vld [vmem:[%s1590 + $0xc] sm:$0xf]
      %v1595 = vld [vmem:[%s1590 + $0x10] sm:$0xf]
      %v1596 = vld [vmem:[%s1590 + $0x14] sm:$0xf]
      %v1597 = vld [vmem:[%s1590 + $0x18] sm:$0xf]
      %v1598 = vld [vmem:[%s1590 + $0x1c] sm:$0xf]
      %v1599 = vld [vmem:[%s1590 + $0x20] sm:$0xf]
      %v1600 = vld [vmem:[%s1590 + $0x24] sm:$0xf]
      %v1601 = vld [vmem:[%s1590 + $0x28] sm:$0xf]
      %v1602 = vld [vmem:[%s1590 + $0x2c] sm:$0xf]
      %v1603 = vld [vmem:[%s1590 + $0x30] sm:$0xf]
      %v1604 = vld [vmem:[%s1590 + $0x34] sm:$0xf]
      %v1605 = vld [vmem:[%s1590 + $0x38] sm:$0xf]
      %v1606 = vld [vmem:[%s1590 + $0x3c] sm:$0xf]
      %v1607 = vld [vmem:[%s1590 + $0x40] sm:$0xf]
      %v1608 = vld [vmem:[%s1590 + $0x44] sm:$0xf]
      %v1609 = vld [vmem:[#allocation2] sm:$0xfe]
      %v1610 = vld [vmem:[#allocation2 + $0x8] sm:$0xfe]
      %v1611 = vld [vmem:[#allocation2 + $0x20] sm:$0x1]
      %v1612 = vld [vmem:[#allocation2 + $0x28] sm:$0x1]
      %v1613 = vpack.c.bf16 %v1586, %v1609
      %v1614 = vpack.c.bf16 %v1587, %v1610
      %v1615 = vpack.c.bf16 %v1611, %v1611
      %v1616 = vpack.c.bf16 %v1612, %v1612
      %s1617 = scalar_lea.vmem %s3, 504
      %v1618 = vld [vmem:[%s1617] sm:$0xf]
      %v1619 = vld [vmem:[%s1617 + $0x4] sm:$0xf]
      %v1620 = vld [vmem:[%s1617 + $0x8] sm:$0xf]
      %v1621 = vld [vmem:[%s1617 + $0xc] sm:$0xf]
      %v1622 = vld [vmem:[%s1617 + $0x10] sm:$0xf]
      %v1623 = vld [vmem:[%s1617 + $0x14] sm:$0xf]
      %v1624 = vld [vmem:[%s1617 + $0x18] sm:$0xf]
      %v1625 = vld [vmem:[%s1617 + $0x1c] sm:$0xf]
      %v1626 = vld [vmem:[%s1617 + $0x20] sm:$0xf]
      %v1627 = vld [vmem:[%s1617 + $0x24] sm:$0xf]
      %v1628 = vld [vmem:[%s1617 + $0x28] sm:$0xf]
      %v1629 = vld [vmem:[%s1617 + $0x2c] sm:$0xf]
      %v1630 = vld [vmem:[%s1617 + $0x30] sm:$0xf]
      %v1631 = vld [vmem:[%s1617 + $0x34] sm:$0xf]
      %v1632 = vld [vmem:[%s1617 + $0x38] sm:$0xf]
      %v1633 = vld [vmem:[%s1617 + $0x3c] sm:$0xf]
      %v1634 = vld [vmem:[%s1617 + $0x40] sm:$0xf]
      %v1635 = vld [vmem:[%s1617 + $0x44] sm:$0xf]
      %v1637 = vshrl.u32 %v1613, 16
      %v1639 = vshll.u32 %v1613, 16
      %v1641 = vrot.slane %v1639, 1
      %v1642 = vor.u32 %v1637, %v1641
      %v1644 = vshll.u32 %v1615, 16
      %v1646 = vrot.slane %v1644, 1
      %v1647 = vsel %vm718, %v1642, %v1646
      %v1649 = vshrl.u32 %v1614, 16
      %v1651 = vshll.u32 %v1614, 16
      %v1653 = vrot.slane %v1651, 1
      %v1654 = vor.u32 %v1649, %v1653
      %v1656 = vshll.u32 %v1616, 16
      %v1658 = vrot.slane %v1656, 1
      %v1659 = vsel %vm718, %v1654, %v1658
      %v1679 = vunpack.c.l.b16 %v1618
      %v1680 = vunpack.c.l.b16 %v1619
      %v1681 = vunpack.c.l.b16 %v1620
      %v1682 = vunpack.c.l.b16 %v1621
      %v1683 = vunpack.c.l.b16 %v1622
      %v1684 = vunpack.c.l.b16 %v1623
      %v1685 = vunpack.c.l.b16 %v1624
      %v1686 = vunpack.c.l.b16 %v1625
      %v1687 = vunpack.c.l.b16 %v1626
      %v1688 = vunpack.c.l.b16 %v1627
      %v1689 = vunpack.c.l.b16 %v1628
      %v1690 = vunpack.c.l.b16 %v1629
      %v1691 = vunpack.c.l.b16 %v1630
      %v1692 = vunpack.c.l.b16 %v1631
      %v1693 = vunpack.c.l.b16 %v1632
      %v1694 = vunpack.c.l.b16 %v1633
      %v1695 = vunpack.c.l.b16 %v1634
      %v1696 = vunpack.c.l.b16 %v1635
      %v1697 = vpack.c.b16 %v1680, %v1679
      %v1698 = vpack.c.b16 %v1682, %v1681
      %v1699 = vpack.c.b16 %v1684, %v1683
      %v1700 = vpack.c.b16 %v1686, %v1685
      %v1701 = vpack.c.b16 %v1688, %v1687
      %v1702 = vpack.c.b16 %v1690, %v1689
      %v1703 = vpack.c.b16 %v1692, %v1691
      %v1704 = vpack.c.b16 %v1694, %v1693
      %v1705 = vpack.c.b16 %v1696, %v1695
      %v1716 = vsel %vm362, %v1659, 0
      %1718 = vmatprep.subr.bf16.mxu0 0
      %1719 = vmatpush1.bf16.msra.mxu0 %v1704
      %1720 = vmatprep.subr.bf16.mxu0 0
      %1721 = vmatpush1.bf16.msra.mxu0 %v1703
      %1722 = vmatprep.subr.bf16.mxu0 0
      %1723 = vmatpush1.bf16.msra.mxu0 %v1702
      %1724 = vmatprep.subr.bf16.mxu0 0
      %1725 = vmatpush1.bf16.msra.mxu0 %v1701
      %1726 = vmatprep.subr.bf16.mxu0 0
      %1727 = vmatpush1.bf16.msra.mxu0 %v1700
      %1728 = vmatprep.subr.bf16.mxu0 0
      %1729 = vmatpush1.bf16.msra.mxu0 %v1699
      %1730 = vmatprep.subr.bf16.mxu0 0
      %1731 = vmatpush1.bf16.msra.mxu0 %v1698
      %1732 = vmatprep.subr.bf16.mxu0 0
      %1733 = vmatpush1.bf16.msra.mxu0 %v1697
      %1734 = vmatprep.subr.bf16.mxu0 0
      %1735 = vmatpush2.bf16.msra.mxu0 0
      %1736 = vmatprep.subr.bf16.mxu0 0
      %1737 = vmatpush2.bf16.msra.mxu0 0
      %1738 = vmatprep.subr.bf16.mxu0 0
      %1739 = vmatpush2.bf16.msra.mxu0 0
      %1740 = vmatprep.subr.bf16.mxu0 0
      %1741 = vmatpush2.bf16.msra.mxu0 0
      %1742 = vmatprep.subr.bf16.mxu0 0
      %1743 = vmatpush2.bf16.msra.mxu0 0
      %1744 = vmatprep.subr.bf16.mxu0 0
      %1745 = vmatpush2.bf16.msra.mxu0 0
      %1746 = vmatprep.subr.bf16.mxu0 0
      %1747 = vmatpush2.bf16.msra.mxu0 0
      %1748 = vmatprep.subr.bf16.mxu0 0
      %1749 = vmatpush2.bf16.msra.mxu0 %v1705
      %1750 = vmatprep.mubr.bf16.mxu0 %v1716
      %1751 = vmatmul.mubr.bf16.gmra.mxu0 %v1647
      %v1752 = vpop.f32.mrf.mxu0
      %v1753 = vadd.f32 0.0, %v1752
      %v1754 = vpop.f32.mrf.mxu0
      %v1755 = vpop.f32.mrf.mxu0
      %v1756 = vadd.f32 0.0, %v1755
      %v1757 = vpop.f32.mrf.mxu0
      %1758 = vdwg.mxu0
      %v1777 = vunpack.c.l.b16 %v1591
      %v1778 = vunpack.c.l.b16 %v1592
      %v1779 = vunpack.c.l.b16 %v1593
      %v1780 = vunpack.c.l.b16 %v1594
      %v1781 = vunpack.c.l.b16 %v1595
      %v1782 = vunpack.c.l.b16 %v1596
      %v1783 = vunpack.c.l.b16 %v1597
      %v1784 = vunpack.c.l.b16 %v1598
      %v1785 = vunpack.c.l.b16 %v1599
      %v1786 = vunpack.c.l.b16 %v1600
      %v1787 = vunpack.c.l.b16 %v1601
      %v1788 = vunpack.c.l.b16 %v1602
      %v1789 = vunpack.c.l.b16 %v1603
      %v1790 = vunpack.c.l.b16 %v1604
      %v1791 = vunpack.c.l.b16 %v1605
      %v1792 = vunpack.c.l.b16 %v1606
      %v1793 = vunpack.c.l.b16 %v1607
      %v1794 = vunpack.c.l.b16 %v1608
      %v1795 = vpack.c.b16 %v1778, %v1777
      %v1796 = vpack.c.b16 %v1780, %v1779
      %v1797 = vpack.c.b16 %v1782, %v1781
      %v1798 = vpack.c.b16 %v1784, %v1783
      %v1799 = vpack.c.b16 %v1786, %v1785
      %v1800 = vpack.c.b16 %v1788, %v1787
      %v1801 = vpack.c.b16 %v1790, %v1789
      %v1802 = vpack.c.b16 %v1792, %v1791
      %v1803 = vpack.c.b16 %v1794, %v1793
      %v1814 = vsel %vm362, %v1589, 0
      %1816 = vmatprep.subr.bf16.mxu0 0
      %1817 = vmatpush1.bf16.msra.mxu0 %v1802
      %1818 = vmatprep.subr.bf16.mxu0 0
      %1819 = vmatpush1.bf16.msra.mxu0 %v1801
      %1820 = vmatprep.subr.bf16.mxu0 0
      %1821 = vmatpush1.bf16.msra.mxu0 %v1800
      %1822 = vmatprep.subr.bf16.mxu0 0
      %1823 = vmatpush1.bf16.msra.mxu0 %v1799
      %1824 = vmatprep.subr.bf16.mxu0 0
      %1825 = vmatpush1.bf16.msra.mxu0 %v1798
      %1826 = vmatprep.subr.bf16.mxu0 0
      %1827 = vmatpush1.bf16.msra.mxu0 %v1797
      %1828 = vmatprep.subr.bf16.mxu0 0
      %1829 = vmatpush1.bf16.msra.mxu0 %v1796
      %1830 = vmatprep.subr.bf16.mxu0 0
      %1831 = vmatpush1.bf16.msra.mxu0 %v1795
      %1832 = vmatprep.subr.bf16.mxu0 0
      %1833 = vmatpush2.bf16.msra.mxu0 0
      %1834 = vmatprep.subr.bf16.mxu0 0
      %1835 = vmatpush2.bf16.msra.mxu0 0
      %1836 = vmatprep.subr.bf16.mxu0 0
      %1837 = vmatpush2.bf16.msra.mxu0 0
      %1838 = vmatprep.subr.bf16.mxu0 0
      %1839 = vmatpush2.bf16.msra.mxu0 0
      %1840 = vmatprep.subr.bf16.mxu0 0
      %1841 = vmatpush2.bf16.msra.mxu0 0
      %1842 = vmatprep.subr.bf16.mxu0 0
      %1843 = vmatpush2.bf16.msra.mxu0 0
      %1844 = vmatprep.subr.bf16.mxu0 0
      %1845 = vmatpush2.bf16.msra.mxu0 0
      %1846 = vmatprep.subr.bf16.mxu0 0
      %1847 = vmatpush2.bf16.msra.mxu0 %v1803
      %1848 = vmatprep.mubr.bf16.mxu0 %v1814
      %1849 = vmatmul.mubr.bf16.gmra.mxu0 %v1588
      %v1850 = vpop.f32.mrf.mxu0
      %v1851 = vadd.f32 %v1753, %v1850
      %v1852 = vpop.f32.mrf.mxu0
      %v1853 = vpop.f32.mrf.mxu0
      %v1854 = vadd.f32 %v1756, %v1853
      %v1855 = vpop.f32.mrf.mxu0
      %1856 = vdwg.mxu0
      %v1857 = vld [vmem:[#allocation2] sm:$0xfc]
      %v1858 = vld [vmem:[#allocation2 + $0x8] sm:$0xfc]
      %v1859 = vld [vmem:[#allocation2 + $0x20] sm:$0x3]
      %v1860 = vld [vmem:[#allocation2 + $0x28] sm:$0x3]
      %v1861 = vpack.c.bf16 %v1586, %v1857
      %v1862 = vpack.c.bf16 %v1587, %v1858
      %v1863 = vpack.c.bf16 %v1859, %v1859
      %v1864 = vpack.c.bf16 %v1860, %v1860
      %s1865 = scalar_lea.vmem %s3, 576
      %v1866 = vld [vmem:[%s1865] sm:$0xf]
      %v1867 = vld [vmem:[%s1865 + $0x4] sm:$0xf]
      %v1868 = vld [vmem:[%s1865 + $0x8] sm:$0xf]
      %v1869 = vld [vmem:[%s1865 + $0xc] sm:$0xf]
      %v1870 = vld [vmem:[%s1865 + $0x10] sm:$0xf]
      %v1871 = vld [vmem:[%s1865 + $0x14] sm:$0xf]
      %v1872 = vld [vmem:[%s1865 + $0x18] sm:$0xf]
      %v1873 = vld [vmem:[%s1865 + $0x1c] sm:$0xf]
      %v1874 = vld [vmem:[%s1865 + $0x20] sm:$0xf]
      %v1875 = vld [vmem:[%s1865 + $0x24] sm:$0xf]
      %v1876 = vld [vmem:[%s1865 + $0x28] sm:$0xf]
      %v1877 = vld [vmem:[%s1865 + $0x2c] sm:$0xf]
      %v1878 = vld [vmem:[%s1865 + $0x30] sm:$0xf]
      %v1879 = vld [vmem:[%s1865 + $0x34] sm:$0xf]
      %v1880 = vld [vmem:[%s1865 + $0x38] sm:$0xf]
      %v1881 = vld [vmem:[%s1865 + $0x3c] sm:$0xf]
      %v1882 = vld [vmem:[%s1865 + $0x40] sm:$0xf]
      %v1883 = vld [vmem:[%s1865 + $0x44] sm:$0xf]
      %v1888 = vrot.slane %v1861, 1
      %v1889 = vrot.slane %v1863, 1
      %v1890 = vsel %vm971, %v1888, %v1889
      %v1891 = vrot.slane %v1862, 1
      %v1892 = vrot.slane %v1864, 1
      %v1893 = vsel %vm971, %v1891, %v1892
      %v1913 = vunpack.c.l.b16 %v1866
      %v1914 = vunpack.c.l.b16 %v1867
      %v1915 = vunpack.c.l.b16 %v1868
      %v1916 = vunpack.c.l.b16 %v1869
      %v1917 = vunpack.c.l.b16 %v1870
      %v1918 = vunpack.c.l.b16 %v1871
      %v1919 = vunpack.c.l.b16 %v1872
      %v1920 = vunpack.c.l.b16 %v1873
      %v1921 = vunpack.c.l.b16 %v1874
      %v1922 = vunpack.c.l.b16 %v1875
      %v1923 = vunpack.c.l.b16 %v1876
      %v1924 = vunpack.c.l.b16 %v1877
      %v1925 = vunpack.c.l.b16 %v1878
      %v1926 = vunpack.c.l.b16 %v1879
      %v1927 = vunpack.c.l.b16 %v1880
      %v1928 = vunpack.c.l.b16 %v1881
      %v1929 = vunpack.c.l.b16 %v1882
      %v1930 = vunpack.c.l.b16 %v1883
      %v1931 = vpack.c.b16 %v1914, %v1913
      %v1932 = vpack.c.b16 %v1916, %v1915
      %v1933 = vpack.c.b16 %v1918, %v1917
      %v1934 = vpack.c.b16 %v1920, %v1919
      %v1935 = vpack.c.b16 %v1922, %v1921
      %v1936 = vpack.c.b16 %v1924, %v1923
      %v1937 = vpack.c.b16 %v1926, %v1925
      %v1938 = vpack.c.b16 %v1928, %v1927
      %v1939 = vpack.c.b16 %v1930, %v1929
      %v1950 = vsel %vm362, %v1893, 0
      %1952 = vmatprep.subr.bf16.mxu0 0
      %1953 = vmatpush1.bf16.msra.mxu0 %v1938
      %1954 = vmatprep.subr.bf16.mxu0 0
      %1955 = vmatpush1.bf16.msra.mxu0 %v1937
      %1956 = vmatprep.subr.bf16.mxu0 0
      %1957 = vmatpush1.bf16.msra.mxu0 %v1936
      %1958 = vmatprep.subr.bf16.mxu0 0
      %1959 = vmatpush1.bf16.msra.mxu0 %v1935
      %1960 = vmatprep.subr.bf16.mxu0 0
      %1961 = vmatpush1.bf16.msra.mxu0 %v1934
      %1962 = vmatprep.subr.bf16.mxu0 0
      %1963 = vmatpush1.bf16.msra.mxu0 %v1933
      %1964 = vmatprep.subr.bf16.mxu0 0
      %1965 = vmatpush1.bf16.msra.mxu0 %v1932
      %1966 = vmatprep.subr.bf16.mxu0 0
      %1967 = vmatpush1.bf16.msra.mxu0 %v1931
      %1968 = vmatprep.subr.bf16.mxu0 0
      %1969 = vmatpush2.bf16.msra.mxu0 0
      %1970 = vmatprep.subr.bf16.mxu0 0
      %1971 = vmatpush2.bf16.msra.mxu0 0
      %1972 = vmatprep.subr.bf16.mxu0 0
      %1973 = vmatpush2.bf16.msra.mxu0 0
      %1974 = vmatprep.subr.bf16.mxu0 0
      %1975 = vmatpush2.bf16.msra.mxu0 0
      %1976 = vmatprep.subr.bf16.mxu0 0
      %1977 = vmatpush2.bf16.msra.mxu0 0
      %1978 = vmatprep.subr.bf16.mxu0 0
      %1979 = vmatpush2.bf16.msra.mxu0 0
      %1980 = vmatprep.subr.bf16.mxu0 0
      %1981 = vmatpush2.bf16.msra.mxu0 0
      %1982 = vmatprep.subr.bf16.mxu0 0
      %1983 = vmatpush2.bf16.msra.mxu0 %v1939
      %1984 = vmatprep.mubr.bf16.mxu0 %v1950
      %1985 = vmatmul.mubr.bf16.gmra.mxu0 %v1890
      %v1986 = vpop.f32.mrf.mxu0
      %v1987 = vadd.f32 0.0, %v1986
      %v1988 = vpop.f32.mrf.mxu0
      %v1989 = vpop.f32.mrf.mxu0
      %v1990 = vadd.f32 0.0, %v1989
      %v1991 = vpop.f32.mrf.mxu0
      %1992 = vdwg.mxu0
      %v1993 = vadd.f32 %v1851, %v1987
      %v1994 = vadd.f32 %v1854, %v1990
      %v1995 = vlaneseq
      %v1996 = vshrl.u32 %v1995, 7
      %v1997 = vsub.s32 0, %v1996
      %v1998 = vrot.slane %v1583, %v1997
      %v1999 = vadd.f32 %v1993, %v1998
      %v2000 = vadd.f32 %v1994, %v1998
      %v2001 = vmax.f32 %v1999, 0.0
      %v2002 = vmax.f32 %v2000, 0.0
      %v2005 = vrot.slane %v2001, 7
      %v2006 = vrot.slane %v2002, 7
      %v2007 = vsel %vm641, %v2005, %v2006
      %2008 = vrot.lane.b32.xlu0 %v2005, 8
      %v2009 = vpop.permute.xlu0 %2008
      %2010 = vrot.lane.b32.xlu0 %v2007, 8
      %v2011 = vpop.permute.xlu0 %2010
      %2012 = vrot.lane.b32.xlu0 %v2006, 8
      %v2013 = vpop.permute.xlu0 %2012
      %2017 = vst.msk [vmem:[#allocation3] sm:$0xfe] %vm654, %v2009
      %2018 = vst.msk [vmem:[#allocation3 + $0x8] sm:$0xfe] %vm656, %v2009
      %2019 = vst.msk [vmem:[#allocation3 + $0x10] sm:$0xff] %vm658, %v2011
      %2020 = vst.msk [vmem:[#allocation3 + $0x18] sm:$0xff] %vm660, %v2011
      %2021 = vst.msk [vmem:[#allocation3 + $0x20] sm:$0x1] %vm662, %v2013
      %2022 = vst.msk [vmem:[#allocation3 + $0x28] sm:$0x1] %vm664, %v2013
      %v2023 = vld [vmem:[%s4 + $0x3] sm:$0x1]
      %v2024 = vld [vmem:[#allocation3] sm:$0xff]
      %v2025 = vld [vmem:[#allocation3 + $0x8] sm:$0xff]
      %v2026 = vld [vmem:[#allocation3 + $0x10] sm:$0xff]
      %v2027 = vld [vmem:[#allocation3 + $0x18] sm:$0xff]
      %v2028 = vpack.c.bf16 %v2026, %v2024
      %v2029 = vpack.c.bf16 %v2027, %v2025
      %s2030 = scalar_lea.vmem %s3, 648
      %v2031 = vld [vmem:[%s2030] sm:$0xf]
      %v2032 = vld [vmem:[%s2030 + $0x4] sm:$0xf]
      %v2033 = vld [vmem:[%s2030 + $0x8] sm:$0xf]
      %v2034 = vld [vmem:[%s2030 + $0xc] sm:$0xf]
      %v2035 = vld [vmem:[%s2030 + $0x10] sm:$0xf]
      %v2036 = vld [vmem:[%s2030 + $0x14] sm:$0xf]
      %v2037 = vld [vmem:[%s2030 + $0x18] sm:$0xf]
      %v2038 = vld [vmem:[%s2030 + $0x1c] sm:$0xf]
      %v2039 = vld [vmem:[%s2030 + $0x20] sm:$0xf]
      %v2040 = vld [vmem:[%s2030 + $0x24] sm:$0xf]
      %v2041 = vld [vmem:[%s2030 + $0x28] sm:$0xf]
      %v2042 = vld [vmem:[%s2030 + $0x2c] sm:$0xf]
      %v2043 = vld [vmem:[%s2030 + $0x30] sm:$0xf]
      %v2044 = vld [vmem:[%s2030 + $0x34] sm:$0xf]
      %v2045 = vld [vmem:[%s2030 + $0x38] sm:$0xf]
      %v2046 = vld [vmem:[%s2030 + $0x3c] sm:$0xf]
      %v2047 = vld [vmem:[%s2030 + $0x40] sm:$0xf]
      %v2048 = vld [vmem:[%s2030 + $0x44] sm:$0xf]
      %v2049 = vld [vmem:[#allocation3] sm:$0xfe]
      %v2050 = vld [vmem:[#allocation3 + $0x8] sm:$0xfe]
      %v2051 = vld [vmem:[#allocation3 + $0x20] sm:$0x1]
      %v2052 = vld [vmem:[#allocation3 + $0x28] sm:$0x1]
      %v2053 = vpack.c.bf16 %v2026, %v2049
      %v2054 = vpack.c.bf16 %v2027, %v2050
      %v2055 = vpack.c.bf16 %v2051, %v2051
      %v2056 = vpack.c.bf16 %v2052, %v2052
      %s2057 = scalar_lea.vmem %s3, 720
      %v2058 = vld [vmem:[%s2057] sm:$0xf]
      %v2059 = vld [vmem:[%s2057 + $0x4] sm:$0xf]
      %v2060 = vld [vmem:[%s2057 + $0x8] sm:$0xf]
      %v2061 = vld [vmem:[%s2057 + $0xc] sm:$0xf]
      %v2062 = vld [vmem:[%s2057 + $0x10] sm:$0xf]
      %v2063 = vld [vmem:[%s2057 + $0x14] sm:$0xf]
      %v2064 = vld [vmem:[%s2057 + $0x18] sm:$0xf]
      %v2065 = vld [vmem:[%s2057 + $0x1c] sm:$0xf]
      %v2066 = vld [vmem:[%s2057 + $0x20] sm:$0xf]
      %v2067 = vld [vmem:[%s2057 + $0x24] sm:$0xf]
      %v2068 = vld [vmem:[%s2057 + $0x28] sm:$0xf]
      %v2069 = vld [vmem:[%s2057 + $0x2c] sm:$0xf]
      %v2070 = vld [vmem:[%s2057 + $0x30] sm:$0xf]
      %v2071 = vld [vmem:[%s2057 + $0x34] sm:$0xf]
      %v2072 = vld [vmem:[%s2057 + $0x38] sm:$0xf]
      %v2073 = vld [vmem:[%s2057 + $0x3c] sm:$0xf]
      %v2074 = vld [vmem:[%s2057 + $0x40] sm:$0xf]
      %v2075 = vld [vmem:[%s2057 + $0x44] sm:$0xf]
      %v2077 = vshrl.u32 %v2053, 16
      %v2079 = vshll.u32 %v2053, 16
      %v2081 = vrot.slane %v2079, 1
      %v2082 = vor.u32 %v2077, %v2081
      %v2084 = vshll.u32 %v2055, 16
      %v2086 = vrot.slane %v2084, 1
      %v2087 = vsel %vm718, %v2082, %v2086
      %v2089 = vshrl.u32 %v2054, 16
      %v2091 = vshll.u32 %v2054, 16
      %v2093 = vrot.slane %v2091, 1
      %v2094 = vor.u32 %v2089, %v2093
      %v2096 = vshll.u32 %v2056, 16
      %v2098 = vrot.slane %v2096, 1
      %v2099 = vsel %vm718, %v2094, %v2098
      %v2119 = vunpack.c.l.b16 %v2058
      %v2120 = vunpack.c.l.b16 %v2059
      %v2121 = vunpack.c.l.b16 %v2060
      %v2122 = vunpack.c.l.b16 %v2061
      %v2123 = vunpack.c.l.b16 %v2062
      %v2124 = vunpack.c.l.b16 %v2063
      %v2125 = vunpack.c.l.b16 %v2064
      %v2126 = vunpack.c.l.b16 %v2065
      %v2127 = vunpack.c.l.b16 %v2066
      %v2128 = vunpack.c.l.b16 %v2067
      %v2129 = vunpack.c.l.b16 %v2068
      %v2130 = vunpack.c.l.b16 %v2069
      %v2131 = vunpack.c.l.b16 %v2070
      %v2132 = vunpack.c.l.b16 %v2071
      %v2133 = vunpack.c.l.b16 %v2072
      %v2134 = vunpack.c.l.b16 %v2073
      %v2135 = vunpack.c.l.b16 %v2074
      %v2136 = vunpack.c.l.b16 %v2075
      %v2137 = vpack.c.b16 %v2120, %v2119
      %v2138 = vpack.c.b16 %v2122, %v2121
      %v2139 = vpack.c.b16 %v2124, %v2123
      %v2140 = vpack.c.b16 %v2126, %v2125
      %v2141 = vpack.c.b16 %v2128, %v2127
      %v2142 = vpack.c.b16 %v2130, %v2129
      %v2143 = vpack.c.b16 %v2132, %v2131
      %v2144 = vpack.c.b16 %v2134, %v2133
      %v2145 = vpack.c.b16 %v2136, %v2135
      %v2156 = vsel %vm362, %v2099, 0
      %2158 = vmatprep.subr.bf16.mxu0 0
      %2159 = vmatpush1.bf16.msra.mxu0 %v2144
      %2160 = vmatprep.subr.bf16.mxu0 0
      %2161 = vmatpush1.bf16.msra.mxu0 %v2143
      %2162 = vmatprep.subr.bf16.mxu0 0
      %2163 = vmatpush1.bf16.msra.mxu0 %v2142
      %2164 = vmatprep.subr.bf16.mxu0 0
      %2165 = vmatpush1.bf16.msra.mxu0 %v2141
      %2166 = vmatprep.subr.bf16.mxu0 0
      %2167 = vmatpush1.bf16.msra.mxu0 %v2140
      %2168 = vmatprep.subr.bf16.mxu0 0
      %2169 = vmatpush1.bf16.msra.mxu0 %v2139
      %2170 = vmatprep.subr.bf16.mxu0 0
      %2171 = vmatpush1.bf16.msra.mxu0 %v2138
      %2172 = vmatprep.subr.bf16.mxu0 0
      %2173 = vmatpush1.bf16.msra.mxu0 %v2137
      %2174 = vmatprep.subr.bf16.mxu0 0
      %2175 = vmatpush2.bf16.msra.mxu0 0
      %2176 = vmatprep.subr.bf16.mxu0 0
      %2177 = vmatpush2.bf16.msra.mxu0 0
      %2178 = vmatprep.subr.bf16.mxu0 0
      %2179 = vmatpush2.bf16.msra.mxu0 0
      %2180 = vmatprep.subr.bf16.mxu0 0
      %2181 = vmatpush2.bf16.msra.mxu0 0
      %2182 = vmatprep.subr.bf16.mxu0 0
      %2183 = vmatpush2.bf16.msra.mxu0 0
      %2184 = vmatprep.subr.bf16.mxu0 0
      %2185 = vmatpush2.bf16.msra.mxu0 0
      %2186 = vmatprep.subr.bf16.mxu0 0
      %2187 = vmatpush2.bf16.msra.mxu0 0
      %2188 = vmatprep.subr.bf16.mxu0 0
      %2189 = vmatpush2.bf16.msra.mxu0 %v2145
      %2190 = vmatprep.mubr.bf16.mxu0 %v2156
      %2191 = vmatmul.mubr.bf16.gmra.mxu0 %v2087
      %v2192 = vpop.f32.mrf.mxu0
      %v2193 = vadd.f32 0.0, %v2192
      %v2194 = vpop.f32.mrf.mxu0
      %v2195 = vpop.f32.mrf.mxu0
      %v2196 = vadd.f32 0.0, %v2195
      %v2197 = vpop.f32.mrf.mxu0
      %2198 = vdwg.mxu0
      %v2217 = vunpack.c.l.b16 %v2031
      %v2218 = vunpack.c.l.b16 %v2032
      %v2219 = vunpack.c.l.b16 %v2033
      %v2220 = vunpack.c.l.b16 %v2034
      %v2221 = vunpack.c.l.b16 %v2035
      %v2222 = vunpack.c.l.b16 %v2036
      %v2223 = vunpack.c.l.b16 %v2037
      %v2224 = vunpack.c.l.b16 %v2038
      %v2225 = vunpack.c.l.b16 %v2039
      %v2226 = vunpack.c.l.b16 %v2040
      %v2227 = vunpack.c.l.b16 %v2041
      %v2228 = vunpack.c.l.b16 %v2042
      %v2229 = vunpack.c.l.b16 %v2043
      %v2230 = vunpack.c.l.b16 %v2044
      %v2231 = vunpack.c.l.b16 %v2045
      %v2232 = vunpack.c.l.b16 %v2046
      %v2233 = vunpack.c.l.b16 %v2047
      %v2234 = vunpack.c.l.b16 %v2048
      %v2235 = vpack.c.b16 %v2218, %v2217
      %v2236 = vpack.c.b16 %v2220, %v2219
      %v2237 = vpack.c.b16 %v2222, %v2221
      %v2238 = vpack.c.b16 %v2224, %v2223
      %v2239 = vpack.c.b16 %v2226, %v2225
      %v2240 = vpack.c.b16 %v2228, %v2227
      %v2241 = vpack.c.b16 %v2230, %v2229
      %v2242 = vpack.c.b16 %v2232, %v2231
      %v2243 = vpack.c.b16 %v2234, %v2233
      %v2254 = vsel %vm362, %v2029, 0
      %2256 = vmatprep.subr.bf16.mxu0 0
      %2257 = vmatpush1.bf16.msra.mxu0 %v2242
      %2258 = vmatprep.subr.bf16.mxu0 0
      %2259 = vmatpush1.bf16.msra.mxu0 %v2241
      %2260 = vmatprep.subr.bf16.mxu0 0
      %2261 = vmatpush1.bf16.msra.mxu0 %v2240
      %2262 = vmatprep.subr.bf16.mxu0 0
      %2263 = vmatpush1.bf16.msra.mxu0 %v2239
      %2264 = vmatprep.subr.bf16.mxu0 0
      %2265 = vmatpush1.bf16.msra.mxu0 %v2238
      %2266 = vmatprep.subr.bf16.mxu0 0
      %2267 = vmatpush1.bf16.msra.mxu0 %v2237
      %2268 = vmatprep.subr.bf16.mxu0 0
      %2269 = vmatpush1.bf16.msra.mxu0 %v2236
      %2270 = vmatprep.subr.bf16.mxu0 0
      %2271 = vmatpush1.bf16.msra.mxu0 %v2235
      %2272 = vmatprep.subr.bf16.mxu0 0
      %2273 = vmatpush2.bf16.msra.mxu0 0
      %2274 = vmatprep.subr.bf16.mxu0 0
      %2275 = vmatpush2.bf16.msra.mxu0 0
      %2276 = vmatprep.subr.bf16.mxu0 0
      %2277 = vmatpush2.bf16.msra.mxu0 0
      %2278 = vmatprep.subr.bf16.mxu0 0
      %2279 = vmatpush2.bf16.msra.mxu0 0
      %2280 = vmatprep.subr.bf16.mxu0 0
      %2281 = vmatpush2.bf16.msra.mxu0 0
      %2282 = vmatprep.subr.bf16.mxu0 0
      %2283 = vmatpush2.bf16.msra.mxu0 0
      %2284 = vmatprep.subr.bf16.mxu0 0
      %2285 = vmatpush2.bf16.msra.mxu0 0
      %2286 = vmatprep.subr.bf16.mxu0 0
      %2287 = vmatpush2.bf16.msra.mxu0 %v2243
      %2288 = vmatprep.mubr.bf16.mxu0 %v2254
      %2289 = vmatmul.mubr.bf16.gmra.mxu0 %v2028
      %v2290 = vpop.f32.mrf.mxu0
      %v2291 = vadd.f32 %v2193, %v2290
      %v2292 = vpop.f32.mrf.mxu0
      %v2293 = vpop.f32.mrf.mxu0
      %v2294 = vadd.f32 %v2196, %v2293
      %v2295 = vpop.f32.mrf.mxu0
      %2296 = vdwg.mxu0
      %v2297 = vld [vmem:[#allocation3] sm:$0xfc]
      %v2298 = vld [vmem:[#allocation3 + $0x8] sm:$0xfc]
      %v2299 = vld [vmem:[#allocation3 + $0x20] sm:$0x3]
      %v2300 = vld [vmem:[#allocation3 + $0x28] sm:$0x3]
      %v2301 = vpack.c.bf16 %v2026, %v2297
      %v2302 = vpack.c.bf16 %v2027, %v2298
      %v2303 = vpack.c.bf16 %v2299, %v2299
      %v2304 = vpack.c.bf16 %v2300, %v2300
      %s2305 = scalar_lea.vmem %s3, 792
      %v2306 = vld [vmem:[%s2305] sm:$0xf]
      %v2307 = vld [vmem:[%s2305 + $0x4] sm:$0xf]
      %v2308 = vld [vmem:[%s2305 + $0x8] sm:$0xf]
      %v2309 = vld [vmem:[%s2305 + $0xc] sm:$0xf]
      %v2310 = vld [vmem:[%s2305 + $0x10] sm:$0xf]
      %v2311 = vld [vmem:[%s2305 + $0x14] sm:$0xf]
      %v2312 = vld [vmem:[%s2305 + $0x18] sm:$0xf]
      %v2313 = vld [vmem:[%s2305 + $0x1c] sm:$0xf]
      %v2314 = vld [vmem:[%s2305 + $0x20] sm:$0xf]
      %v2315 = vld [vmem:[%s2305 + $0x24] sm:$0xf]
      %v2316 = vld [vmem:[%s2305 + $0x28] sm:$0xf]
      %v2317 = vld [vmem:[%s2305 + $0x2c] sm:$0xf]
      %v2318 = vld [vmem:[%s2305 + $0x30] sm:$0xf]
      %v2319 = vld [vmem:[%s2305 + $0x34] sm:$0xf]
      %v2320 = vld [vmem:[%s2305 + $0x38] sm:$0xf]
      %v2321 = vld [vmem:[%s2305 + $0x3c] sm:$0xf]
      %v2322 = vld [vmem:[%s2305 + $0x40] sm:$0xf]
      %v2323 = vld [vmem:[%s2305 + $0x44] sm:$0xf]
      %v2328 = vrot.slane %v2301, 1
      %v2329 = vrot.slane %v2303, 1
      %v2330 = vsel %vm971, %v2328, %v2329
      %v2331 = vrot.slane %v2302, 1
      %v2332 = vrot.slane %v2304, 1
      %v2333 = vsel %vm971, %v2331, %v2332
      %v2353 = vunpack.c.l.b16 %v2306
      %v2354 = vunpack.c.l.b16 %v2307
      %v2355 = vunpack.c.l.b16 %v2308
      %v2356 = vunpack.c.l.b16 %v2309
      %v2357 = vunpack.c.l.b16 %v2310
      %v2358 = vunpack.c.l.b16 %v2311
      %v2359 = vunpack.c.l.b16 %v2312
      %v2360 = vunpack.c.l.b16 %v2313
      %v2361 = vunpack.c.l.b16 %v2314
      %v2362 = vunpack.c.l.b16 %v2315
      %v2363 = vunpack.c.l.b16 %v2316
      %v2364 = vunpack.c.l.b16 %v2317
      %v2365 = vunpack.c.l.b16 %v2318
      %v2366 = vunpack.c.l.b16 %v2319
      %v2367 = vunpack.c.l.b16 %v2320
      %v2368 = vunpack.c.l.b16 %v2321
      %v2369 = vunpack.c.l.b16 %v2322
      %v2370 = vunpack.c.l.b16 %v2323
      %v2371 = vpack.c.b16 %v2354, %v2353
      %v2372 = vpack.c.b16 %v2356, %v2355
      %v2373 = vpack.c.b16 %v2358, %v2357
      %v2374 = vpack.c.b16 %v2360, %v2359
      %v2375 = vpack.c.b16 %v2362, %v2361
      %v2376 = vpack.c.b16 %v2364, %v2363
      %v2377 = vpack.c.b16 %v2366, %v2365
      %v2378 = vpack.c.b16 %v2368, %v2367
      %v2379 = vpack.c.b16 %v2370, %v2369
      %v2390 = vsel %vm362, %v2333, 0
      %2392 = vmatprep.subr.bf16.mxu0 0
      %2393 = vmatpush1.bf16.msra.mxu0 %v2378
      %2394 = vmatprep.subr.bf16.mxu0 0
      %2395 = vmatpush1.bf16.msra.mxu0 %v2377
      %2396 = vmatprep.subr.bf16.mxu0 0
      %2397 = vmatpush1.bf16.msra.mxu0 %v2376
      %2398 = vmatprep.subr.bf16.mxu0 0
      %2399 = vmatpush1.bf16.msra.mxu0 %v2375
      %2400 = vmatprep.subr.bf16.mxu0 0
      %2401 = vmatpush1.bf16.msra.mxu0 %v2374
      %2402 = vmatprep.subr.bf16.mxu0 0
      %2403 = vmatpush1.bf16.msra.mxu0 %v2373
      %2404 = vmatprep.subr.bf16.mxu0 0
      %2405 = vmatpush1.bf16.msra.mxu0 %v2372
      %2406 = vmatprep.subr.bf16.mxu0 0
      %2407 = vmatpush1.bf16.msra.mxu0 %v2371
      %2408 = vmatprep.subr.bf16.mxu0 0
      %2409 = vmatpush2.bf16.msra.mxu0 0
      %2410 = vmatprep.subr.bf16.mxu0 0
      %2411 = vmatpush2.bf16.msra.mxu0 0
      %2412 = vmatprep.subr.bf16.mxu0 0
      %2413 = vmatpush2.bf16.msra.mxu0 0
      %2414 = vmatprep.subr.bf16.mxu0 0
      %2415 = vmatpush2.bf16.msra.mxu0 0
      %2416 = vmatprep.subr.bf16.mxu0 0
      %2417 = vmatpush2.bf16.msra.mxu0 0
      %2418 = vmatprep.subr.bf16.mxu0 0
      %2419 = vmatpush2.bf16.msra.mxu0 0
      %2420 = vmatprep.subr.bf16.mxu0 0
      %2421 = vmatpush2.bf16.msra.mxu0 0
      %2422 = vmatprep.subr.bf16.mxu0 0
      %2423 = vmatpush2.bf16.msra.mxu0 %v2379
      %2424 = vmatprep.mubr.bf16.mxu0 %v2390
      %2425 = vmatmul.mubr.bf16.gmra.mxu0 %v2330
      %v2426 = vpop.f32.mrf.mxu0
      %v2427 = vadd.f32 0.0, %v2426
      %v2428 = vpop.f32.mrf.mxu0
      %v2429 = vpop.f32.mrf.mxu0
      %v2430 = vadd.f32 0.0, %v2429
      %v2431 = vpop.f32.mrf.mxu0
      %2432 = vdwg.mxu0
      %v2433 = vadd.f32 %v2291, %v2427
      %v2434 = vadd.f32 %v2294, %v2430
      %v2435 = vlaneseq
      %v2436 = vshrl.u32 %v2435, 7
      %v2437 = vsub.s32 0, %v2436
      %v2438 = vrot.slane %v2023, %v2437
      %v2439 = vadd.f32 %v2433, %v2438
      %v2440 = vadd.f32 %v2434, %v2438
      %v2441 = vld [vmem:[#allocation2] sm:$0xfe]
      %v2442 = vld [vmem:[#allocation2 + $0x8] sm:$0xfe]
      %v2443 = vld [vmem:[#allocation2 + $0x10] sm:$0xff]
      %v2444 = vld [vmem:[#allocation2 + $0x18] sm:$0xff]
      %v2445 = vld [vmem:[#allocation2 + $0x20] sm:$0x1]
      %v2446 = vld [vmem:[#allocation2 + $0x28] sm:$0x1]
      %v2453 = vrot.slane %v2441, 1
      %v2454 = vrot.slane %v2443, 1
      %v2455 = vsel %vm1537, %v2453, %v2454
      %v2456 = vrot.slane %v2442, 1
      %v2457 = vrot.slane %v2444, 1
      %v2458 = vsel %vm1537, %v2456, %v2457
      %v2459 = vrot.slane %v2445, 1
      %v2460 = vsel %vm1537, %v2454, %v2459
      %v2461 = vrot.slane %v2446, 1
      %v2462 = vsel %vm1537, %v2457, %v2461
      %2463 = vrot.lane.b32.xlu0 %v2455, 120
      %v2464 = vpop.permute.xlu0 %2463
      %2465 = vrot.lane.b32.xlu0 %v2458, 120
      %v2466 = vpop.permute.xlu0 %2465
      %2467 = vrot.lane.b32.xlu0 %v2460, 120
      %v2468 = vpop.permute.xlu0 %2467
      %2469 = vrot.lane.b32.xlu0 %v2462, 120
      %v2470 = vpop.permute.xlu0 %2469
      %v2471 = vsel %vm1556, %v2464, %v2466
      %v2472 = vsel %vm1556, %v2468, %v2470
      %v2475 = vadd.f32 %v2439, %v2471
      %v2476 = vadd.f32 %v2440, %v2472
      %v2479 = vrot.slane %v2475, 7
      %v2480 = vrot.slane %v2476, 7
      %v2481 = vsel %vm641, %v2479, %v2480
      %2482 = vrot.lane.b32.xlu0 %v2479, 8
      %v2483 = vpop.permute.xlu0 %2482
      %2484 = vrot.lane.b32.xlu0 %v2481, 8
      %v2485 = vpop.permute.xlu0 %2484
      %2486 = vrot.lane.b32.xlu0 %v2480, 8
      %v2487 = vpop.permute.xlu0 %2486
      %2491 = vst.msk [vmem:[#allocation2] sm:$0xfe] %vm654, %v2483
      %2492 = vst.msk [vmem:[#allocation2 + $0x8] sm:$0xfe] %vm656, %v2483
      %2493 = vst.msk [vmem:[#allocation2 + $0x10] sm:$0xff] %vm658, %v2485
      %2494 = vst.msk [vmem:[#allocation2 + $0x18] sm:$0xff] %vm660, %v2485
      %2495 = vst.msk [vmem:[#allocation2 + $0x20] sm:$0x1] %vm662, %v2487
      %2496 = vst.msk [vmem:[#allocation2 + $0x28] sm:$0x1] %vm664, %v2487
      %v2497 = vld [vmem:[%s4 + $0x4] sm:$0x1]
      %v2498 = vld [vmem:[#allocation2] sm:$0xff]
      %v2499 = vld [vmem:[#allocation2 + $0x8] sm:$0xff]
      %v2500 = vld [vmem:[#allocation2 + $0x10] sm:$0xff]
      %v2501 = vld [vmem:[#allocation2 + $0x18] sm:$0xff]
      %v2502 = vpack.c.bf16 %v2500, %v2498
      %v2503 = vpack.c.bf16 %v2501, %v2499
      %s2504 = scalar_lea.vmem %s3, 864
      %v2505 = vld [vmem:[%s2504] sm:$0xf]
      %v2506 = vld [vmem:[%s2504 + $0x4] sm:$0xf]
      %v2507 = vld [vmem:[%s2504 + $0x8] sm:$0xf]
      %v2508 = vld [vmem:[%s2504 + $0xc] sm:$0xf]
      %v2509 = vld [vmem:[%s2504 + $0x10] sm:$0xf]
      %v2510 = vld [vmem:[%s2504 + $0x14] sm:$0xf]
      %v2511 = vld [vmem:[%s2504 + $0x18] sm:$0xf]
      %v2512 = vld [vmem:[%s2504 + $0x1c] sm:$0xf]
      %v2513 = vld [vmem:[%s2504 + $0x20] sm:$0xf]
      %v2514 = vld [vmem:[%s2504 + $0x24] sm:$0xf]
      %v2515 = vld [vmem:[%s2504 + $0x28] sm:$0xf]
      %v2516 = vld [vmem:[%s2504 + $0x2c] sm:$0xf]
      %v2517 = vld [vmem:[%s2504 + $0x30] sm:$0xf]
      %v2518 = vld [vmem:[%s2504 + $0x34] sm:$0xf]
      %v2519 = vld [vmem:[%s2504 + $0x38] sm:$0xf]
      %v2520 = vld [vmem:[%s2504 + $0x3c] sm:$0xf]
      %v2521 = vld [vmem:[%s2504 + $0x40] sm:$0xf]
      %v2522 = vld [vmem:[%s2504 + $0x44] sm:$0xf]
      %v2523 = vld [vmem:[#allocation2] sm:$0xfe]
      %v2524 = vld [vmem:[#allocation2 + $0x8] sm:$0xfe]
      %v2525 = vld [vmem:[#allocation2 + $0x20] sm:$0x1]
      %v2526 = vld [vmem:[#allocation2 + $0x28] sm:$0x1]
      %v2527 = vpack.c.bf16 %v2500, %v2523
      %v2528 = vpack.c.bf16 %v2501, %v2524
      %v2529 = vpack.c.bf16 %v2525, %v2525
      %v2530 = vpack.c.bf16 %v2526, %v2526
      %s2531 = scalar_lea.vmem %s3, 936
      %v2532 = vld [vmem:[%s2531] sm:$0xf]
      %v2533 = vld [vmem:[%s2531 + $0x4] sm:$0xf]
      %v2534 = vld [vmem:[%s2531 + $0x8] sm:$0xf]
      %v2535 = vld [vmem:[%s2531 + $0xc] sm:$0xf]
      %v2536 = vld [vmem:[%s2531 + $0x10] sm:$0xf]
      %v2537 = vld [vmem:[%s2531 + $0x14] sm:$0xf]
      %v2538 = vld [vmem:[%s2531 + $0x18] sm:$0xf]
      %v2539 = vld [vmem:[%s2531 + $0x1c] sm:$0xf]
      %v2540 = vld [vmem:[%s2531 + $0x20] sm:$0xf]
      %v2541 = vld [vmem:[%s2531 + $0x24] sm:$0xf]
      %v2542 = vld [vmem:[%s2531 + $0x28] sm:$0xf]
      %v2543 = vld [vmem:[%s2531 + $0x2c] sm:$0xf]
      %v2544 = vld [vmem:[%s2531 + $0x30] sm:$0xf]
      %v2545 = vld [vmem:[%s2531 + $0x34] sm:$0xf]
      %v2546 = vld [vmem:[%s2531 + $0x38] sm:$0xf]
      %v2547 = vld [vmem:[%s2531 + $0x3c] sm:$0xf]
      %v2548 = vld [vmem:[%s2531 + $0x40] sm:$0xf]
      %v2549 = vld [vmem:[%s2531 + $0x44] sm:$0xf]
      %v2551 = vshrl.u32 %v2527, 16
      %v2553 = vshll.u32 %v2527, 16
      %v2555 = vrot.slane %v2553, 1
      %v2556 = vor.u32 %v2551, %v2555
      %v2558 = vshll.u32 %v2529, 16
      %v2560 = vrot.slane %v2558, 1
      %v2561 = vsel %vm718, %v2556, %v2560
      %v2563 = vshrl.u32 %v2528, 16
      %v2565 = vshll.u32 %v2528, 16
      %v2567 = vrot.slane %v2565, 1
      %v2568 = vor.u32 %v2563, %v2567
      %v2570 = vshll.u32 %v2530, 16
      %v2572 = vrot.slane %v2570, 1
      %v2573 = vsel %vm718, %v2568, %v2572
      %v2593 = vunpack.c.l.b16 %v2532
      %v2594 = vunpack.c.l.b16 %v2533
      %v2595 = vunpack.c.l.b16 %v2534
      %v2596 = vunpack.c.l.b16 %v2535
      %v2597 = vunpack.c.l.b16 %v2536
      %v2598 = vunpack.c.l.b16 %v2537
      %v2599 = vunpack.c.l.b16 %v2538
      %v2600 = vunpack.c.l.b16 %v2539
      %v2601 = vunpack.c.l.b16 %v2540
      %v2602 = vunpack.c.l.b16 %v2541
      %v2603 = vunpack.c.l.b16 %v2542
      %v2604 = vunpack.c.l.b16 %v2543
      %v2605 = vunpack.c.l.b16 %v2544
      %v2606 = vunpack.c.l.b16 %v2545
      %v2607 = vunpack.c.l.b16 %v2546
      %v2608 = vunpack.c.l.b16 %v2547
      %v2609 = vunpack.c.l.b16 %v2548
      %v2610 = vunpack.c.l.b16 %v2549
      %v2611 = vpack.c.b16 %v2594, %v2593
      %v2612 = vpack.c.b16 %v2596, %v2595
      %v2613 = vpack.c.b16 %v2598, %v2597
      %v2614 = vpack.c.b16 %v2600, %v2599
      %v2615 = vpack.c.b16 %v2602, %v2601
      %v2616 = vpack.c.b16 %v2604, %v2603
      %v2617 = vpack.c.b16 %v2606, %v2605
      %v2618 = vpack.c.b16 %v2608, %v2607
      %v2619 = vpack.c.b16 %v2610, %v2609
      %v2630 = vsel %vm362, %v2573, 0
      %2632 = vmatprep.subr.bf16.mxu0 0
      %2633 = vmatpush1.bf16.msra.mxu0 %v2618
      %2634 = vmatprep.subr.bf16.mxu0 0
      %2635 = vmatpush1.bf16.msra.mxu0 %v2617
      %2636 = vmatprep.subr.bf16.mxu0 0
      %2637 = vmatpush1.bf16.msra.mxu0 %v2616
      %2638 = vmatprep.subr.bf16.mxu0 0
      %2639 = vmatpush1.bf16.msra.mxu0 %v2615
      %2640 = vmatprep.subr.bf16.mxu0 0
      %2641 = vmatpush1.bf16.msra.mxu0 %v2614
      %2642 = vmatprep.subr.bf16.mxu0 0
      %2643 = vmatpush1.bf16.msra.mxu0 %v2613
      %2644 = vmatprep.subr.bf16.mxu0 0
      %2645 = vmatpush1.bf16.msra.mxu0 %v2612
      %2646 = vmatprep.subr.bf16.mxu0 0
      %2647 = vmatpush1.bf16.msra.mxu0 %v2611
      %2648 = vmatprep.subr.bf16.mxu0 0
      %2649 = vmatpush2.bf16.msra.mxu0 0
      %2650 = vmatprep.subr.bf16.mxu0 0
      %2651 = vmatpush2.bf16.msra.mxu0 0
      %2652 = vmatprep.subr.bf16.mxu0 0
      %2653 = vmatpush2.bf16.msra.mxu0 0
      %2654 = vmatprep.subr.bf16.mxu0 0
      %2655 = vmatpush2.bf16.msra.mxu0 0
      %2656 = vmatprep.subr.bf16.mxu0 0
      %2657 = vmatpush2.bf16.msra.mxu0 0
      %2658 = vmatprep.subr.bf16.mxu0 0
      %2659 = vmatpush2.bf16.msra.mxu0 0
      %2660 = vmatprep.subr.bf16.mxu0 0
      %2661 = vmatpush2.bf16.msra.mxu0 0
      %2662 = vmatprep.subr.bf16.mxu0 0
      %2663 = vmatpush2.bf16.msra.mxu0 %v2619
      %2664 = vmatprep.mubr.bf16.mxu0 %v2630
      %2665 = vmatmul.mubr.bf16.gmra.mxu0 %v2561
      %v2666 = vpop.f32.mrf.mxu0
      %v2667 = vadd.f32 0.0, %v2666
      %v2668 = vpop.f32.mrf.mxu0
      %v2669 = vpop.f32.mrf.mxu0
      %v2670 = vadd.f32 0.0, %v2669
      %v2671 = vpop.f32.mrf.mxu0
      %2672 = vdwg.mxu0
      %v2691 = vunpack.c.l.b16 %v2505
      %v2692 = vunpack.c.l.b16 %v2506
      %v2693 = vunpack.c.l.b16 %v2507
      %v2694 = vunpack.c.l.b16 %v2508
      %v2695 = vunpack.c.l.b16 %v2509
      %v2696 = vunpack.c.l.b16 %v2510
      %v2697 = vunpack.c.l.b16 %v2511
      %v2698 = vunpack.c.l.b16 %v2512
      %v2699 = vunpack.c.l.b16 %v2513
      %v2700 = vunpack.c.l.b16 %v2514
      %v2701 = vunpack.c.l.b16 %v2515
      %v2702 = vunpack.c.l.b16 %v2516
      %v2703 = vunpack.c.l.b16 %v2517
      %v2704 = vunpack.c.l.b16 %v2518
      %v2705 = vunpack.c.l.b16 %v2519
      %v2706 = vunpack.c.l.b16 %v2520
      %v2707 = vunpack.c.l.b16 %v2521
      %v2708 = vunpack.c.l.b16 %v2522
      %v2709 = vpack.c.b16 %v2692, %v2691
      %v2710 = vpack.c.b16 %v2694, %v2693
      %v2711 = vpack.c.b16 %v2696, %v2695
      %v2712 = vpack.c.b16 %v2698, %v2697
      %v2713 = vpack.c.b16 %v2700, %v2699
      %v2714 = vpack.c.b16 %v2702, %v2701
      %v2715 = vpack.c.b16 %v2704, %v2703
      %v2716 = vpack.c.b16 %v2706, %v2705
      %v2717 = vpack.c.b16 %v2708, %v2707
      %v2728 = vsel %vm362, %v2503, 0
      %2730 = vmatprep.subr.bf16.mxu0 0
      %2731 = vmatpush1.bf16.msra.mxu0 %v2716
      %2732 = vmatprep.subr.bf16.mxu0 0
      %2733 = vmatpush1.bf16.msra.mxu0 %v2715
      %2734 = vmatprep.subr.bf16.mxu0 0
      %2735 = vmatpush1.bf16.msra.mxu0 %v2714
      %2736 = vmatprep.subr.bf16.mxu0 0
      %2737 = vmatpush1.bf16.msra.mxu0 %v2713
      %2738 = vmatprep.subr.bf16.mxu0 0
      %2739 = vmatpush1.bf16.msra.mxu0 %v2712
      %2740 = vmatprep.subr.bf16.mxu0 0
      %2741 = vmatpush1.bf16.msra.mxu0 %v2711
      %2742 = vmatprep.subr.bf16.mxu0 0
      %2743 = vmatpush1.bf16.msra.mxu0 %v2710
      %2744 = vmatprep.subr.bf16.mxu0 0
      %2745 = vmatpush1.bf16.msra.mxu0 %v2709
      %2746 = vmatprep.subr.bf16.mxu0 0
      %2747 = vmatpush2.bf16.msra.mxu0 0
      %2748 = vmatprep.subr.bf16.mxu0 0
      %2749 = vmatpush2.bf16.msra.mxu0 0
      %2750 = vmatprep.subr.bf16.mxu0 0
      %2751 = vmatpush2.bf16.msra.mxu0 0
      %2752 = vmatprep.subr.bf16.mxu0 0
      %2753 = vmatpush2.bf16.msra.mxu0 0
      %2754 = vmatprep.subr.bf16.mxu0 0
      %2755 = vmatpush2.bf16.msra.mxu0 0
      %2756 = vmatprep.subr.bf16.mxu0 0
      %2757 = vmatpush2.bf16.msra.mxu0 0
      %2758 = vmatprep.subr.bf16.mxu0 0
      %2759 = vmatpush2.bf16.msra.mxu0 0
      %2760 = vmatprep.subr.bf16.mxu0 0
      %2761 = vmatpush2.bf16.msra.mxu0 %v2717
      %2762 = vmatprep.mubr.bf16.mxu0 %v2728
      %2763 = vmatmul.mubr.bf16.gmra.mxu0 %v2502
      %v2764 = vpop.f32.mrf.mxu0
      %v2765 = vadd.f32 %v2667, %v2764
      %v2766 = vpop.f32.mrf.mxu0
      %v2767 = vpop.f32.mrf.mxu0
      %v2768 = vadd.f32 %v2670, %v2767
      %v2769 = vpop.f32.mrf.mxu0
      %2770 = vdwg.mxu0
      %v2771 = vld [vmem:[#allocation2] sm:$0xfc]
      %v2772 = vld [vmem:[#allocation2 + $0x8] sm:$0xfc]
      %v2773 = vld [vmem:[#allocation2 + $0x20] sm:$0x3]
      %v2774 = vld [vmem:[#allocation2 + $0x28] sm:$0x3]
      %v2775 = vpack.c.bf16 %v2500, %v2771
      %v2776 = vpack.c.bf16 %v2501, %v2772
      %v2777 = vpack.c.bf16 %v2773, %v2773
      %v2778 = vpack.c.bf16 %v2774, %v2774
      %s2779 = scalar_lea.vmem %s3, 1008
      %v2780 = vld [vmem:[%s2779] sm:$0xf]
      %v2781 = vld [vmem:[%s2779 + $0x4] sm:$0xf]
      %v2782 = vld [vmem:[%s2779 + $0x8] sm:$0xf]
      %v2783 = vld [vmem:[%s2779 + $0xc] sm:$0xf]
      %v2784 = vld [vmem:[%s2779 + $0x10] sm:$0xf]
      %v2785 = vld [vmem:[%s2779 + $0x14] sm:$0xf]
      %v2786 = vld [vmem:[%s2779 + $0x18] sm:$0xf]
      %v2787 = vld [vmem:[%s2779 + $0x1c] sm:$0xf]
      %v2788 = vld [vmem:[%s2779 + $0x20] sm:$0xf]
      %v2789 = vld [vmem:[%s2779 + $0x24] sm:$0xf]
      %v2790 = vld [vmem:[%s2779 + $0x28] sm:$0xf]
      %v2791 = vld [vmem:[%s2779 + $0x2c] sm:$0xf]
      %v2792 = vld [vmem:[%s2779 + $0x30] sm:$0xf]
      %v2793 = vld [vmem:[%s2779 + $0x34] sm:$0xf]
      %v2794 = vld [vmem:[%s2779 + $0x38] sm:$0xf]
      %v2795 = vld [vmem:[%s2779 + $0x3c] sm:$0xf]
      %v2796 = vld [vmem:[%s2779 + $0x40] sm:$0xf]
      %v2797 = vld [vmem:[%s2779 + $0x44] sm:$0xf]
      %v2802 = vrot.slane %v2775, 1
      %v2803 = vrot.slane %v2777, 1
      %v2804 = vsel %vm971, %v2802, %v2803
      %v2805 = vrot.slane %v2776, 1
      %v2806 = vrot.slane %v2778, 1
      %v2807 = vsel %vm971, %v2805, %v2806
      %v2827 = vunpack.c.l.b16 %v2780
      %v2828 = vunpack.c.l.b16 %v2781
      %v2829 = vunpack.c.l.b16 %v2782
      %v2830 = vunpack.c.l.b16 %v2783
      %v2831 = vunpack.c.l.b16 %v2784
      %v2832 = vunpack.c.l.b16 %v2785
      %v2833 = vunpack.c.l.b16 %v2786
      %v2834 = vunpack.c.l.b16 %v2787
      %v2835 = vunpack.c.l.b16 %v2788
      %v2836 = vunpack.c.l.b16 %v2789
      %v2837 = vunpack.c.l.b16 %v2790
      %v2838 = vunpack.c.l.b16 %v2791
      %v2839 = vunpack.c.l.b16 %v2792
      %v2840 = vunpack.c.l.b16 %v2793
      %v2841 = vunpack.c.l.b16 %v2794
      %v2842 = vunpack.c.l.b16 %v2795
      %v2843 = vunpack.c.l.b16 %v2796
      %v2844 = vunpack.c.l.b16 %v2797
      %v2845 = vpack.c.b16 %v2828, %v2827
      %v2846 = vpack.c.b16 %v2830, %v2829
      %v2847 = vpack.c.b16 %v2832, %v2831
      %v2848 = vpack.c.b16 %v2834, %v2833
      %v2849 = vpack.c.b16 %v2836, %v2835
      %v2850 = vpack.c.b16 %v2838, %v2837
      %v2851 = vpack.c.b16 %v2840, %v2839
      %v2852 = vpack.c.b16 %v2842, %v2841
      %v2853 = vpack.c.b16 %v2844, %v2843
      %v2864 = vsel %vm362, %v2807, 0
      %2866 = vmatprep.subr.bf16.mxu0 0
      %2867 = vmatpush1.bf16.msra.mxu0 %v2852
      %2868 = vmatprep.subr.bf16.mxu0 0
      %2869 = vmatpush1.bf16.msra.mxu0 %v2851
      %2870 = vmatprep.subr.bf16.mxu0 0
      %2871 = vmatpush1.bf16.msra.mxu0 %v2850
      %2872 = vmatprep.subr.bf16.mxu0 0
      %2873 = vmatpush1.bf16.msra.mxu0 %v2849
      %2874 = vmatprep.subr.bf16.mxu0 0
      %2875 = vmatpush1.bf16.msra.mxu0 %v2848
      %2876 = vmatprep.subr.bf16.mxu0 0
      %2877 = vmatpush1.bf16.msra.mxu0 %v2847
      %2878 = vmatprep.subr.bf16.mxu0 0
      %2879 = vmatpush1.bf16.msra.mxu0 %v2846
      %2880 = vmatprep.subr.bf16.mxu0 0
      %2881 = vmatpush1.bf16.msra.mxu0 %v2845
      %2882 = vmatprep.subr.bf16.mxu0 0
      %2883 = vmatpush2.bf16.msra.mxu0 0
      %2884 = vmatprep.subr.bf16.mxu0 0
      %2885 = vmatpush2.bf16.msra.mxu0 0
      %2886 = vmatprep.subr.bf16.mxu0 0
      %2887 = vmatpush2.bf16.msra.mxu0 0
      %2888 = vmatprep.subr.bf16.mxu0 0
      %2889 = vmatpush2.bf16.msra.mxu0 0
      %2890 = vmatprep.subr.bf16.mxu0 0
      %2891 = vmatpush2.bf16.msra.mxu0 0
      %2892 = vmatprep.subr.bf16.mxu0 0
      %2893 = vmatpush2.bf16.msra.mxu0 0
      %2894 = vmatprep.subr.bf16.mxu0 0
      %2895 = vmatpush2.bf16.msra.mxu0 0
      %2896 = vmatprep.subr.bf16.mxu0 0
      %2897 = vmatpush2.bf16.msra.mxu0 %v2853
      %2898 = vmatprep.mubr.bf16.mxu0 %v2864
      %2899 = vmatmul.mubr.bf16.gmra.mxu0 %v2804
      %v2900 = vpop.f32.mrf.mxu0
      %v2901 = vadd.f32 0.0, %v2900
      %v2902 = vpop.f32.mrf.mxu0
      %v2903 = vpop.f32.mrf.mxu0
      %v2904 = vadd.f32 0.0, %v2903
      %v2905 = vpop.f32.mrf.mxu0
      %2906 = vdwg.mxu0
      %v2907 = vadd.f32 %v2765, %v2901
      %v2908 = vadd.f32 %v2768, %v2904
      %v2909 = vlaneseq
      %v2910 = vshrl.u32 %v2909, 7
      %v2911 = vsub.s32 0, %v2910
      %v2912 = vrot.slane %v2497, %v2911
      %v2913 = vadd.f32 %v2907, %v2912
      %v2914 = vadd.f32 %v2908, %v2912
      %v2915 = vadd.f32 %v2913, %v637
      %v2916 = vadd.f32 %v2914, %v638
      %v2919 = vrot.slane %v2915, 7
      %v2920 = vrot.slane %v2916, 7
      %v2921 = vsel %vm641, %v2919, %v2920
      %2922 = vrot.lane.b32.xlu0 %v2919, 8
      %v2923 = vpop.permute.xlu0 %2922
      %2924 = vrot.lane.b32.xlu0 %v2921, 8
      %v2925 = vpop.permute.xlu0 %2924
      %2926 = vrot.lane.b32.xlu0 %v2920, 8
      %v2927 = vpop.permute.xlu0 %2926
      %2931 = vst.msk [vmem:[#allocation2] sm:$0xfe] %vm654, %v2923
      %2932 = vst.msk [vmem:[#allocation2 + $0x8] sm:$0xfe] %vm656, %v2923
      %2933 = vst.msk [vmem:[#allocation2 + $0x10] sm:$0xff] %vm658, %v2925
      %2934 = vst.msk [vmem:[#allocation2 + $0x18] sm:$0xff] %vm660, %v2925
      %2935 = vst.msk [vmem:[#allocation2 + $0x20] sm:$0x1] %vm662, %v2927
      %2936 = vst.msk [vmem:[#allocation2 + $0x28] sm:$0x1] %vm664, %v2927
      %v2937 = vld [vmem:[%s6] sm:$0xf]
      %v2938 = vld [vmem:[#allocation2] sm:$0xff]
      %v2939 = vld [vmem:[#allocation2 + $0x8] sm:$0xff]
      %v2940 = vld [vmem:[#allocation2 + $0x10] sm:$0xff]
      %v2941 = vld [vmem:[#allocation2 + $0x18] sm:$0xff]
      %v2942 = vpack.c.bf16 %v2940, %v2938
      %v2943 = vpack.c.bf16 %v2941, %v2939
      %v2944 = vld [vmem:[%s5] sm:$0xff]
      %v2945 = vld [vmem:[%s5 + $0x8] sm:$0xff]
      %v2946 = vld [vmem:[%s5 + $0x10] sm:$0xff]
      %v2947 = vld [vmem:[%s5 + $0x18] sm:$0xff]
      %v2948 = vld [vmem:[%s5 + $0x20] sm:$0xff]
      %v2949 = vld [vmem:[%s5 + $0x28] sm:$0xff]
      %v2950 = vld [vmem:[%s5 + $0x30] sm:$0xff]
      %v2951 = vld [vmem:[%s5 + $0x38] sm:$0xff]
      %v2952 = vld [vmem:[%s5 + $0x40] sm:$0xff]
      %v2953 = vld [vmem:[%s5 + $0x48] sm:$0xff]
      %v2954 = vld [vmem:[%s5 + $0x50] sm:$0xff]
      %v2955 = vld [vmem:[%s5 + $0x58] sm:$0xff]
      %v2956 = vld [vmem:[%s5 + $0x60] sm:$0xff]
      %v2957 = vld [vmem:[%s5 + $0x68] sm:$0xff]
      %v2958 = vld [vmem:[%s5 + $0x70] sm:$0xff]
      %v2959 = vld [vmem:[%s5 + $0x78] sm:$0xff]
      %v2960 = vld [vmem:[%s5 + $0x80] sm:$0xff]
      %v2961 = vld [vmem:[%s5 + $0x88] sm:$0xff]
      %v2962 = vld [vmem:[%s5 + $0x90] sm:$0xff]
      %v2963 = vld [vmem:[%s5 + $0x98] sm:$0xff]
      %v2964 = vld [vmem:[%s5 + $0xa0] sm:$0xff]
      %v2965 = vld [vmem:[%s5 + $0xa8] sm:$0xff]
      %v2966 = vld [vmem:[%s5 + $0xb0] sm:$0xff]
      %v2967 = vld [vmem:[%s5 + $0xb8] sm:$0xff]
      %v2968 = vld [vmem:[%s5 + $0xc0] sm:$0xff]
      %v2969 = vld [vmem:[%s5 + $0xc8] sm:$0xff]
      %v2970 = vld [vmem:[%s5 + $0xd0] sm:$0xff]
      %v2971 = vld [vmem:[%s5 + $0xd8] sm:$0xff]
      %v2972 = vld [vmem:[%s5 + $0xe0] sm:$0xff]
      %v2973 = vld [vmem:[%s5 + $0xe8] sm:$0xff]
      %v2974 = vld [vmem:[%s5 + $0xf0] sm:$0xff]
      %v2975 = vld [vmem:[%s5 + $0xf8] sm:$0xff]
      %v2976 = vld [vmem:[%s5 + $0x100] sm:$0xff]
      %v2977 = vld [vmem:[%s5 + $0x108] sm:$0xff]
      %v2978 = vld [vmem:[%s5 + $0x110] sm:$0xff]
      %v2979 = vld [vmem:[%s5 + $0x118] sm:$0xff]
      %v2980 = vld [vmem:[#allocation2] sm:$0xfe]
      %v2981 = vld [vmem:[#allocation2 + $0x8] sm:$0xfe]
      %v2982 = vld [vmem:[#allocation2 + $0x20] sm:$0x1]
      %v2983 = vld [vmem:[#allocation2 + $0x28] sm:$0x1]
      %v2984 = vpack.c.bf16 %v2940, %v2980
      %v2985 = vpack.c.bf16 %v2941, %v2981
      %v2986 = vpack.c.bf16 %v2982, %v2982
      %v2987 = vpack.c.bf16 %v2983, %v2983
      %s2988 = scalar_lea.vmem %s5, 288
      %v2989 = vld [vmem:[%s2988] sm:$0xff]
      %v2990 = vld [vmem:[%s2988 + $0x8] sm:$0xff]
      %v2991 = vld [vmem:[%s2988 + $0x10] sm:$0xff]
      %v2992 = vld [vmem:[%s2988 + $0x18] sm:$0xff]
      %v2993 = vld [vmem:[%s2988 + $0x20] sm:$0xff]
      %v2994 = vld [vmem:[%s2988 + $0x28] sm:$0xff]
      %v2995 = vld [vmem:[%s2988 + $0x30] sm:$0xff]
      %v2996 = vld [vmem:[%s2988 + $0x38] sm:$0xff]
      %v2997 = vld [vmem:[%s2988 + $0x40] sm:$0xff]
      %v2998 = vld [vmem:[%s2988 + $0x48] sm:$0xff]
      %v2999 = vld [vmem:[%s2988 + $0x50] sm:$0xff]
      %v3000 = vld [vmem:[%s2988 + $0x58] sm:$0xff]
      %v3001 = vld [vmem:[%s2988 + $0x60] sm:$0xff]
      %v3002 = vld [vmem:[%s2988 + $0x68] sm:$0xff]
      %v3003 = vld [vmem:[%s2988 + $0x70] sm:$0xff]
      %v3004 = vld [vmem:[%s2988 + $0x78] sm:$0xff]
      %v3005 = vld [vmem:[%s2988 + $0x80] sm:$0xff]
      %v3006 = vld [vmem:[%s2988 + $0x88] sm:$0xff]
      %v3007 = vld [vmem:[%s2988 + $0x90] sm:$0xff]
      %v3008 = vld [vmem:[%s2988 + $0x98] sm:$0xff]
      %v3009 = vld [vmem:[%s2988 + $0xa0] sm:$0xff]
      %v3010 = vld [vmem:[%s2988 + $0xa8] sm:$0xff]
      %v3011 = vld [vmem:[%s2988 + $0xb0] sm:$0xff]
      %v3012 = vld [vmem:[%s2988 + $0xb8] sm:$0xff]
      %v3013 = vld [vmem:[%s2988 + $0xc0] sm:$0xff]
      %v3014 = vld [vmem:[%s2988 + $0xc8] sm:$0xff]
      %v3015 = vld [vmem:[%s2988 + $0xd0] sm:$0xff]
      %v3016 = vld [vmem:[%s2988 + $0xd8] sm:$0xff]
      %v3017 = vld [vmem:[%s2988 + $0xe0] sm:$0xff]
      %v3018 = vld [vmem:[%s2988 + $0xe8] sm:$0xff]
      %v3019 = vld [vmem:[%s2988 + $0xf0] sm:$0xff]
      %v3020 = vld [vmem:[%s2988 + $0xf8] sm:$0xff]
      %v3021 = vld [vmem:[%s2988 + $0x100] sm:$0xff]
      %v3022 = vld [vmem:[%s2988 + $0x108] sm:$0xff]
      %v3023 = vld [vmem:[%s2988 + $0x110] sm:$0xff]
      %v3024 = vld [vmem:[%s2988 + $0x118] sm:$0xff]
      %v3026 = vshrl.u32 %v2984, 16
      %v3028 = vshll.u32 %v2984, 16
      %v3030 = vrot.slane %v3028, 1
      %v3031 = vor.u32 %v3026, %v3030
      %v3033 = vshll.u32 %v2986, 16
      %v3035 = vrot.slane %v3033, 1
      %v3036 = vsel %vm718, %v3031, %v3035
      %v3038 = vshrl.u32 %v2985, 16
      %v3040 = vshll.u32 %v2985, 16
      %v3042 = vrot.slane %v3040, 1
      %v3043 = vor.u32 %v3038, %v3042
      %v3045 = vshll.u32 %v2987, 16
      %v3047 = vrot.slane %v3045, 1
      %v3048 = vsel %vm718, %v3043, %v3047
      %v3086 = vunpack.c.l.b16 %v2989
      %v3087 = vunpack.c.h.b16 %v2989
      %v3088 = vunpack.c.l.b16 %v2990
      %v3089 = vunpack.c.h.b16 %v2990
      %v3090 = vunpack.c.l.b16 %v2991
      %v3091 = vunpack.c.h.b16 %v2991
      %v3092 = vunpack.c.l.b16 %v2992
      %v3093 = vunpack.c.h.b16 %v2992
      %v3094 = vunpack.c.l.b16 %v2993
      %v3095 = vunpack.c.h.b16 %v2993
      %v3096 = vunpack.c.l.b16 %v2994
      %v3097 = vunpack.c.h.b16 %v2994
      %v3098 = vunpack.c.l.b16 %v2995
      %v3099 = vunpack.c.h.b16 %v2995
      %v3100 = vunpack.c.l.b16 %v2996
      %v3101 = vunpack.c.h.b16 %v2996
      %v3102 = vunpack.c.l.b16 %v2997
      %v3103 = vunpack.c.h.b16 %v2997
      %v3104 = vunpack.c.l.b16 %v2998
      %v3105 = vunpack.c.h.b16 %v2998
      %v3106 = vunpack.c.l.b16 %v2999
      %v3107 = vunpack.c.h.b16 %v2999
      %v3108 = vunpack.c.l.b16 %v3000
      %v3109 = vunpack.c.h.b16 %v3000
      %v3110 = vunpack.c.l.b16 %v3001
      %v3111 = vunpack.c.h.b16 %v3001
      %v3112 = vunpack.c.l.b16 %v3002
      %v3113 = vunpack.c.h.b16 %v3002
      %v3114 = vunpack.c.l.b16 %v3003
      %v3115 = vunpack.c.h.b16 %v3003
      %v3116 = vunpack.c.l.b16 %v3004
      %v3117 = vunpack.c.h.b16 %v3004
      %v3118 = vunpack.c.l.b16 %v3005
      %v3119 = vunpack.c.h.b16 %v3005
      %v3120 = vunpack.c.l.b16 %v3006
      %v3121 = vunpack.c.h.b16 %v3006
      %v3122 = vunpack.c.l.b16 %v3007
      %v3123 = vunpack.c.h.b16 %v3007
      %v3124 = vunpack.c.l.b16 %v3008
      %v3125 = vunpack.c.h.b16 %v3008
      %v3126 = vunpack.c.l.b16 %v3009
      %v3127 = vunpack.c.h.b16 %v3009
      %v3128 = vunpack.c.l.b16 %v3010
      %v3129 = vunpack.c.h.b16 %v3010
      %v3130 = vunpack.c.l.b16 %v3011
      %v3131 = vunpack.c.h.b16 %v3011
      %v3132 = vunpack.c.l.b16 %v3012
      %v3133 = vunpack.c.h.b16 %v3012
      %v3134 = vunpack.c.l.b16 %v3013
      %v3135 = vunpack.c.h.b16 %v3013
      %v3136 = vunpack.c.l.b16 %v3014
      %v3137 = vunpack.c.h.b16 %v3014
      %v3138 = vunpack.c.l.b16 %v3015
      %v3139 = vunpack.c.h.b16 %v3015
      %v3140 = vunpack.c.l.b16 %v3016
      %v3141 = vunpack.c.h.b16 %v3016
      %v3142 = vunpack.c.l.b16 %v3017
      %v3143 = vunpack.c.h.b16 %v3017
      %v3144 = vunpack.c.l.b16 %v3018
      %v3145 = vunpack.c.h.b16 %v3018
      %v3146 = vunpack.c.l.b16 %v3019
      %v3147 = vunpack.c.h.b16 %v3019
      %v3148 = vunpack.c.l.b16 %v3020
      %v3149 = vunpack.c.h.b16 %v3020
      %v3150 = vunpack.c.l.b16 %v3021
      %v3151 = vunpack.c.h.b16 %v3021
      %v3152 = vunpack.c.l.b16 %v3022
      %v3153 = vunpack.c.h.b16 %v3022
      %v3154 = vunpack.c.l.b16 %v3023
      %v3155 = vunpack.c.h.b16 %v3023
      %v3156 = vunpack.c.l.b16 %v3024
      %v3157 = vunpack.c.h.b16 %v3024
      %v3158 = vpack.c.b16 %v3090, %v3086
      %v3159 = vpack.c.b16 %v3091, %v3087
      %v3160 = vpack.c.b16 %v3092, %v3088
      %v3161 = vpack.c.b16 %v3093, %v3089
      %v3162 = vpack.c.b16 %v3098, %v3094
      %v3163 = vpack.c.b16 %v3099, %v3095
      %v3164 = vpack.c.b16 %v3100, %v3096
      %v3165 = vpack.c.b16 %v3101, %v3097
      %v3166 = vpack.c.b16 %v3106, %v3102
      %v3167 = vpack.c.b16 %v3107, %v3103
      %v3168 = vpack.c.b16 %v3108, %v3104
      %v3169 = vpack.c.b16 %v3109, %v3105
      %v3170 = vpack.c.b16 %v3114, %v3110
      %v3171 = vpack.c.b16 %v3115, %v3111
      %v3172 = vpack.c.b16 %v3116, %v3112
      %v3173 = vpack.c.b16 %v3117, %v3113
      %v3174 = vpack.c.b16 %v3122, %v3118
      %v3175 = vpack.c.b16 %v3123, %v3119
      %v3176 = vpack.c.b16 %v3124, %v3120
      %v3177 = vpack.c.b16 %v3125, %v3121
      %v3178 = vpack.c.b16 %v3130, %v3126
      %v3179 = vpack.c.b16 %v3131, %v3127
      %v3180 = vpack.c.b16 %v3132, %v3128
      %v3181 = vpack.c.b16 %v3133, %v3129
      %v3182 = vpack.c.b16 %v3138, %v3134
      %v3183 = vpack.c.b16 %v3139, %v3135
      %v3184 = vpack.c.b16 %v3140, %v3136
      %v3185 = vpack.c.b16 %v3141, %v3137
      %v3186 = vpack.c.b16 %v3146, %v3142
      %v3187 = vpack.c.b16 %v3147, %v3143
      %v3188 = vpack.c.b16 %v3148, %v3144
      %v3189 = vpack.c.b16 %v3149, %v3145
      %v3190 = vpack.c.b16 %v3154, %v3150
      %v3191 = vpack.c.b16 %v3155, %v3151
      %v3192 = vpack.c.b16 %v3156, %v3152
      %v3193 = vpack.c.b16 %v3157, %v3153
      %v3231 = vsel %vm362, %v3048, 0
      %3233 = vmatprep.subr.bf16.mxu0 %v3187
      %3234 = vmatpush1.bf16.msra.mxu0 %v3186
      %3235 = vmatprep.subr.bf16.mxu0 %v3183
      %3236 = vmatpush1.bf16.msra.mxu0 %v3182
      %3237 = vmatprep.subr.bf16.mxu0 %v3179
      %3238 = vmatpush1.bf16.msra.mxu0 %v3178
      %3239 = vmatprep.subr.bf16.mxu0 %v3175
      %3240 = vmatpush1.bf16.msra.mxu0 %v3174
      %3241 = vmatprep.subr.bf16.mxu0 %v3171
      %3242 = vmatpush1.bf16.msra.mxu0 %v3170
      %3243 = vmatprep.subr.bf16.mxu0 %v3167
      %3244 = vmatpush1.bf16.msra.mxu0 %v3166
      %3245 = vmatprep.subr.bf16.mxu0 %v3163
      %3246 = vmatpush1.bf16.msra.mxu0 %v3162
      %3247 = vmatprep.subr.bf16.mxu0 %v3159
      %3248 = vmatpush1.bf16.msra.mxu0 %v3158
      %3249 = vmatprep.subr.bf16.mxu0 0
      %3250 = vmatpush2.bf16.msra.mxu0 0
      %3251 = vmatprep.subr.bf16.mxu0 0
      %3252 = vmatpush2.bf16.msra.mxu0 0
      %3253 = vmatprep.subr.bf16.mxu0 0
      %3254 = vmatpush2.bf16.msra.mxu0 0
      %3255 = vmatprep.subr.bf16.mxu0 0
      %3256 = vmatpush2.bf16.msra.mxu0 0
      %3257 = vmatprep.subr.bf16.mxu0 0
      %3258 = vmatpush2.bf16.msra.mxu0 0
      %3259 = vmatprep.subr.bf16.mxu0 0
      %3260 = vmatpush2.bf16.msra.mxu0 0
      %3261 = vmatprep.subr.bf16.mxu0 0
      %3262 = vmatpush2.bf16.msra.mxu0 0
      %3263 = vmatprep.subr.bf16.mxu0 %v3191
      %3264 = vmatpush2.bf16.msra.mxu0 %v3190
      %3265 = vmatprep.mubr.bf16.mxu0 %v3231
      %3266 = vmatmul.mubr.bf16.gmra.mxu0 %v3036
      %v3267 = vpop.f32.mrf.mxu0
      %v3268 = vadd.f32 0.0, %v3267
      %v3269 = vpop.f32.mrf.mxu0
      %v3270 = vadd.f32 0.0, %v3269
      %v3271 = vpop.f32.mrf.mxu0
      %v3272 = vadd.f32 0.0, %v3271
      %v3273 = vpop.f32.mrf.mxu0
      %v3274 = vadd.f32 0.0, %v3273
      %3275 = vdwg.mxu0
      %3276 = vmatprep.subr.bf16.mxu0 %v3189
      %3277 = vmatpush1.bf16.msra.mxu0 %v3188
      %3278 = vmatprep.subr.bf16.mxu0 %v3185
      %3279 = vmatpush1.bf16.msra.mxu0 %v3184
      %3280 = vmatprep.subr.bf16.mxu0 %v3181
      %3281 = vmatpush1.bf16.msra.mxu0 %v3180
      %3282 = vmatprep.subr.bf16.mxu0 %v3177
      %3283 = vmatpush1.bf16.msra.mxu0 %v3176
      %3284 = vmatprep.subr.bf16.mxu0 %v3173
      %3285 = vmatpush1.bf16.msra.mxu0 %v3172
      %3286 = vmatprep.subr.bf16.mxu0 %v3169
      %3287 = vmatpush1.bf16.msra.mxu0 %v3168
      %3288 = vmatprep.subr.bf16.mxu0 %v3165
      %3289 = vmatpush1.bf16.msra.mxu0 %v3164
      %3290 = vmatprep.subr.bf16.mxu0 %v3161
      %3291 = vmatpush1.bf16.msra.mxu0 %v3160
      %3292 = vmatprep.subr.bf16.mxu0 0
      %3293 = vmatpush2.bf16.msra.mxu0 0
      %3294 = vmatprep.subr.bf16.mxu0 0
      %3295 = vmatpush2.bf16.msra.mxu0 0
      %3296 = vmatprep.subr.bf16.mxu0 0
      %3297 = vmatpush2.bf16.msra.mxu0 0
      %3298 = vmatprep.subr.bf16.mxu0 0
      %3299 = vmatpush2.bf16.msra.mxu0 0
      %3300 = vmatprep.subr.bf16.mxu0 0
      %3301 = vmatpush2.bf16.msra.mxu0 0
      %3302 = vmatprep.subr.bf16.mxu0 0
      %3303 = vmatpush2.bf16.msra.mxu0 0
      %3304 = vmatprep.subr.bf16.mxu0 0
      %3305 = vmatpush2.bf16.msra.mxu0 0
      %3306 = vmatprep.subr.bf16.mxu0 %v3193
      %3307 = vmatpush2.bf16.msra.mxu0 %v3192
      %3308 = vmatprep.mubr.bf16.mxu0 %v3231
      %3309 = vmatmul.mubr.bf16.gmra.mxu0 %v3036
      %v3310 = vpop.f32.mrf.mxu0
      %v3311 = vadd.f32 0.0, %v3310
      %v3312 = vpop.f32.mrf.mxu0
      %v3313 = vadd.f32 0.0, %v3312
      %v3314 = vpop.f32.mrf.mxu0
      %v3315 = vadd.f32 0.0, %v3314
      %v3316 = vpop.f32.mrf.mxu0
      %v3317 = vadd.f32 0.0, %v3316
      %3318 = vdwg.mxu0
      %v3355 = vunpack.c.l.b16 %v2944
      %v3356 = vunpack.c.h.b16 %v2944
      %v3357 = vunpack.c.l.b16 %v2945
      %v3358 = vunpack.c.h.b16 %v2945
      %v3359 = vunpack.c.l.b16 %v2946
      %v3360 = vunpack.c.h.b16 %v2946
      %v3361 = vunpack.c.l.b16 %v2947
      %v3362 = vunpack.c.h.b16 %v2947
      %v3363 = vunpack.c.l.b16 %v2948
      %v3364 = vunpack.c.h.b16 %v2948
      %v3365 = vunpack.c.l.b16 %v2949
      %v3366 = vunpack.c.h.b16 %v2949
      %v3367 = vunpack.c.l.b16 %v2950
      %v3368 = vunpack.c.h.b16 %v2950
      %v3369 = vunpack.c.l.b16 %v2951
      %v3370 = vunpack.c.h.b16 %v2951
      %v3371 = vunpack.c.l.b16 %v2952
      %v3372 = vunpack.c.h.b16 %v2952
      %v3373 = vunpack.c.l.b16 %v2953
      %v3374 = vunpack.c.h.b16 %v2953
      %v3375 = vunpack.c.l.b16 %v2954
      %v3376 = vunpack.c.h.b16 %v2954
      %v3377 = vunpack.c.l.b16 %v2955
      %v3378 = vunpack.c.h.b16 %v2955
      %v3379 = vunpack.c.l.b16 %v2956
      %v3380 = vunpack.c.h.b16 %v2956
      %v3381 = vunpack.c.l.b16 %v2957
      %v3382 = vunpack.c.h.b16 %v2957
      %v3383 = vunpack.c.l.b16 %v2958
      %v3384 = vunpack.c.h.b16 %v2958
      %v3385 = vunpack.c.l.b16 %v2959
      %v3386 = vunpack.c.h.b16 %v2959
      %v3387 = vunpack.c.l.b16 %v2960
      %v3388 = vunpack.c.h.b16 %v2960
      %v3389 = vunpack.c.l.b16 %v2961
      %v3390 = vunpack.c.h.b16 %v2961
      %v3391 = vunpack.c.l.b16 %v2962
      %v3392 = vunpack.c.h.b16 %v2962
      %v3393 = vunpack.c.l.b16 %v2963
      %v3394 = vunpack.c.h.b16 %v2963
      %v3395 = vunpack.c.l.b16 %v2964
      %v3396 = vunpack.c.h.b16 %v2964
      %v3397 = vunpack.c.l.b16 %v2965
      %v3398 = vunpack.c.h.b16 %v2965
      %v3399 = vunpack.c.l.b16 %v2966
      %v3400 = vunpack.c.h.b16 %v2966
      %v3401 = vunpack.c.l.b16 %v2967
      %v3402 = vunpack.c.h.b16 %v2967
      %v3403 = vunpack.c.l.b16 %v2968
      %v3404 = vunpack.c.h.b16 %v2968
      %v3405 = vunpack.c.l.b16 %v2969
      %v3406 = vunpack.c.h.b16 %v2969
      %v3407 = vunpack.c.l.b16 %v2970
      %v3408 = vunpack.c.h.b16 %v2970
      %v3409 = vunpack.c.l.b16 %v2971
      %v3410 = vunpack.c.h.b16 %v2971
      %v3411 = vunpack.c.l.b16 %v2972
      %v3412 = vunpack.c.h.b16 %v2972
      %v3413 = vunpack.c.l.b16 %v2973
      %v3414 = vunpack.c.h.b16 %v2973
      %v3415 = vunpack.c.l.b16 %v2974
      %v3416 = vunpack.c.h.b16 %v2974
      %v3417 = vunpack.c.l.b16 %v2975
      %v3418 = vunpack.c.h.b16 %v2975
      %v3419 = vunpack.c.l.b16 %v2976
      %v3420 = vunpack.c.h.b16 %v2976
      %v3421 = vunpack.c.l.b16 %v2977
      %v3422 = vunpack.c.h.b16 %v2977
      %v3423 = vunpack.c.l.b16 %v2978
      %v3424 = vunpack.c.h.b16 %v2978
      %v3425 = vunpack.c.l.b16 %v2979
      %v3426 = vunpack.c.h.b16 %v2979
      %v3427 = vpack.c.b16 %v3359, %v3355
      %v3428 = vpack.c.b16 %v3360, %v3356
      %v3429 = vpack.c.b16 %v3361, %v3357
      %v3430 = vpack.c.b16 %v3362, %v3358
      %v3431 = vpack.c.b16 %v3367, %v3363
      %v3432 = vpack.c.b16 %v3368, %v3364
      %v3433 = vpack.c.b16 %v3369, %v3365
      %v3434 = vpack.c.b16 %v3370, %v3366
      %v3435 = vpack.c.b16 %v3375, %v3371
      %v3436 = vpack.c.b16 %v3376, %v3372
      %v3437 = vpack.c.b16 %v3377, %v3373
      %v3438 = vpack.c.b16 %v3378, %v3374
      %v3439 = vpack.c.b16 %v3383, %v3379
      %v3440 = vpack.c.b16 %v3384, %v3380
      %v3441 = vpack.c.b16 %v3385, %v3381
      %v3442 = vpack.c.b16 %v3386, %v3382
      %v3443 = vpack.c.b16 %v3391, %v3387
      %v3444 = vpack.c.b16 %v3392, %v3388
      %v3445 = vpack.c.b16 %v3393, %v3389
      %v3446 = vpack.c.b16 %v3394, %v3390
      %v3447 = vpack.c.b16 %v3399, %v3395
      %v3448 = vpack.c.b16 %v3400, %v3396
      %v3449 = vpack.c.b16 %v3401, %v3397
      %v3450 = vpack.c.b16 %v3402, %v3398
      %v3451 = vpack.c.b16 %v3407, %v3403
      %v3452 = vpack.c.b16 %v3408, %v3404
      %v3453 = vpack.c.b16 %v3409, %v3405
      %v3454 = vpack.c.b16 %v3410, %v3406
      %v3455 = vpack.c.b16 %v3415, %v3411
      %v3456 = vpack.c.b16 %v3416, %v3412
      %v3457 = vpack.c.b16 %v3417, %v3413
      %v3458 = vpack.c.b16 %v3418, %v3414
      %v3459 = vpack.c.b16 %v3423, %v3419
      %v3460 = vpack.c.b16 %v3424, %v3420
      %v3461 = vpack.c.b16 %v3425, %v3421
      %v3462 = vpack.c.b16 %v3426, %v3422
      %v3500 = vsel %vm362, %v2943, 0
      %3502 = vmatprep.subr.bf16.mxu0 %v3456
      %3503 = vmatpush1.bf16.msra.mxu0 %v3455
      %3504 = vmatprep.subr.bf16.mxu0 %v3452
      %3505 = vmatpush1.bf16.msra.mxu0 %v3451
      %3506 = vmatprep.subr.bf16.mxu0 %v3448
      %3507 = vmatpush1.bf16.msra.mxu0 %v3447
      %3508 = vmatprep.subr.bf16.mxu0 %v3444
      %3509 = vmatpush1.bf16.msra.mxu0 %v3443
      %3510 = vmatprep.subr.bf16.mxu0 %v3440
      %3511 = vmatpush1.bf16.msra.mxu0 %v3439
      %3512 = vmatprep.subr.bf16.mxu0 %v3436
      %3513 = vmatpush1.bf16.msra.mxu0 %v3435
      %3514 = vmatprep.subr.bf16.mxu0 %v3432
      %3515 = vmatpush1.bf16.msra.mxu0 %v3431
      %3516 = vmatprep.subr.bf16.mxu0 %v3428
      %3517 = vmatpush1.bf16.msra.mxu0 %v3427
      %3518 = vmatprep.subr.bf16.mxu0 0
      %3519 = vmatpush2.bf16.msra.mxu0 0
      %3520 = vmatprep.subr.bf16.mxu0 0
      %3521 = vmatpush2.bf16.msra.mxu0 0
      %3522 = vmatprep.subr.bf16.mxu0 0
      %3523 = vmatpush2.bf16.msra.mxu0 0
      %3524 = vmatprep.subr.bf16.mxu0 0
      %3525 = vmatpush2.bf16.msra.mxu0 0
      %3526 = vmatprep.subr.bf16.mxu0 0
      %3527 = vmatpush2.bf16.msra.mxu0 0
      %3528 = vmatprep.subr.bf16.mxu0 0
      %3529 = vmatpush2.bf16.msra.mxu0 0
      %3530 = vmatprep.subr.bf16.mxu0 0
      %3531 = vmatpush2.bf16.msra.mxu0 0
      %3532 = vmatprep.subr.bf16.mxu0 %v3460
      %3533 = vmatpush2.bf16.msra.mxu0 %v3459
      %3534 = vmatprep.mubr.bf16.mxu0 %v3500
      %3535 = vmatmul.mubr.bf16.gmra.mxu0 %v2942
      %v3536 = vpop.f32.mrf.mxu0
      %v3537 = vadd.f32 %v3268, %v3536
      %v3538 = vpop.f32.mrf.mxu0
      %v3539 = vadd.f32 %v3270, %v3538
      %v3540 = vpop.f32.mrf.mxu0
      %v3541 = vadd.f32 %v3272, %v3540
      %v3542 = vpop.f32.mrf.mxu0
      %v3543 = vadd.f32 %v3274, %v3542
      %3544 = vdwg.mxu0
      %3545 = vmatprep.subr.bf16.mxu0 %v3458
      %3546 = vmatpush1.bf16.msra.mxu0 %v3457
      %3547 = vmatprep.subr.bf16.mxu0 %v3454
      %3548 = vmatpush1.bf16.msra.mxu0 %v3453
      %3549 = vmatprep.subr.bf16.mxu0 %v3450
      %3550 = vmatpush1.bf16.msra.mxu0 %v3449
      %3551 = vmatprep.subr.bf16.mxu0 %v3446
      %3552 = vmatpush1.bf16.msra.mxu0 %v3445
      %3553 = vmatprep.subr.bf16.mxu0 %v3442
      %3554 = vmatpush1.bf16.msra.mxu0 %v3441
      %3555 = vmatprep.subr.bf16.mxu0 %v3438
      %3556 = vmatpush1.bf16.msra.mxu0 %v3437
      %3557 = vmatprep.subr.bf16.mxu0 %v3434
      %3558 = vmatpush1.bf16.msra.mxu0 %v3433
      %3559 = vmatprep.subr.bf16.mxu0 %v3430
      %3560 = vmatpush1.bf16.msra.mxu0 %v3429
      %3561 = vmatprep.subr.bf16.mxu0 0
      %3562 = vmatpush2.bf16.msra.mxu0 0
      %3563 = vmatprep.subr.bf16.mxu0 0
      %3564 = vmatpush2.bf16.msra.mxu0 0
      %3565 = vmatprep.subr.bf16.mxu0 0
      %3566 = vmatpush2.bf16.msra.mxu0 0
      %3567 = vmatprep.subr.bf16.mxu0 0
      %3568 = vmatpush2.bf16.msra.mxu0 0
      %3569 = vmatprep.subr.bf16.mxu0 0
      %3570 = vmatpush2.bf16.msra.mxu0 0
      %3571 = vmatprep.subr.bf16.mxu0 0
      %3572 = vmatpush2.bf16.msra.mxu0 0
      %3573 = vmatprep.subr.bf16.mxu0 0
      %3574 = vmatpush2.bf16.msra.mxu0 0
      %3575 = vmatprep.subr.bf16.mxu0 %v3462
      %3576 = vmatpush2.bf16.msra.mxu0 %v3461
      %3577 = vmatprep.mubr.bf16.mxu0 %v3500
      %3578 = vmatmul.mubr.bf16.gmra.mxu0 %v2942
      %v3579 = vpop.f32.mrf.mxu0
      %v3580 = vadd.f32 %v3311, %v3579
      %v3581 = vpop.f32.mrf.mxu0
      %v3582 = vadd.f32 %v3313, %v3581
      %v3583 = vpop.f32.mrf.mxu0
      %v3584 = vadd.f32 %v3315, %v3583
      %v3585 = vpop.f32.mrf.mxu0
      %v3586 = vadd.f32 %v3317, %v3585
      %3587 = vdwg.mxu0
      %v3588 = vld [vmem:[#allocation2] sm:$0xfc]
      %v3589 = vld [vmem:[#allocation2 + $0x8] sm:$0xfc]
      %v3590 = vld [vmem:[#allocation2 + $0x20] sm:$0x3]
      %v3591 = vld [vmem:[#allocation2 + $0x28] sm:$0x3]
      %v3592 = vpack.c.bf16 %v2940, %v3588
      %v3593 = vpack.c.bf16 %v2941, %v3589
      %v3594 = vpack.c.bf16 %v3590, %v3590
      %v3595 = vpack.c.bf16 %v3591, %v3591
      %s3596 = scalar_lea.vmem %s5, 576
      %v3597 = vld [vmem:[%s3596] sm:$0xff]
      %v3598 = vld [vmem:[%s3596 + $0x8] sm:$0xff]
      %v3599 = vld [vmem:[%s3596 + $0x10] sm:$0xff]
      %v3600 = vld [vmem:[%s3596 + $0x18] sm:$0xff]
      %v3601 = vld [vmem:[%s3596 + $0x20] sm:$0xff]
      %v3602 = vld [vmem:[%s3596 + $0x28] sm:$0xff]
      %v3603 = vld [vmem:[%s3596 + $0x30] sm:$0xff]
      %v3604 = vld [vmem:[%s3596 + $0x38] sm:$0xff]
      %v3605 = vld [vmem:[%s3596 + $0x40] sm:$0xff]
      %v3606 = vld [vmem:[%s3596 + $0x48] sm:$0xff]
      %v3607 = vld [vmem:[%s3596 + $0x50] sm:$0xff]
      %v3608 = vld [vmem:[%s3596 + $0x58] sm:$0xff]
      %v3609 = vld [vmem:[%s3596 + $0x60] sm:$0xff]
      %v3610 = vld [vmem:[%s3596 + $0x68] sm:$0xff]
      %v3611 = vld [vmem:[%s3596 + $0x70] sm:$0xff]
      %v3612 = vld [vmem:[%s3596 + $0x78] sm:$0xff]
      %v3613 = vld [vmem:[%s3596 + $0x80] sm:$0xff]
      %v3614 = vld [vmem:[%s3596 + $0x88] sm:$0xff]
      %v3615 = vld [vmem:[%s3596 + $0x90] sm:$0xff]
      %v3616 = vld [vmem:[%s3596 + $0x98] sm:$0xff]
      %v3617 = vld [vmem:[%s3596 + $0xa0] sm:$0xff]
      %v3618 = vld [vmem:[%s3596 + $0xa8] sm:$0xff]
      %v3619 = vld [vmem:[%s3596 + $0xb0] sm:$0xff]
      %v3620 = vld [vmem:[%s3596 + $0xb8] sm:$0xff]
      %v3621 = vld [vmem:[%s3596 + $0xc0] sm:$0xff]
      %v3622 = vld [vmem:[%s3596 + $0xc8] sm:$0xff]
      %v3623 = vld [vmem:[%s3596 + $0xd0] sm:$0xff]
      %v3624 = vld [vmem:[%s3596 + $0xd8] sm:$0xff]
      %v3625 = vld [vmem:[%s3596 + $0xe0] sm:$0xff]
      %v3626 = vld [vmem:[%s3596 + $0xe8] sm:$0xff]
      %v3627 = vld [vmem:[%s3596 + $0xf0] sm:$0xff]
      %v3628 = vld [vmem:[%s3596 + $0xf8] sm:$0xff]
      %v3629 = vld [vmem:[%s3596 + $0x100] sm:$0xff]
      %v3630 = vld [vmem:[%s3596 + $0x108] sm:$0xff]
      %v3631 = vld [vmem:[%s3596 + $0x110] sm:$0xff]
      %v3632 = vld [vmem:[%s3596 + $0x118] sm:$0xff]
      %v3637 = vrot.slane %v3592, 1
      %v3638 = vrot.slane %v3594, 1
      %v3639 = vsel %vm971, %v3637, %v3638
      %v3640 = vrot.slane %v3593, 1
      %v3641 = vrot.slane %v3595, 1
      %v3642 = vsel %vm971, %v3640, %v3641
      %v3680 = vunpack.c.l.b16 %v3597
      %v3681 = vunpack.c.h.b16 %v3597
      %v3682 = vunpack.c.l.b16 %v3598
      %v3683 = vunpack.c.h.b16 %v3598
      %v3684 = vunpack.c.l.b16 %v3599
      %v3685 = vunpack.c.h.b16 %v3599
      %v3686 = vunpack.c.l.b16 %v3600
      %v3687 = vunpack.c.h.b16 %v3600
      %v3688 = vunpack.c.l.b16 %v3601
      %v3689 = vunpack.c.h.b16 %v3601
      %v3690 = vunpack.c.l.b16 %v3602
      %v3691 = vunpack.c.h.b16 %v3602
      %v3692 = vunpack.c.l.b16 %v3603
      %v3693 = vunpack.c.h.b16 %v3603
      %v3694 = vunpack.c.l.b16 %v3604
      %v3695 = vunpack.c.h.b16 %v3604
      %v3696 = vunpack.c.l.b16 %v3605
      %v3697 = vunpack.c.h.b16 %v3605
      %v3698 = vunpack.c.l.b16 %v3606
      %v3699 = vunpack.c.h.b16 %v3606
      %v3700 = vunpack.c.l.b16 %v3607
      %v3701 = vunpack.c.h.b16 %v3607
      %v3702 = vunpack.c.l.b16 %v3608
      %v3703 = vunpack.c.h.b16 %v3608
      %v3704 = vunpack.c.l.b16 %v3609
      %v3705 = vunpack.c.h.b16 %v3609
      %v3706 = vunpack.c.l.b16 %v3610
      %v3707 = vunpack.c.h.b16 %v3610
      %v3708 = vunpack.c.l.b16 %v3611
      %v3709 = vunpack.c.h.b16 %v3611
      %v3710 = vunpack.c.l.b16 %v3612
      %v3711 = vunpack.c.h.b16 %v3612
      %v3712 = vunpack.c.l.b16 %v3613
      %v3713 = vunpack.c.h.b16 %v3613
      %v3714 = vunpack.c.l.b16 %v3614
      %v3715 = vunpack.c.h.b16 %v3614
      %v3716 = vunpack.c.l.b16 %v3615
      %v3717 = vunpack.c.h.b16 %v3615
      %v3718 = vunpack.c.l.b16 %v3616
      %v3719 = vunpack.c.h.b16 %v3616
      %v3720 = vunpack.c.l.b16 %v3617
      %v3721 = vunpack.c.h.b16 %v3617
      %v3722 = vunpack.c.l.b16 %v3618
      %v3723 = vunpack.c.h.b16 %v3618
      %v3724 = vunpack.c.l.b16 %v3619
      %v3725 = vunpack.c.h.b16 %v3619
      %v3726 = vunpack.c.l.b16 %v3620
      %v3727 = vunpack.c.h.b16 %v3620
      %v3728 = vunpack.c.l.b16 %v3621
      %v3729 = vunpack.c.h.b16 %v3621
      %v3730 = vunpack.c.l.b16 %v3622
      %v3731 = vunpack.c.h.b16 %v3622
      %v3732 = vunpack.c.l.b16 %v3623
      %v3733 = vunpack.c.h.b16 %v3623
      %v3734 = vunpack.c.l.b16 %v3624
      %v3735 = vunpack.c.h.b16 %v3624
      %v3736 = vunpack.c.l.b16 %v3625
      %v3737 = vunpack.c.h.b16 %v3625
      %v3738 = vunpack.c.l.b16 %v3626
      %v3739 = vunpack.c.h.b16 %v3626
      %v3740 = vunpack.c.l.b16 %v3627
      %v3741 = vunpack.c.h.b16 %v3627
      %v3742 = vunpack.c.l.b16 %v3628
      %v3743 = vunpack.c.h.b16 %v3628
      %v3744 = vunpack.c.l.b16 %v3629
      %v3745 = vunpack.c.h.b16 %v3629
      %v3746 = vunpack.c.l.b16 %v3630
      %v3747 = vunpack.c.h.b16 %v3630
      %v3748 = vunpack.c.l.b16 %v3631
      %v3749 = vunpack.c.h.b16 %v3631
      %v3750 = vunpack.c.l.b16 %v3632
      %v3751 = vunpack.c.h.b16 %v3632
      %v3752 = vpack.c.b16 %v3684, %v3680
      %v3753 = vpack.c.b16 %v3685, %v3681
      %v3754 = vpack.c.b16 %v3686, %v3682
      %v3755 = vpack.c.b16 %v3687, %v3683
      %v3756 = vpack.c.b16 %v3692, %v3688
      %v3757 = vpack.c.b16 %v3693, %v3689
      %v3758 = vpack.c.b16 %v3694, %v3690
      %v3759 = vpack.c.b16 %v3695, %v3691
      %v3760 = vpack.c.b16 %v3700, %v3696
      %v3761 = vpack.c.b16 %v3701, %v3697
      %v3762 = vpack.c.b16 %v3702, %v3698
      %v3763 = vpack.c.b16 %v3703, %v3699
      %v3764 = vpack.c.b16 %v3708, %v3704
      %v3765 = vpack.c.b16 %v3709, %v3705
      %v3766 = vpack.c.b16 %v3710, %v3706
      %v3767 = vpack.c.b16 %v3711, %v3707
      %v3768 = vpack.c.b16 %v3716, %v3712
      %v3769 = vpack.c.b16 %v3717, %v3713
      %v3770 = vpack.c.b16 %v3718, %v3714
      %v3771 = vpack.c.b16 %v3719, %v3715
      %v3772 = vpack.c.b16 %v3724, %v3720
      %v3773 = vpack.c.b16 %v3725, %v3721
      %v3774 = vpack.c.b16 %v3726, %v3722
      %v3775 = vpack.c.b16 %v3727, %v3723
      %v3776 = vpack.c.b16 %v3732, %v3728
      %v3777 = vpack.c.b16 %v3733, %v3729
      %v3778 = vpack.c.b16 %v3734, %v3730
      %v3779 = vpack.c.b16 %v3735, %v3731
      %v3780 = vpack.c.b16 %v3740, %v3736
      %v3781 = vpack.c.b16 %v3741, %v3737
      %v3782 = vpack.c.b16 %v3742, %v3738
      %v3783 = vpack.c.b16 %v3743, %v3739
      %v3784 = vpack.c.b16 %v3748, %v3744
      %v3785 = vpack.c.b16 %v3749, %v3745
      %v3786 = vpack.c.b16 %v3750, %v3746
      %v3787 = vpack.c.b16 %v3751, %v3747
      %v3825 = vsel %vm362, %v3642, 0
      %3827 = vmatprep.subr.bf16.mxu0 %v3781
      %3828 = vmatpush1.bf16.msra.mxu0 %v3780
      %3829 = vmatprep.subr.bf16.mxu0 %v3777
      %3830 = vmatpush1.bf16.msra.mxu0 %v3776
      %3831 = vmatprep.subr.bf16.mxu0 %v3773
      %3832 = vmatpush1.bf16.msra.mxu0 %v3772
      %3833 = vmatprep.subr.bf16.mxu0 %v3769
      %3834 = vmatpush1.bf16.msra.mxu0 %v3768
      %3835 = vmatprep.subr.bf16.mxu0 %v3765
      %3836 = vmatpush1.bf16.msra.mxu0 %v3764
      %3837 = vmatprep.subr.bf16.mxu0 %v3761
      %3838 = vmatpush1.bf16.msra.mxu0 %v3760
      %3839 = vmatprep.subr.bf16.mxu0 %v3757
      %3840 = vmatpush1.bf16.msra.mxu0 %v3756
      %3841 = vmatprep.subr.bf16.mxu0 %v3753
      %3842 = vmatpush1.bf16.msra.mxu0 %v3752
      %3843 = vmatprep.subr.bf16.mxu0 0
      %3844 = vmatpush2.bf16.msra.mxu0 0
      %3845 = vmatprep.subr.bf16.mxu0 0
      %3846 = vmatpush2.bf16.msra.mxu0 0
      %3847 = vmatprep.subr.bf16.mxu0 0
      %3848 = vmatpush2.bf16.msra.mxu0 0
      %3849 = vmatprep.subr.bf16.mxu0 0
      %3850 = vmatpush2.bf16.msra.mxu0 0
      %3851 = vmatprep.subr.bf16.mxu0 0
      %3852 = vmatpush2.bf16.msra.mxu0 0
      %3853 = vmatprep.subr.bf16.mxu0 0
      %3854 = vmatpush2.bf16.msra.mxu0 0
      %3855 = vmatprep.subr.bf16.mxu0 0
      %3856 = vmatpush2.bf16.msra.mxu0 0
      %3857 = vmatprep.subr.bf16.mxu0 %v3785
      %3858 = vmatpush2.bf16.msra.mxu0 %v3784
      %3859 = vmatprep.mubr.bf16.mxu0 %v3825
      %3860 = vmatmul.mubr.bf16.gmra.mxu0 %v3639
      %v3861 = vpop.f32.mrf.mxu0
      %v3862 = vadd.f32 0.0, %v3861
      %v3863 = vpop.f32.mrf.mxu0
      %v3864 = vadd.f32 0.0, %v3863
      %v3865 = vpop.f32.mrf.mxu0
      %v3866 = vadd.f32 0.0, %v3865
      %v3867 = vpop.f32.mrf.mxu0
      %v3868 = vadd.f32 0.0, %v3867
      %3869 = vdwg.mxu0
      %3870 = vmatprep.subr.bf16.mxu0 %v3783
      %3871 = vmatpush1.bf16.msra.mxu0 %v3782
      %3872 = vmatprep.subr.bf16.mxu0 %v3779
      %3873 = vmatpush1.bf16.msra.mxu0 %v3778
      %3874 = vmatprep.subr.bf16.mxu0 %v3775
      %3875 = vmatpush1.bf16.msra.mxu0 %v3774
      %3876 = vmatprep.subr.bf16.mxu0 %v3771
      %3877 = vmatpush1.bf16.msra.mxu0 %v3770
      %3878 = vmatprep.subr.bf16.mxu0 %v3767
      %3879 = vmatpush1.bf16.msra.mxu0 %v3766
      %3880 = vmatprep.subr.bf16.mxu0 %v3763
      %3881 = vmatpush1.bf16.msra.mxu0 %v3762
      %3882 = vmatprep.subr.bf16.mxu0 %v3759
      %3883 = vmatpush1.bf16.msra.mxu0 %v3758
      %3884 = vmatprep.subr.bf16.mxu0 %v3755
      %3885 = vmatpush1.bf16.msra.mxu0 %v3754
      %3886 = vmatprep.subr.bf16.mxu0 0
      %3887 = vmatpush2.bf16.msra.mxu0 0
      %3888 = vmatprep.subr.bf16.mxu0 0
      %3889 = vmatpush2.bf16.msra.mxu0 0
      %3890 = vmatprep.subr.bf16.mxu0 0
      %3891 = vmatpush2.bf16.msra.mxu0 0
      %3892 = vmatprep.subr.bf16.mxu0 0
      %3893 = vmatpush2.bf16.msra.mxu0 0
      %3894 = vmatprep.subr.bf16.mxu0 0
      %3895 = vmatpush2.bf16.msra.mxu0 0
      %3896 = vmatprep.subr.bf16.mxu0 0
      %3897 = vmatpush2.bf16.msra.mxu0 0
      %3898 = vmatprep.subr.bf16.mxu0 0
      %3899 = vmatpush2.bf16.msra.mxu0 0
      %3900 = vmatprep.subr.bf16.mxu0 %v3787
      %3901 = vmatpush2.bf16.msra.mxu0 %v3786
      %3902 = vmatprep.mubr.bf16.mxu0 %v3825
      %3903 = vmatmul.mubr.bf16.gmra.mxu0 %v3639
      %v3904 = vpop.f32.mrf.mxu0
      %v3905 = vadd.f32 0.0, %v3904
      %v3906 = vpop.f32.mrf.mxu0
      %v3907 = vadd.f32 0.0, %v3906
      %v3908 = vpop.f32.mrf.mxu0
      %v3909 = vadd.f32 0.0, %v3908
      %v3910 = vpop.f32.mrf.mxu0
      %v3911 = vadd.f32 0.0, %v3910
      %3912 = vdwg.mxu0
      %v3913 = vadd.f32 %v3537, %v3862
      %v3914 = vadd.f32 %v3539, %v3864
      %v3915 = vadd.f32 %v3580, %v3905
      %v3916 = vadd.f32 %v3582, %v3907
      %v3917 = vadd.f32 %v3541, %v3866
      %v3918 = vadd.f32 %v3543, %v3868
      %v3919 = vadd.f32 %v3584, %v3909
      %v3920 = vadd.f32 %v3586, %v3911
      %v3922 = vlaneseq
      %v3923 = vshrl.u32 %v3922, 7
      %v3924 = vsub.s32 0, %v3923
      %v3925 = vrot.slane %v2937, %v3924
      %v3926 = vlaneseq
      %v3927 = vshrl.u32 %v3926, 7
      %v3928 = vsub.s32 1, %v3927
      %v3929 = vrot.slane %v2937, %v3928
      %v3930 = vlaneseq
      %v3931 = vshrl.u32 %v3930, 7
      %v3932 = vsub.s32 2, %v3931
      %v3933 = vrot.slane %v2937, %v3932
      %v3934 = vlaneseq
      %v3935 = vshrl.u32 %v3934, 7
      %v3936 = vsub.s32 3, %v3935
      %v3937 = vrot.slane %v2937, %v3936
      %v3942 = vadd.f32 %v3913, %v3925
      %v3943 = vadd.f32 %v3914, %v3929
      %v3944 = vadd.f32 %v3915, %v3933
      %v3945 = vadd.f32 %v3916, %v3937
      %v3946 = vadd.f32 %v3917, %v3925
      %v3947 = vadd.f32 %v3918, %v3929
      %v3948 = vadd.f32 %v3919, %v3933
      %v3949 = vadd.f32 %v3920, %v3937
      %v3950 = vld [vmem:[%s7] sm:$0xff]
      %v3951 = vld [vmem:[%s7 + $0x8] sm:$0xff]
      %v3952 = vld [vmem:[%s7 + $0x10] sm:$0xff]
      %v3953 = vld [vmem:[%s7 + $0x18] sm:$0xff]
      %s3954 = scalar_lea.vmem %s7, 32
      %v3955 = vld [vmem:[%s3954] sm:$0xff]
      %v3956 = vld [vmem:[%s3954 + $0x8] sm:$0xff]
      %v3957 = vld [vmem:[%s3954 + $0x10] sm:$0xff]
      %v3958 = vld [vmem:[%s3954 + $0x18] sm:$0xff]
      %v3960 = vsel %vm362, %v3955, 0
      %v3963 = vsel %vm362, %v3956, 0
      %v3966 = vsel %vm362, %v3957, 0
      %v3969 = vsel %vm362, %v3958, 0
      %3971 = vmatprep.subr.mxu0 0.0
      %3972 = vmatpush1.msra.mxu0 0.0
      %3973 = vmatprep.subr.mxu0 0.0
      %3974 = vmatpush1.msra.mxu0 0.0
      %3975 = vmatprep.subr.mxu0 0.0
      %3976 = vmatpush1.msra.mxu0 0.0
      %3977 = vmatprep.subr.mxu0 0.0
      %3978 = vmatpush1.msra.mxu0 0.0
      %3979 = vmatprep.subr.mxu0 0.0
      %3980 = vmatpush1.msra.mxu0 0.0
      %3981 = vmatprep.subr.mxu0 0.0
      %3982 = vmatpush1.msra.mxu0 0.0
      %3983 = vmatprep.subr.mxu0 0.0
      %3984 = vmatpush1.msra.mxu0 0.0
      %3985 = vmatprep.subr.mxu0 0.0
      %3986 = vmatpush1.msra.mxu0 0.0
      %3987 = vmatprep.subr.mxu0 0.0
      %3988 = vmatpush1.msra.mxu0 0.0
      %3989 = vmatprep.subr.mxu0 0.0
      %3990 = vmatpush1.msra.mxu0 0.0
      %3991 = vmatprep.subr.mxu0 0.0
      %3992 = vmatpush1.msra.mxu0 0.0
      %3993 = vmatprep.subr.mxu0 0.0
      %3994 = vmatpush1.msra.mxu0 0.0
      %3995 = vmatprep.subr.mxu0 0.0
      %3996 = vmatpush1.msra.mxu0 0.0
      %3997 = vmatprep.subr.mxu0 0.0
      %3998 = vmatpush1.msra.mxu0 0.0
      %3999 = vmatprep.subr.mxu0 %v3949
      %4000 = vmatpush1.msra.mxu0 %v3948
      %4001 = vmatprep.subr.mxu0 %v3945
      %4002 = vmatpush1.msra.mxu0 %v3944
      %4003 = vmatprep.subr.mxu0 0.0
      %4004 = vmatpush2.msra.mxu0 0.0
      %4005 = vmatprep.subr.mxu0 0.0
      %4006 = vmatpush2.msra.mxu0 0.0
      %4007 = vmatprep.subr.mxu0 0.0
      %4008 = vmatpush2.msra.mxu0 0.0
      %4009 = vmatprep.subr.mxu0 0.0
      %4010 = vmatpush2.msra.mxu0 0.0
      %4011 = vmatprep.subr.mxu0 0.0
      %4012 = vmatpush2.msra.mxu0 0.0
      %4013 = vmatprep.subr.mxu0 0.0
      %4014 = vmatpush2.msra.mxu0 0.0
      %4015 = vmatprep.subr.mxu0 0.0
      %4016 = vmatpush2.msra.mxu0 0.0
      %4017 = vmatprep.subr.mxu0 0.0
      %4018 = vmatpush2.msra.mxu0 0.0
      %4019 = vmatprep.subr.mxu0 0.0
      %4020 = vmatpush2.msra.mxu0 0.0
      %4021 = vmatprep.subr.mxu0 0.0
      %4022 = vmatpush2.msra.mxu0 0.0
      %4023 = vmatprep.subr.mxu0 0.0
      %4024 = vmatpush2.msra.mxu0 0.0
      %4025 = vmatprep.subr.mxu0 0.0
      %4026 = vmatpush2.msra.mxu0 0.0
      %4027 = vmatprep.subr.mxu0 0.0
      %4028 = vmatpush2.msra.mxu0 0.0
      %4029 = vmatprep.subr.mxu0 0.0
      %4030 = vmatpush2.msra.mxu0 0.0
      %4031 = vmatprep.subr.mxu0 0.0
      %4032 = vmatpush2.msra.mxu0 0.0
      %4033 = vmatprep.subr.mxu0 0.0
      %4034 = vmatpush2.msra.mxu0 0.0
      %4035 = vmatprep.mubr.f32.mxu0 0.0
      %4036 = vmatmul.mubr.f32.gmra.mxu0 %v3960
      %v4037 = vpop.f32.mrf.mxu0
      %v4038 = vadd.f32 0.0, %v4037
      %v4039 = vpop.f32.mrf.mxu0
      %v4040 = vadd.f32 0.0, %v4039
      %4041 = vmatprep.mubr.f32.mxu0 0.0
      %4042 = vmatmul.mubr.f32.gmra.mxu0 %v3963
      %v4043 = vpop.f32.mrf.mxu0
      %v4044 = vadd.f32 0.0, %v4043
      %v4045 = vpop.f32.mrf.mxu0
      %v4046 = vadd.f32 0.0, %v4045
      %4047 = vmatprep.mubr.f32.mxu0 0.0
      %4048 = vmatmul.mubr.f32.gmra.mxu0 %v3966
      %v4049 = vpop.f32.mrf.mxu0
      %v4050 = vadd.f32 0.0, %v4049
      %v4051 = vpop.f32.mrf.mxu0
      %v4052 = vadd.f32 0.0, %v4051
      %4053 = vmatprep.mubr.f32.mxu0 0.0
      %4054 = vmatmul.mubr.f32.gmra.mxu0 %v3969
      %v4055 = vpop.f32.mrf.mxu0
      %v4056 = vadd.f32 0.0, %v4055
      %v4057 = vpop.f32.mrf.mxu0
      %v4058 = vadd.f32 0.0, %v4057
      %4059 = vdwg.mxu0
      %v4061 = vsel %vm362, %v3950, 0
      %v4064 = vsel %vm362, %v3951, 0
      %v4067 = vsel %vm362, %v3952, 0
      %v4070 = vsel %vm362, %v3953, 0
      %4072 = vmatprep.subr.mxu0 0.0
      %4073 = vmatpush1.msra.mxu0 0.0
      %4074 = vmatprep.subr.mxu0 0.0
      %4075 = vmatpush1.msra.mxu0 0.0
      %4076 = vmatprep.subr.mxu0 0.0
      %4077 = vmatpush1.msra.mxu0 0.0
      %4078 = vmatprep.subr.mxu0 0.0
      %4079 = vmatpush1.msra.mxu0 0.0
      %4080 = vmatprep.subr.mxu0 0.0
      %4081 = vmatpush1.msra.mxu0 0.0
      %4082 = vmatprep.subr.mxu0 0.0
      %4083 = vmatpush1.msra.mxu0 0.0
      %4084 = vmatprep.subr.mxu0 0.0
      %4085 = vmatpush1.msra.mxu0 0.0
      %4086 = vmatprep.subr.mxu0 0.0
      %4087 = vmatpush1.msra.mxu0 0.0
      %4088 = vmatprep.subr.mxu0 0.0
      %4089 = vmatpush1.msra.mxu0 0.0
      %4090 = vmatprep.subr.mxu0 0.0
      %4091 = vmatpush1.msra.mxu0 0.0
      %4092 = vmatprep.subr.mxu0 0.0
      %4093 = vmatpush1.msra.mxu0 0.0
      %4094 = vmatprep.subr.mxu0 0.0
      %4095 = vmatpush1.msra.mxu0 0.0
      %4096 = vmatprep.subr.mxu0 0.0
      %4097 = vmatpush1.msra.mxu0 0.0
      %4098 = vmatprep.subr.mxu0 0.0
      %4099 = vmatpush1.msra.mxu0 0.0
      %4100 = vmatprep.subr.mxu0 %v3947
      %4101 = vmatpush1.msra.mxu0 %v3946
      %4102 = vmatprep.subr.mxu0 %v3943
      %4103 = vmatpush1.msra.mxu0 %v3942
      %4104 = vmatprep.subr.mxu0 0.0
      %4105 = vmatpush2.msra.mxu0 0.0
      %4106 = vmatprep.subr.mxu0 0.0
      %4107 = vmatpush2.msra.mxu0 0.0
      %4108 = vmatprep.subr.mxu0 0.0
      %4109 = vmatpush2.msra.mxu0 0.0
      %4110 = vmatprep.subr.mxu0 0.0
      %4111 = vmatpush2.msra.mxu0 0.0
      %4112 = vmatprep.subr.mxu0 0.0
      %4113 = vmatpush2.msra.mxu0 0.0
      %4114 = vmatprep.subr.mxu0 0.0
      %4115 = vmatpush2.msra.mxu0 0.0
      %4116 = vmatprep.subr.mxu0 0.0
      %4117 = vmatpush2.msra.mxu0 0.0
      %4118 = vmatprep.subr.mxu0 0.0
      %4119 = vmatpush2.msra.mxu0 0.0
      %4120 = vmatprep.subr.mxu0 0.0
      %4121 = vmatpush2.msra.mxu0 0.0
      %4122 = vmatprep.subr.mxu0 0.0
      %4123 = vmatpush2.msra.mxu0 0.0
      %4124 = vmatprep.subr.mxu0 0.0
      %4125 = vmatpush2.msra.mxu0 0.0
      %4126 = vmatprep.subr.mxu0 0.0
      %4127 = vmatpush2.msra.mxu0 0.0
      %4128 = vmatprep.subr.mxu0 0.0
      %4129 = vmatpush2.msra.mxu0 0.0
      %4130 = vmatprep.subr.mxu0 0.0
      %4131 = vmatpush2.msra.mxu0 0.0
      %4132 = vmatprep.subr.mxu0 0.0
      %4133 = vmatpush2.msra.mxu0 0.0
      %4134 = vmatprep.subr.mxu0 0.0
      %4135 = vmatpush2.msra.mxu0 0.0
      %4136 = vmatprep.mubr.f32.mxu0 0.0
      %4137 = vmatmul.mubr.f32.gmra.mxu0 %v4061
      %v4138 = vpop.f32.mrf.mxu0
      %v4139 = vadd.f32 %v4038, %v4138
      %v4140 = vpop.f32.mrf.mxu0
      %v4141 = vadd.f32 %v4040, %v4140
      %4142 = vmatprep.mubr.f32.mxu0 0.0
      %4143 = vmatmul.mubr.f32.gmra.mxu0 %v4064
      %v4144 = vpop.f32.mrf.mxu0
      %v4145 = vadd.f32 %v4044, %v4144
      %v4146 = vpop.f32.mrf.mxu0
      %v4147 = vadd.f32 %v4046, %v4146
      %4148 = vmatprep.mubr.f32.mxu0 0.0
      %4149 = vmatmul.mubr.f32.gmra.mxu0 %v4067
      %v4150 = vpop.f32.mrf.mxu0
      %v4151 = vadd.f32 %v4050, %v4150
      %v4152 = vpop.f32.mrf.mxu0
      %v4153 = vadd.f32 %v4052, %v4152
      %4154 = vmatprep.mubr.f32.mxu0 0.0
      %4155 = vmatmul.mubr.f32.gmra.mxu0 %v4070
      %v4156 = vpop.f32.mrf.mxu0
      %v4157 = vadd.f32 %v4056, %v4156
      %v4158 = vpop.f32.mrf.mxu0
      %v4159 = vadd.f32 %v4058, %v4158
      %4160 = vdwg.mxu0
      %v4169 = vrot.slane %v4139, 7
      %v4170 = vrot.slane %v4141, 7
      %v4171 = vrot.slane %v4145, 7
      %v4172 = vsel %vm641, %v4169, %v4171
      %v4173 = vrot.slane %v4147, 7
      %v4174 = vsel %vm641, %v4170, %v4173
      %v4175 = vrot.slane %v4151, 7
      %v4176 = vsel %vm641, %v4171, %v4175
      %v4177 = vrot.slane %v4153, 7
      %v4178 = vsel %vm641, %v4173, %v4177
      %v4179 = vrot.slane %v4157, 7
      %v4180 = vsel %vm641, %v4175, %v4179
      %v4181 = vrot.slane %v4159, 7
      %v4182 = vsel %vm641, %v4177, %v4181
      %4183 = vrot.lane.b32.xlu0 %v4169, 8
      %v4184 = vpop.permute.xlu0 %4183
      %4185 = vrot.lane.b32.xlu0 %v4170, 8
      %v4186 = vpop.permute.xlu0 %4185
      %4187 = vrot.lane.b32.xlu0 %v4172, 8
      %v4188 = vpop.permute.xlu0 %4187
      %4189 = vrot.lane.b32.xlu0 %v4174, 8
      %v4190 = vpop.permute.xlu0 %4189
      %4191 = vrot.lane.b32.xlu0 %v4176, 8
      %v4192 = vpop.permute.xlu0 %4191
      %4193 = vrot.lane.b32.xlu0 %v4178, 8
      %v4194 = vpop.permute.xlu0 %4193
      %4195 = vrot.lane.b32.xlu0 %v4180, 8
      %v4196 = vpop.permute.xlu0 %4195
      %4197 = vrot.lane.b32.xlu0 %v4182, 8
      %v4198 = vpop.permute.xlu0 %4197
      %4199 = vrot.lane.b32.xlu0 %v4179, 8
      %v4200 = vpop.permute.xlu0 %4199
      %4201 = vrot.lane.b32.xlu0 %v4181, 8
      %v4202 = vpop.permute.xlu0 %4201
      %v4203 = vsel %vm660, %v4184, %v4186
      %v4204 = vsel %vm660, %v4188, %v4190
      %v4205 = vsel %vm660, %v4192, %v4194
      %v4206 = vsel %vm660, %v4196, %v4198
      %v4207 = vsel %vm660, %v4200, %v4202
      %4223 = vst.msk [vmem:[#allocation4] sm:$0xfe] %vm654, %v4184
      %4224 = vst [vmem:[#allocation4 + $0x8] sm:$0xfe] %v4203
      %4225 = vst.msk [vmem:[#allocation4 + $0x10] sm:$0xfe] %vm656, %v4186
      %4226 = vst.msk [vmem:[#allocation4 + $0x18] sm:$0xff] %vm658, %v4188
      %4227 = vst [vmem:[#allocation4 + $0x20] sm:$0xff] %v4204
      %4228 = vst.msk [vmem:[#allocation4 + $0x28] sm:$0xff] %vm660, %v4190
      %4229 = vst.msk [vmem:[#allocation4 + $0x30] sm:$0xff] %vm658, %v4192
      %4230 = vst [vmem:[#allocation4 + $0x38] sm:$0xff] %v4205
      %4231 = vst.msk [vmem:[#allocation4 + $0x40] sm:$0xff] %vm660, %v4194
      %4232 = vst.msk [vmem:[#allocation4 + $0x48] sm:$0xff] %vm658, %v4196
      %4233 = vst [vmem:[#allocation4 + $0x50] sm:$0xff] %v4206
      %4234 = vst.msk [vmem:[#allocation4 + $0x58] sm:$0xff] %vm660, %v4198
      %4235 = vst.msk [vmem:[#allocation4 + $0x60] sm:$0x1] %vm662, %v4200
      %4236 = vst [vmem:[#allocation4 + $0x68] sm:$0x1] %v4207
      %4237 = vst.msk [vmem:[#allocation4 + $0x70] sm:$0x1] %vm664, %v4202
      %v4238 = vld [vmem:[%s9] sm:$0x1]
      %v4239 = vld [vmem:[#allocation4] sm:$0xff]
      %v4240 = vld [vmem:[#allocation4 + $0x8] sm:$0xff]
      %v4241 = vld [vmem:[#allocation4 + $0x10] sm:$0xff]
      %v4242 = vld [vmem:[#allocation4 + $0x18] sm:$0xff]
      %v4243 = vld [vmem:[#allocation4 + $0x20] sm:$0xff]
      %v4244 = vld [vmem:[#allocation4 + $0x28] sm:$0xff]
      %v4245 = vld [vmem:[#allocation4 + $0x30] sm:$0xff]
      %v4246 = vld [vmem:[#allocation4 + $0x38] sm:$0xff]
      %v4247 = vld [vmem:[#allocation4 + $0x40] sm:$0xff]
      %v4248 = vld [vmem:[#allocation4 + $0x48] sm:$0xff]
      %v4249 = vld [vmem:[#allocation4 + $0x50] sm:$0xff]
      %v4250 = vld [vmem:[#allocation4 + $0x58] sm:$0xff]
      %v4251 = vpack.c.bf16 %v4242, %v4239
      %v4252 = vpack.c.bf16 %v4243, %v4240
      %v4253 = vpack.c.bf16 %v4244, %v4241
      %v4254 = vpack.c.bf16 %v4248, %v4245
      %v4255 = vpack.c.bf16 %v4249, %v4246
      %v4256 = vpack.c.bf16 %v4250, %v4247
      %v4257 = vld [vmem:[%s8] sm:$0xf]
      %v4258 = vld [vmem:[%s8 + $0x4] sm:$0xf]
      %v4259 = vld [vmem:[%s8 + $0x8] sm:$0xf]
      %v4260 = vld [vmem:[%s8 + $0xc] sm:$0xf]
      %v4261 = vld [vmem:[%s8 + $0x10] sm:$0xf]
      %v4262 = vld [vmem:[%s8 + $0x14] sm:$0xf]
      %v4263 = vld [vmem:[%s8 + $0x18] sm:$0xf]
      %v4264 = vld [vmem:[%s8 + $0x1c] sm:$0xf]
      %v4265 = vld [vmem:[%s8 + $0x20] sm:$0xf]
      %v4266 = vld [vmem:[%s8 + $0x24] sm:$0xf]
      %v4267 = vld [vmem:[%s8 + $0x28] sm:$0xf]
      %v4268 = vld [vmem:[%s8 + $0x2c] sm:$0xf]
      %v4269 = vld [vmem:[%s8 + $0x30] sm:$0xf]
      %v4270 = vld [vmem:[%s8 + $0x34] sm:$0xf]
      %v4271 = vld [vmem:[%s8 + $0x38] sm:$0xf]
      %v4272 = vld [vmem:[%s8 + $0x3c] sm:$0xf]
      %v4273 = vld [vmem:[%s8 + $0x40] sm:$0xf]
      %v4274 = vld [vmem:[%s8 + $0x44] sm:$0xf]
      %v4275 = vld [vmem:[%s8 + $0x48] sm:$0xf]
      %v4276 = vld [vmem:[%s8 + $0x4c] sm:$0xf]
      %v4277 = vld [vmem:[%s8 + $0x50] sm:$0xf]
      %v4278 = vld [vmem:[%s8 + $0x54] sm:$0xf]
      %v4279 = vld [vmem:[%s8 + $0x58] sm:$0xf]
      %v4280 = vld [vmem:[%s8 + $0x5c] sm:$0xf]
      %v4281 = vld [vmem:[%s8 + $0x60] sm:$0xf]
      %v4282 = vld [vmem:[%s8 + $0x64] sm:$0xf]
      %v4283 = vld [vmem:[%s8 + $0x68] sm:$0xf]
      %v4284 = vld [vmem:[%s8 + $0x6c] sm:$0xf]
      %v4285 = vld [vmem:[%s8 + $0x70] sm:$0xf]
      %v4286 = vld [vmem:[%s8 + $0x74] sm:$0xf]
      %v4287 = vld [vmem:[%s8 + $0x78] sm:$0xf]
      %v4288 = vld [vmem:[%s8 + $0x7c] sm:$0xf]
      %v4289 = vld [vmem:[%s8 + $0x80] sm:$0xf]
      %v4290 = vld [vmem:[%s8 + $0x84] sm:$0xf]
      %v4291 = vld [vmem:[#allocation4] sm:$0xfe]
      %v4292 = vld [vmem:[#allocation4 + $0x8] sm:$0xfe]
      %v4293 = vld [vmem:[#allocation4 + $0x10] sm:$0xfe]
      %v4294 = vld [vmem:[#allocation4 + $0x60] sm:$0x1]
      %v4295 = vld [vmem:[#allocation4 + $0x68] sm:$0x1]
      %v4296 = vld [vmem:[#allocation4 + $0x70] sm:$0x1]
      %v4297 = vpack.c.bf16 %v4242, %v4291
      %v4298 = vpack.c.bf16 %v4243, %v4292
      %v4299 = vpack.c.bf16 %v4244, %v4293
      %v4300 = vpack.c.bf16 %v4294, %v4294
      %v4301 = vpack.c.bf16 %v4295, %v4295
      %v4302 = vpack.c.bf16 %v4296, %v4296
      %s4303 = scalar_lea.vmem %s8, 136
      %v4304 = vld [vmem:[%s4303] sm:$0xf]
      %v4305 = vld [vmem:[%s4303 + $0x4] sm:$0xf]
      %v4306 = vld [vmem:[%s4303 + $0x8] sm:$0xf]
      %v4307 = vld [vmem:[%s4303 + $0xc] sm:$0xf]
      %v4308 = vld [vmem:[%s4303 + $0x10] sm:$0xf]
      %v4309 = vld [vmem:[%s4303 + $0x14] sm:$0xf]
      %v4310 = vld [vmem:[%s4303 + $0x18] sm:$0xf]
      %v4311 = vld [vmem:[%s4303 + $0x1c] sm:$0xf]
      %v4312 = vld [vmem:[%s4303 + $0x20] sm:$0xf]
      %v4313 = vld [vmem:[%s4303 + $0x24] sm:$0xf]
      %v4314 = vld [vmem:[%s4303 + $0x28] sm:$0xf]
      %v4315 = vld [vmem:[%s4303 + $0x2c] sm:$0xf]
      %v4316 = vld [vmem:[%s4303 + $0x30] sm:$0xf]
      %v4317 = vld [vmem:[%s4303 + $0x34] sm:$0xf]
      %v4318 = vld [vmem:[%s4303 + $0x38] sm:$0xf]
      %v4319 = vld [vmem:[%s4303 + $0x3c] sm:$0xf]
      %v4320 = vld [vmem:[%s4303 + $0x40] sm:$0xf]
      %v4321 = vld [vmem:[%s4303 + $0x44] sm:$0xf]
      %v4322 = vld [vmem:[%s4303 + $0x48] sm:$0xf]
      %v4323 = vld [vmem:[%s4303 + $0x4c] sm:$0xf]
      %v4324 = vld [vmem:[%s4303 + $0x50] sm:$0xf]
      %v4325 = vld [vmem:[%s4303 + $0x54] sm:$0xf]
      %v4326 = vld [vmem:[%s4303 + $0x58] sm:$0xf]
      %v4327 = vld [vmem:[%s4303 + $0x5c] sm:$0xf]
      %v4328 = vld [vmem:[%s4303 + $0x60] sm:$0xf]
      %v4329 = vld [vmem:[%s4303 + $0x64] sm:$0xf]
      %v4330 = vld [vmem:[%s4303 + $0x68] sm:$0xf]
      %v4331 = vld [vmem:[%s4303 + $0x6c] sm:$0xf]
      %v4332 = vld [vmem:[%s4303 + $0x70] sm:$0xf]
      %v4333 = vld [vmem:[%s4303 + $0x74] sm:$0xf]
      %v4334 = vld [vmem:[%s4303 + $0x78] sm:$0xf]
      %v4335 = vld [vmem:[%s4303 + $0x7c] sm:$0xf]
      %v4336 = vld [vmem:[%s4303 + $0x80] sm:$0xf]
      %v4337 = vld [vmem:[%s4303 + $0x84] sm:$0xf]
      %v4339 = vshrl.u32 %v4297, 16
      %v4341 = vshll.u32 %v4297, 16
      %v4343 = vrot.slane %v4341, 1
      %v4344 = vor.u32 %v4339, %v4343
      %v4346 = vshll.u32 %v4254, 16
      %v4348 = vrot.slane %v4346, 1
      %v4349 = vsel %vm718, %v4344, %v4348
      %v4351 = vshrl.u32 %v4298, 16
      %v4353 = vshll.u32 %v4298, 16
      %v4355 = vrot.slane %v4353, 1
      %v4356 = vor.u32 %v4351, %v4355
      %v4358 = vshll.u32 %v4255, 16
      %v4360 = vrot.slane %v4358, 1
      %v4361 = vsel %vm718, %v4356, %v4360
      %v4363 = vshrl.u32 %v4299, 16
      %v4365 = vshll.u32 %v4299, 16
      %v4367 = vrot.slane %v4365, 1
      %v4368 = vor.u32 %v4363, %v4367
      %v4370 = vshll.u32 %v4256, 16
      %v4372 = vrot.slane %v4370, 1
      %v4373 = vsel %vm718, %v4368, %v4372
      %v4374 = vshrl.u32 %v4254, 16
      %v4376 = vor.u32 %v4374, %v4348
      %v4378 = vshll.u32 %v4300, 16
      %v4380 = vrot.slane %v4378, 1
      %v4381 = vsel %vm718, %v4376, %v4380
      %v4382 = vshrl.u32 %v4255, 16
      %v4384 = vor.u32 %v4382, %v4360
      %v4386 = vshll.u32 %v4301, 16
      %v4388 = vrot.slane %v4386, 1
      %v4389 = vsel %vm718, %v4384, %v4388
      %v4390 = vshrl.u32 %v4256, 16
      %v4392 = vor.u32 %v4390, %v4372
      %v4394 = vshll.u32 %v4302, 16
      %v4396 = vrot.slane %v4394, 1
      %v4397 = vsel %vm718, %v4392, %v4396
      %v4436 = vunpack.c.l.b16 %v4304
      %v4437 = vunpack.c.l.b16 %v4305
      %v4438 = vunpack.c.l.b16 %v4306
      %v4439 = vunpack.c.l.b16 %v4307
      %v4440 = vunpack.c.l.b16 %v4308
      %v4441 = vunpack.c.l.b16 %v4309
      %v4442 = vunpack.c.l.b16 %v4310
      %v4443 = vunpack.c.l.b16 %v4311
      %v4444 = vunpack.c.l.b16 %v4312
      %v4445 = vunpack.c.l.b16 %v4313
      %v4446 = vunpack.c.l.b16 %v4314
      %v4447 = vunpack.c.l.b16 %v4315
      %v4448 = vunpack.c.l.b16 %v4316
      %v4449 = vunpack.c.l.b16 %v4317
      %v4450 = vunpack.c.l.b16 %v4318
      %v4451 = vunpack.c.l.b16 %v4319
      %v4452 = vunpack.c.l.b16 %v4320
      %v4453 = vunpack.c.l.b16 %v4321
      %v4454 = vunpack.c.l.b16 %v4322
      %v4455 = vunpack.c.l.b16 %v4323
      %v4456 = vunpack.c.l.b16 %v4324
      %v4457 = vunpack.c.l.b16 %v4325
      %v4458 = vunpack.c.l.b16 %v4326
      %v4459 = vunpack.c.l.b16 %v4327
      %v4460 = vunpack.c.l.b16 %v4328
      %v4461 = vunpack.c.l.b16 %v4329
      %v4462 = vunpack.c.l.b16 %v4330
      %v4463 = vunpack.c.l.b16 %v4331
      %v4464 = vunpack.c.l.b16 %v4332
      %v4465 = vunpack.c.l.b16 %v4333
      %v4466 = vunpack.c.l.b16 %v4334
      %v4467 = vunpack.c.l.b16 %v4335
      %v4468 = vunpack.c.l.b16 %v4336
      %v4469 = vunpack.c.l.b16 %v4337
      %v4470 = vpack.c.b16 %v4437, %v4436
      %v4471 = vpack.c.b16 %v4439, %v4438
      %v4472 = vpack.c.b16 %v4441, %v4440
      %v4473 = vpack.c.b16 %v4443, %v4442
      %v4474 = vpack.c.b16 %v4445, %v4444
      %v4475 = vpack.c.b16 %v4447, %v4446
      %v4476 = vpack.c.b16 %v4449, %v4448
      %v4477 = vpack.c.b16 %v4451, %v4450
      %v4478 = vpack.c.b16 %v4453, %v4452
      %v4479 = vpack.c.b16 %v4455, %v4454
      %v4480 = vpack.c.b16 %v4457, %v4456
      %v4481 = vpack.c.b16 %v4459, %v4458
      %v4482 = vpack.c.b16 %v4461, %v4460
      %v4483 = vpack.c.b16 %v4463, %v4462
      %v4484 = vpack.c.b16 %v4465, %v4464
      %v4485 = vpack.c.b16 %v4467, %v4466
      %v4486 = vpack.c.b16 %v4469, %v4468
      %v4505 = vsel %vm362, %v4373, 0
      %v4508 = vsel %vm362, %v4397, 0
      %4510 = vmatprep.subr.bf16.mxu0 0
      %4511 = vmatpush1.bf16.msra.mxu0 %v4477
      %4512 = vmatprep.subr.bf16.mxu0 0
      %4513 = vmatpush1.bf16.msra.mxu0 %v4476
      %4514 = vmatprep.subr.bf16.mxu0 0
      %4515 = vmatpush1.bf16.msra.mxu0 %v4475
      %4516 = vmatprep.subr.bf16.mxu0 0
      %4517 = vmatpush1.bf16.msra.mxu0 %v4474
      %4518 = vmatprep.subr.bf16.mxu0 0
      %4519 = vmatpush1.bf16.msra.mxu0 %v4473
      %4520 = vmatprep.subr.bf16.mxu0 0
      %4521 = vmatpush1.bf16.msra.mxu0 %v4472
      %4522 = vmatprep.subr.bf16.mxu0 0
      %4523 = vmatpush1.bf16.msra.mxu0 %v4471
      %4524 = vmatprep.subr.bf16.mxu0 0
      %4525 = vmatpush1.bf16.msra.mxu0 %v4470
      %4526 = vmatprep.subr.bf16.mxu0 0
      %4527 = vmatpush2.bf16.msra.mxu0 %v4485
      %4528 = vmatprep.subr.bf16.mxu0 0
      %4529 = vmatpush2.bf16.msra.mxu0 %v4484
      %4530 = vmatprep.subr.bf16.mxu0 0
      %4531 = vmatpush2.bf16.msra.mxu0 %v4483
      %4532 = vmatprep.subr.bf16.mxu0 0
      %4533 = vmatpush2.bf16.msra.mxu0 %v4482
      %4534 = vmatprep.subr.bf16.mxu0 0
      %4535 = vmatpush2.bf16.msra.mxu0 %v4481
      %4536 = vmatprep.subr.bf16.mxu0 0
      %4537 = vmatpush2.bf16.msra.mxu0 %v4480
      %4538 = vmatprep.subr.bf16.mxu0 0
      %4539 = vmatpush2.bf16.msra.mxu0 %v4479
      %4540 = vmatprep.subr.bf16.mxu0 0
      %4541 = vmatpush2.bf16.msra.mxu0 %v4478
      %4542 = vmatprep.mubr.bf16.mxu0 %v4361
      %4543 = vmatmul.mubr.bf16.gmra.mxu0 %v4349
      %v4544 = vpop.f32.mrf.mxu0
      %v4545 = vadd.f32 0.0, %v4544
      %v4546 = vpop.f32.mrf.mxu0
      %v4547 = vpop.f32.mrf.mxu0
      %v4548 = vadd.f32 0.0, %v4547
      %v4549 = vpop.f32.mrf.mxu0
      %4550 = vmatprep.mubr.bf16.mxu0 %v4389
      %4551 = vmatmul.mubr.bf16.gmra.mxu0 %v4381
      %v4552 = vpop.f32.mrf.mxu0
      %v4553 = vadd.f32 0.0, %v4552
      %v4554 = vpop.f32.mrf.mxu0
      %v4555 = vpop.f32.mrf.mxu0
      %v4556 = vadd.f32 0.0, %v4555
      %v4557 = vpop.f32.mrf.mxu0
      %4558 = vdwg.mxu0
      %4559 = vmatprep.subr.bf16.mxu0 0
      %4560 = vmatpush1.bf16.msra.mxu0 0
      %4561 = vmatprep.subr.bf16.mxu0 0
      %4562 = vmatpush1.bf16.msra.mxu0 0
      %4563 = vmatprep.subr.bf16.mxu0 0
      %4564 = vmatpush1.bf16.msra.mxu0 0
      %4565 = vmatprep.subr.bf16.mxu0 0
      %4566 = vmatpush1.bf16.msra.mxu0 0
      %4567 = vmatprep.subr.bf16.mxu0 0
      %4568 = vmatpush1.bf16.msra.mxu0 0
      %4569 = vmatprep.subr.bf16.mxu0 0
      %4570 = vmatpush1.bf16.msra.mxu0 0
      %4571 = vmatprep.subr.bf16.mxu0 0
      %4572 = vmatpush1.bf16.msra.mxu0 0
      %4573 = vmatprep.subr.bf16.mxu0 0
      %4574 = vmatpush1.bf16.msra.mxu0 %v4486
      %4575 = vmatprep.subr.bf16.mxu0 0
      %4576 = vmatpush2.bf16.msra.mxu0 0
      %4577 = vmatprep.subr.bf16.mxu0 0
      %4578 = vmatpush2.bf16.msra.mxu0 0
      %4579 = vmatprep.subr.bf16.mxu0 0
      %4580 = vmatpush2.bf16.msra.mxu0 0
      %4581 = vmatprep.subr.bf16.mxu0 0
      %4582 = vmatpush2.bf16.msra.mxu0 0
      %4583 = vmatprep.subr.bf16.mxu0 0
      %4584 = vmatpush2.bf16.msra.mxu0 0
      %4585 = vmatprep.subr.bf16.mxu0 0
      %4586 = vmatpush2.bf16.msra.mxu0 0
      %4587 = vmatprep.subr.bf16.mxu0 0
      %4588 = vmatpush2.bf16.msra.mxu0 0
      %4589 = vmatprep.subr.bf16.mxu0 0
      %4590 = vmatpush2.bf16.msra.mxu0 0
      %4591 = vmatprep.mubr.bf16.mxu0 0
      %4592 = vmatmul.mubr.bf16.gmra.mxu0 %v4505
      %v4593 = vpop.f32.mrf.mxu0
      %v4594 = vadd.f32 %v4545, %v4593
      %v4595 = vpop.f32.mrf.mxu0
      %v4596 = vpop.f32.mrf.mxu0
      %v4597 = vadd.f32 %v4548, %v4596
      %v4598 = vpop.f32.mrf.mxu0
      %4599 = vmatprep.mubr.bf16.mxu0 0
      %4600 = vmatmul.mubr.bf16.gmra.mxu0 %v4508
      %v4601 = vpop.f32.mrf.mxu0
      %v4602 = vadd.f32 %v4553, %v4601
      %v4603 = vpop.f32.mrf.mxu0
      %v4604 = vpop.f32.mrf.mxu0
      %v4605 = vadd.f32 %v4556, %v4604
      %v4606 = vpop.f32.mrf.mxu0
      %4607 = vdwg.mxu0
      %v4642 = vunpack.c.l.b16 %v4257
      %v4643 = vunpack.c.l.b16 %v4258
      %v4644 = vunpack.c.l.b16 %v4259
      %v4645 = vunpack.c.l.b16 %v4260
      %v4646 = vunpack.c.l.b16 %v4261
      %v4647 = vunpack.c.l.b16 %v4262
      %v4648 = vunpack.c.l.b16 %v4263
      %v4649 = vunpack.c.l.b16 %v4264
      %v4650 = vunpack.c.l.b16 %v4265
      %v4651 = vunpack.c.l.b16 %v4266
      %v4652 = vunpack.c.l.b16 %v4267
      %v4653 = vunpack.c.l.b16 %v4268
      %v4654 = vunpack.c.l.b16 %v4269
      %v4655 = vunpack.c.l.b16 %v4270
      %v4656 = vunpack.c.l.b16 %v4271
      %v4657 = vunpack.c.l.b16 %v4272
      %v4658 = vunpack.c.l.b16 %v4273
      %v4659 = vunpack.c.l.b16 %v4274
      %v4660 = vunpack.c.l.b16 %v4275
      %v4661 = vunpack.c.l.b16 %v4276
      %v4662 = vunpack.c.l.b16 %v4277
      %v4663 = vunpack.c.l.b16 %v4278
      %v4664 = vunpack.c.l.b16 %v4279
      %v4665 = vunpack.c.l.b16 %v4280
      %v4666 = vunpack.c.l.b16 %v4281
      %v4667 = vunpack.c.l.b16 %v4282
      %v4668 = vunpack.c.l.b16 %v4283
      %v4669 = vunpack.c.l.b16 %v4284
      %v4670 = vunpack.c.l.b16 %v4285
      %v4671 = vunpack.c.l.b16 %v4286
      %v4672 = vunpack.c.l.b16 %v4287
      %v4673 = vunpack.c.l.b16 %v4288
      %v4674 = vunpack.c.l.b16 %v4289
      %v4675 = vunpack.c.l.b16 %v4290
      %v4676 = vpack.c.b16 %v4643, %v4642
      %v4677 = vpack.c.b16 %v4645, %v4644
      %v4678 = vpack.c.b16 %v4647, %v4646
      %v4679 = vpack.c.b16 %v4649, %v4648
      %v4680 = vpack.c.b16 %v4651, %v4650
      %v4681 = vpack.c.b16 %v4653, %v4652
      %v4682 = vpack.c.b16 %v4655, %v4654
      %v4683 = vpack.c.b16 %v4657, %v4656
      %v4684 = vpack.c.b16 %v4659, %v4658
      %v4685 = vpack.c.b16 %v4661, %v4660
      %v4686 = vpack.c.b16 %v4663, %v4662
      %v4687 = vpack.c.b16 %v4665, %v4664
      %v4688 = vpack.c.b16 %v4667, %v4666
      %v4689 = vpack.c.b16 %v4669, %v4668
      %v4690 = vpack.c.b16 %v4671, %v4670
      %v4691 = vpack.c.b16 %v4673, %v4672
      %v4692 = vpack.c.b16 %v4675, %v4674
      %v4711 = vsel %vm362, %v4253, 0
      %v4713 = vsel %vm362, %v4256, 0
      %4715 = vmatprep.subr.bf16.mxu0 0
      %4716 = vmatpush1.bf16.msra.mxu0 %v4683
      %4717 = vmatprep.subr.bf16.mxu0 0
      %4718 = vmatpush1.bf16.msra.mxu0 %v4682
      %4719 = vmatprep.subr.bf16.mxu0 0
      %4720 = vmatpush1.bf16.msra.mxu0 %v4681
      %4721 = vmatprep.subr.bf16.mxu0 0
      %4722 = vmatpush1.bf16.msra.mxu0 %v4680
      %4723 = vmatprep.subr.bf16.mxu0 0
      %4724 = vmatpush1.bf16.msra.mxu0 %v4679
      %4725 = vmatprep.subr.bf16.mxu0 0
      %4726 = vmatpush1.bf16.msra.mxu0 %v4678
      %4727 = vmatprep.subr.bf16.mxu0 0
      %4728 = vmatpush1.bf16.msra.mxu0 %v4677
      %4729 = vmatprep.subr.bf16.mxu0 0
      %4730 = vmatpush1.bf16.msra.mxu0 %v4676
      %4731 = vmatprep.subr.bf16.mxu0 0
      %4732 = vmatpush2.bf16.msra.mxu0 %v4691
      %4733 = vmatprep.subr.bf16.mxu0 0
      %4734 = vmatpush2.bf16.msra.mxu0 %v4690
      %4735 = vmatprep.subr.bf16.mxu0 0
      %4736 = vmatpush2.bf16.msra.mxu0 %v4689
      %4737 = vmatprep.subr.bf16.mxu0 0
      %4738 = vmatpush2.bf16.msra.mxu0 %v4688
      %4739 = vmatprep.subr.bf16.mxu0 0
      %4740 = vmatpush2.bf16.msra.mxu0 %v4687
      %4741 = vmatprep.subr.bf16.mxu0 0
      %4742 = vmatpush2.bf16.msra.mxu0 %v4686
      %4743 = vmatprep.subr.bf16.mxu0 0
      %4744 = vmatpush2.bf16.msra.mxu0 %v4685
      %4745 = vmatprep.subr.bf16.mxu0 0
      %4746 = vmatpush2.bf16.msra.mxu0 %v4684
      %4747 = vmatprep.mubr.bf16.mxu0 %v4252
      %4748 = vmatmul.mubr.bf16.gmra.mxu0 %v4251
      %v4749 = vpop.f32.mrf.mxu0
      %v4750 = vadd.f32 %v4594, %v4749
      %v4751 = vpop.f32.mrf.mxu0
      %v4752 = vpop.f32.mrf.mxu0
      %v4753 = vadd.f32 %v4597, %v4752
      %v4754 = vpop.f32.mrf.mxu0
      %4755 = vmatprep.mubr.bf16.mxu0 %v4255
      %4756 = vmatmul.mubr.bf16.gmra.mxu0 %v4254
      %v4757 = vpop.f32.mrf.mxu0
      %v4758 = vadd.f32 %v4602, %v4757
      %v4759 = vpop.f32.mrf.mxu0
      %v4760 = vpop.f32.mrf.mxu0
      %v4761 = vadd.f32 %v4605, %v4760
      %v4762 = vpop.f32.mrf.mxu0
      %4763 = vdwg.mxu0
      %4764 = vmatprep.subr.bf16.mxu0 0
      %4765 = vmatpush1.bf16.msra.mxu0 0
      %4766 = vmatprep.subr.bf16.mxu0 0
      %4767 = vmatpush1.bf16.msra.mxu0 0
      %4768 = vmatprep.subr.bf16.mxu0 0
      %4769 = vmatpush1.bf16.msra.mxu0 0
      %4770 = vmatprep.subr.bf16.mxu0 0
      %4771 = vmatpush1.bf16.msra.mxu0 0
      %4772 = vmatprep.subr.bf16.mxu0 0
      %4773 = vmatpush1.bf16.msra.mxu0 0
      %4774 = vmatprep.subr.bf16.mxu0 0
      %4775 = vmatpush1.bf16.msra.mxu0 0
      %4776 = vmatprep.subr.bf16.mxu0 0
      %4777 = vmatpush1.bf16.msra.mxu0 0
      %4778 = vmatprep.subr.bf16.mxu0 0
      %4779 = vmatpush1.bf16.msra.mxu0 %v4692
      %4780 = vmatprep.subr.bf16.mxu0 0
      %4781 = vmatpush2.bf16.msra.mxu0 0
      %4782 = vmatprep.subr.bf16.mxu0 0
      %4783 = vmatpush2.bf16.msra.mxu0 0
      %4784 = vmatprep.subr.bf16.mxu0 0
      %4785 = vmatpush2.bf16.msra.mxu0 0
      %4786 = vmatprep.subr.bf16.mxu0 0
      %4787 = vmatpush2.bf16.msra.mxu0 0
      %4788 = vmatprep.subr.bf16.mxu0 0
      %4789 = vmatpush2.bf16.msra.mxu0 0
      %4790 = vmatprep.subr.bf16.mxu0 0
      %4791 = vmatpush2.bf16.msra.mxu0 0
      %4792 = vmatprep.subr.bf16.mxu0 0
      %4793 = vmatpush2.bf16.msra.mxu0 0
      %4794 = vmatprep.subr.bf16.mxu0 0
      %4795 = vmatpush2.bf16.msra.mxu0 0
      %4796 = vmatprep.mubr.bf16.mxu0 0
      %4797 = vmatmul.mubr.bf16.gmra.mxu0 %v4711
      %v4798 = vpop.f32.mrf.mxu0
      %v4799 = vadd.f32 %v4750, %v4798
      %v4800 = vpop.f32.mrf.mxu0
      %v4801 = vpop.f32.mrf.mxu0
      %v4802 = vadd.f32 %v4753, %v4801
      %v4803 = vpop.f32.mrf.mxu0
      %4804 = vmatprep.mubr.bf16.mxu0 0
      %4805 = vmatmul.mubr.bf16.gmra.mxu0 %v4713
      %v4806 = vpop.f32.mrf.mxu0
      %v4807 = vadd.f32 %v4758, %v4806
      %v4808 = vpop.f32.mrf.mxu0
      %v4809 = vpop.f32.mrf.mxu0
      %v4810 = vadd.f32 %v4761, %v4809
      %v4811 = vpop.f32.mrf.mxu0
      %4812 = vdwg.mxu0
      %v4813 = vld [vmem:[#allocation4] sm:$0xfc]
      %v4814 = vld [vmem:[#allocation4 + $0x8] sm:$0xfc]
      %v4815 = vld [vmem:[#allocation4 + $0x10] sm:$0xfc]
      %v4816 = vld [vmem:[#allocation4 + $0x60] sm:$0x3]
      %v4817 = vld [vmem:[#allocation4 + $0x68] sm:$0x3]
      %v4818 = vld [vmem:[#allocation4 + $0x70] sm:$0x3]
      %v4819 = vpack.c.bf16 %v4242, %v4813
      %v4820 = vpack.c.bf16 %v4243, %v4814
      %v4821 = vpack.c.bf16 %v4244, %v4815
      %v4822 = vpack.c.bf16 %v4816, %v4816
      %v4823 = vpack.c.bf16 %v4817, %v4817
      %v4824 = vpack.c.bf16 %v4818, %v4818
      %s4825 = scalar_lea.vmem %s8, 272
      %v4826 = vld [vmem:[%s4825] sm:$0xf]
      %v4827 = vld [vmem:[%s4825 + $0x4] sm:$0xf]
      %v4828 = vld [vmem:[%s4825 + $0x8] sm:$0xf]
      %v4829 = vld [vmem:[%s4825 + $0xc] sm:$0xf]
      %v4830 = vld [vmem:[%s4825 + $0x10] sm:$0xf]
      %v4831 = vld [vmem:[%s4825 + $0x14] sm:$0xf]
      %v4832 = vld [vmem:[%s4825 + $0x18] sm:$0xf]
      %v4833 = vld [vmem:[%s4825 + $0x1c] sm:$0xf]
      %v4834 = vld [vmem:[%s4825 + $0x20] sm:$0xf]
      %v4835 = vld [vmem:[%s4825 + $0x24] sm:$0xf]
      %v4836 = vld [vmem:[%s4825 + $0x28] sm:$0xf]
      %v4837 = vld [vmem:[%s4825 + $0x2c] sm:$0xf]
      %v4838 = vld [vmem:[%s4825 + $0x30] sm:$0xf]
      %v4839 = vld [vmem:[%s4825 + $0x34] sm:$0xf]
      %v4840 = vld [vmem:[%s4825 + $0x38] sm:$0xf]
      %v4841 = vld [vmem:[%s4825 + $0x3c] sm:$0xf]
      %v4842 = vld [vmem:[%s4825 + $0x40] sm:$0xf]
      %v4843 = vld [vmem:[%s4825 + $0x44] sm:$0xf]
      %v4844 = vld [vmem:[%s4825 + $0x48] sm:$0xf]
      %v4845 = vld [vmem:[%s4825 + $0x4c] sm:$0xf]
      %v4846 = vld [vmem:[%s4825 + $0x50] sm:$0xf]
      %v4847 = vld [vmem:[%s4825 + $0x54] sm:$0xf]
      %v4848 = vld [vmem:[%s4825 + $0x58] sm:$0xf]
      %v4849 = vld [vmem:[%s4825 + $0x5c] sm:$0xf]
      %v4850 = vld [vmem:[%s4825 + $0x60] sm:$0xf]
      %v4851 = vld [vmem:[%s4825 + $0x64] sm:$0xf]
      %v4852 = vld [vmem:[%s4825 + $0x68] sm:$0xf]
      %v4853 = vld [vmem:[%s4825 + $0x6c] sm:$0xf]
      %v4854 = vld [vmem:[%s4825 + $0x70] sm:$0xf]
      %v4855 = vld [vmem:[%s4825 + $0x74] sm:$0xf]
      %v4856 = vld [vmem:[%s4825 + $0x78] sm:$0xf]
      %v4857 = vld [vmem:[%s4825 + $0x7c] sm:$0xf]
      %v4858 = vld [vmem:[%s4825 + $0x80] sm:$0xf]
      %v4859 = vld [vmem:[%s4825 + $0x84] sm:$0xf]
      %v4869 = vrot.slane %v4819, 1
      %v4870 = vrot.slane %v4254, 1
      %v4871 = vsel %vm971, %v4869, %v4870
      %v4872 = vrot.slane %v4820, 1
      %v4873 = vrot.slane %v4255, 1
      %v4874 = vsel %vm971, %v4872, %v4873
      %v4875 = vrot.slane %v4821, 1
      %v4876 = vrot.slane %v4256, 1
      %v4877 = vsel %vm971, %v4875, %v4876
      %v4878 = vrot.slane %v4822, 1
      %v4879 = vsel %vm971, %v4870, %v4878
      %v4880 = vrot.slane %v4823, 1
      %v4881 = vsel %vm971, %v4873, %v4880
      %v4882 = vrot.slane %v4824, 1
      %v4883 = vsel %vm971, %v4876, %v4882
      %v4922 = vunpack.c.l.b16 %v4826
      %v4923 = vunpack.c.l.b16 %v4827
      %v4924 = vunpack.c.l.b16 %v4828
      %v4925 = vunpack.c.l.b16 %v4829
      %v4926 = vunpack.c.l.b16 %v4830
      %v4927 = vunpack.c.l.b16 %v4831
      %v4928 = vunpack.c.l.b16 %v4832
      %v4929 = vunpack.c.l.b16 %v4833
      %v4930 = vunpack.c.l.b16 %v4834
      %v4931 = vunpack.c.l.b16 %v4835
      %v4932 = vunpack.c.l.b16 %v4836
      %v4933 = vunpack.c.l.b16 %v4837
      %v4934 = vunpack.c.l.b16 %v4838
      %v4935 = vunpack.c.l.b16 %v4839
      %v4936 = vunpack.c.l.b16 %v4840
      %v4937 = vunpack.c.l.b16 %v4841
      %v4938 = vunpack.c.l.b16 %v4842
      %v4939 = vunpack.c.l.b16 %v4843
      %v4940 = vunpack.c.l.b16 %v4844
      %v4941 = vunpack.c.l.b16 %v4845
      %v4942 = vunpack.c.l.b16 %v4846
      %v4943 = vunpack.c.l.b16 %v4847
      %v4944 = vunpack.c.l.b16 %v4848
      %v4945 = vunpack.c.l.b16 %v4849
      %v4946 = vunpack.c.l.b16 %v4850
      %v4947 = vunpack.c.l.b16 %v4851
      %v4948 = vunpack.c.l.b16 %v4852
      %v4949 = vunpack.c.l.b16 %v4853
      %v4950 = vunpack.c.l.b16 %v4854
      %v4951 = vunpack.c.l.b16 %v4855
      %v4952 = vunpack.c.l.b16 %v4856
      %v4953 = vunpack.c.l.b16 %v4857
      %v4954 = vunpack.c.l.b16 %v4858
      %v4955 = vunpack.c.l.b16 %v4859
      %v4956 = vpack.c.b16 %v4923, %v4922
      %v4957 = vpack.c.b16 %v4925, %v4924
      %v4958 = vpack.c.b16 %v4927, %v4926
      %v4959 = vpack.c.b16 %v4929, %v4928
      %v4960 = vpack.c.b16 %v4931, %v4930
      %v4961 = vpack.c.b16 %v4933, %v4932
      %v4962 = vpack.c.b16 %v4935, %v4934
      %v4963 = vpack.c.b16 %v4937, %v4936
      %v4964 = vpack.c.b16 %v4939, %v4938
      %v4965 = vpack.c.b16 %v4941, %v4940
      %v4966 = vpack.c.b16 %v4943, %v4942
      %v4967 = vpack.c.b16 %v4945, %v4944
      %v4968 = vpack.c.b16 %v4947, %v4946
      %v4969 = vpack.c.b16 %v4949, %v4948
      %v4970 = vpack.c.b16 %v4951, %v4950
      %v4971 = vpack.c.b16 %v4953, %v4952
      %v4972 = vpack.c.b16 %v4955, %v4954
      %v4991 = vsel %vm362, %v4877, 0
      %v4994 = vsel %vm362, %v4883, 0
      %4996 = vmatprep.subr.bf16.mxu0 0
      %4997 = vmatpush1.bf16.msra.mxu0 %v4963
      %4998 = vmatprep.subr.bf16.mxu0 0
      %4999 = vmatpush1.bf16.msra.mxu0 %v4962
      %5000 = vmatprep.subr.bf16.mxu0 0
      %5001 = vmatpush1.bf16.msra.mxu0 %v4961
      %5002 = vmatprep.subr.bf16.mxu0 0
      %5003 = vmatpush1.bf16.msra.mxu0 %v4960
      %5004 = vmatprep.subr.bf16.mxu0 0
      %5005 = vmatpush1.bf16.msra.mxu0 %v4959
      %5006 = vmatprep.subr.bf16.mxu0 0
      %5007 = vmatpush1.bf16.msra.mxu0 %v4958
      %5008 = vmatprep.subr.bf16.mxu0 0
      %5009 = vmatpush1.bf16.msra.mxu0 %v4957
      %5010 = vmatprep.subr.bf16.mxu0 0
      %5011 = vmatpush1.bf16.msra.mxu0 %v4956
      %5012 = vmatprep.subr.bf16.mxu0 0
      %5013 = vmatpush2.bf16.msra.mxu0 %v4971
      %5014 = vmatprep.subr.bf16.mxu0 0
      %5015 = vmatpush2.bf16.msra.mxu0 %v4970
      %5016 = vmatprep.subr.bf16.mxu0 0
      %5017 = vmatpush2.bf16.msra.mxu0 %v4969
      %5018 = vmatprep.subr.bf16.mxu0 0
      %5019 = vmatpush2.bf16.msra.mxu0 %v4968
      %5020 = vmatprep.subr.bf16.mxu0 0
      %5021 = vmatpush2.bf16.msra.mxu0 %v4967
      %5022 = vmatprep.subr.bf16.mxu0 0
      %5023 = vmatpush2.bf16.msra.mxu0 %v4966
      %5024 = vmatprep.subr.bf16.mxu0 0
      %5025 = vmatpush2.bf16.msra.mxu0 %v4965
      %5026 = vmatprep.subr.bf16.mxu0 0
      %5027 = vmatpush2.bf16.msra.mxu0 %v4964
      %5028 = vmatprep.mubr.bf16.mxu0 %v4874
      %5029 = vmatmul.mubr.bf16.gmra.mxu0 %v4871
      %v5030 = vpop.f32.mrf.mxu0
      %v5031 = vadd.f32 0.0, %v5030
      %v5032 = vpop.f32.mrf.mxu0
      %v5033 = vpop.f32.mrf.mxu0
      %v5034 = vadd.f32 0.0, %v5033
      %v5035 = vpop.f32.mrf.mxu0
      %5036 = vmatprep.mubr.bf16.mxu0 %v4881
      %5037 = vmatmul.mubr.bf16.gmra.mxu0 %v4879
      %v5038 = vpop.f32.mrf.mxu0
      %v5039 = vadd.f32 0.0, %v5038
      %v5040 = vpop.f32.mrf.mxu0
      %v5041 = vpop.f32.mrf.mxu0
      %v5042 = vadd.f32 0.0, %v5041
      %v5043 = vpop.f32.mrf.mxu0
      %5044 = vdwg.mxu0
      %5045 = vmatprep.subr.bf16.mxu0 0
      %5046 = vmatpush1.bf16.msra.mxu0 0
      %5047 = vmatprep.subr.bf16.mxu0 0
      %5048 = vmatpush1.bf16.msra.mxu0 0
      %5049 = vmatprep.subr.bf16.mxu0 0
      %5050 = vmatpush1.bf16.msra.mxu0 0
      %5051 = vmatprep.subr.bf16.mxu0 0
      %5052 = vmatpush1.bf16.msra.mxu0 0
      %5053 = vmatprep.subr.bf16.mxu0 0
      %5054 = vmatpush1.bf16.msra.mxu0 0
      %5055 = vmatprep.subr.bf16.mxu0 0
      %5056 = vmatpush1.bf16.msra.mxu0 0
      %5057 = vmatprep.subr.bf16.mxu0 0
      %5058 = vmatpush1.bf16.msra.mxu0 0
      %5059 = vmatprep.subr.bf16.mxu0 0
      %5060 = vmatpush1.bf16.msra.mxu0 %v4972
      %5061 = vmatprep.subr.bf16.mxu0 0
      %5062 = vmatpush2.bf16.msra.mxu0 0
      %5063 = vmatprep.subr.bf16.mxu0 0
      %5064 = vmatpush2.bf16.msra.mxu0 0
      %5065 = vmatprep.subr.bf16.mxu0 0
      %5066 = vmatpush2.bf16.msra.mxu0 0
      %5067 = vmatprep.subr.bf16.mxu0 0
      %5068 = vmatpush2.bf16.msra.mxu0 0
      %5069 = vmatprep.subr.bf16.mxu0 0
      %5070 = vmatpush2.bf16.msra.mxu0 0
      %5071 = vmatprep.subr.bf16.mxu0 0
      %5072 = vmatpush2.bf16.msra.mxu0 0
      %5073 = vmatprep.subr.bf16.mxu0 0
      %5074 = vmatpush2.bf16.msra.mxu0 0
      %5075 = vmatprep.subr.bf16.mxu0 0
      %5076 = vmatpush2.bf16.msra.mxu0 0
      %5077 = vmatprep.mubr.bf16.mxu0 0
      %5078 = vmatmul.mubr.bf16.gmra.mxu0 %v4991
      %v5079 = vpop.f32.mrf.mxu0
      %v5080 = vadd.f32 %v5031, %v5079
      %v5081 = vpop.f32.mrf.mxu0
      %v5082 = vpop.f32.mrf.mxu0
      %v5083 = vadd.f32 %v5034, %v5082
      %v5084 = vpop.f32.mrf.mxu0
      %5085 = vmatprep.mubr.bf16.mxu0 0
      %5086 = vmatmul.mubr.bf16.gmra.mxu0 %v4994
      %v5087 = vpop.f32.mrf.mxu0
      %v5088 = vadd.f32 %v5039, %v5087
      %v5089 = vpop.f32.mrf.mxu0
      %v5090 = vpop.f32.mrf.mxu0
      %v5091 = vadd.f32 %v5042, %v5090
      %v5092 = vpop.f32.mrf.mxu0
      %5093 = vdwg.mxu0
      %v5094 = vadd.f32 %v4799, %v5080
      %v5095 = vadd.f32 %v4802, %v5083
      %v5096 = vadd.f32 %v4807, %v5088
      %v5097 = vadd.f32 %v4810, %v5091
      %v5099 = vlaneseq
      %v5100 = vshrl.u32 %v5099, 7
      %v5101 = vsub.s32 0, %v5100
      %v5102 = vrot.slane %v4238, %v5101
      %v5104 = vadd.f32 %v5094, %v5102
      %v5105 = vadd.f32 %v5095, %v5102
      %v5106 = vadd.f32 %v5096, %v5102
      %v5107 = vadd.f32 %v5097, %v5102
      %vm5108 = vcmask 785408
      %5109 = vst.msk [vmem:[%s359] sm:$0xff] %vm5108, %v5104
      %5110 = vst.msk [vmem:[%s359 + $0x8] sm:$0xff] %vm5108, %v5105
      %5111 = vst.msk [vmem:[%s359 + $0x10] sm:$0xff] %vm5108, %v5106
      %5112 = vst.msk [vmem:[%s359 + $0x18] sm:$0xff] %vm5108, %v5107
      %p5113 = scmp.lt.s32.totalorder %s21, 1
      %s5114 = scalar_select %p5113, %s21, 1
      %s5115 = smul.addr %s5114, 4
      %s5116 = smul.addr %s5115, 8
      %s5117 = scalar_lea.vmem %s10, %s5116
      // Predicated region
      $region61: #{a_call__.1} parent=59 // pred_check
        %p5118 = pneg %p254
      $region62: #{a_call__.1} parent=59 // pred_check_branch
        %5120 = sbr.rel (%p5118) target = $region64
      $region63: #{a_call__.1} parent=59 // pred_region
        _
      $region64: #{a_call__.1} parent=59 // pred_fallthru
        _
    $region60: #{a_call__.1} parent=5 // pred_fallthru
      _
    %p5121 = scmp.le.s32.totalorder 2, %s16
    // Predicated region
    $region65: #{a_call__.1} parent=5 // pred_check
      %p5122 = pneg %p5121
    $region66: #{a_call__.1} parent=5 // pred_check_branch
      %5124 = sbr.rel (%p5122) target = $region68
    $region67: #{a_call__.1} parent=5 // pred_region
      %s5125 = ssub.s32 %s16, 2
      // Predicated region
      $region69: #{a_call__.1} parent=67 // pred_check
        %p5126 = pneg %p260
      $region70: #{a_call__.1} parent=67 // pred_check_branch
        %5128 = sbr.rel (%p5126) target = $region72
      $region71: #{a_call__.1} parent=67 // pred_region
        %p5129 = scmp.lt.s32.totalorder %s22, 1
        %s5130 = scalar_select %p5129, %s22, 1
        %s5131 = smul.addr %s5130, 4
        %s5132 = smul.addr %s5131, 8
        %s5133 = scalar_lea.vmem %s10, %s5132
      $region72: #{a_call__.1} parent=67 // pred_fallthru
        _
    $region68: #{a_call__.1} parent=5 // pred_fallthru
      _
  $region6: #{a_call__.1} parent=0 // loop_footer
    %s20 = sadd.s32 1, %s16
  $region7: #{a_call__.1} parent=0 // loop_footer_branch
    %15 = sbr.rel target = $region3
  $region8: #{a_call__.1} parent=0 // loop_exit
    _

</llo_original>
